<compile_context>
chip_gen: v7x
topology: tpu7x:2x2x1
jax: 0.10.0
libtpu: 0.0.40
codegen_flags: <defaults>
</compile_context>

<pallas_src>
import functools

import jax
import jax.numpy as jnp
from jax import lax
from jax.experimental import pallas as pl
from jax.experimental.pallas import tpu as pltpu

IMG_HEIGHT = 32
IMG_WIDTH = 32
BN_EPS = 1e-5
CPAD = 128  # lane-dense channel / feature padding

BLOCK_CONFIGS = [
    {"k": 7, "s": 2, "p": 3, "pool_k": 3, "pool_s": 2, "pool_p": 1},
    {"k": 5, "s": 1, "p": 2, "pool_k": 3, "pool_s": 2, "pool_p": 1},
    {"k": 3, "s": 1, "p": 1, "pool_k": 3, "pool_s": 2, "pool_p": 1},
    {"k": 3, "s": 1, "p": 1, "pool_k": 3, "pool_s": 2, "pool_p": 1},
]


def _round_up(x, m):
    return (x + m - 1) // m * m


# ---------------------------------------------------------------------------
# Wrapper-side im2col with parity-ordered rows (makes the in-kernel stride-2
# pool a max over statically shifted contiguous planes).
# ---------------------------------------------------------------------------
def _im2col_parity(x, k, s, p, k_pad, parity_major=False):
    """Zero-pad + im2col with rows ordered so every conv-output parity plane
    is a contiguous row block.

    Row order is (n, a, b, ph, pw) by default (a/b = output row/col parity),
    or (a, b, n, ph, pw) when parity_major=True.  Feature order is
    (ki*k + kj)*C + c, matching w.reshape(k*k*C, cout).  Returns bf16.
    """
    N, H, W, C = x.shape
    Ho = (H + 2 * p - k) // s + 1
    Wo = (W + 2 * p - k) // s + 1
    assert Ho % 2 == 0 and Wo % 2 == 0, "fused pool assumes even conv output"
    Ph, Pw = Ho // 2, Wo // 2
    xp = jnp.pad(x, ((0, 0), (p, p), (p, p), (0, 0)))
    taps = []
    for ki in range(k):
        for kj in range(k):
            taps.append(xp[:, ki:ki + s * (Ho - 1) + 1:s,
                           kj:kj + s * (Wo - 1) + 1:s, :])
    patches = jnp.concatenate(taps, axis=-1)            # (N, Ho, Wo, k*k*C)
    K = k * k * C
    patches = patches.reshape(N, Ph, 2, Pw, 2, K)       # (n, ph, a, pw, b, K)
    perm = (2, 4, 0, 1, 3, 5) if parity_major else (0, 2, 4, 1, 3, 5)
    patches = patches.transpose(perm).reshape(N * 4 * Ph * Pw, K)
    if k_pad > K:
        patches = jnp.pad(patches, ((0, 0), (0, k_pad - K)))
    return patches.astype(jnp.bfloat16), Ph, Pw


# ---------------------------------------------------------------------------
# Fused conv block kernel: ONE bf16 MXU matmul (BN scale pre-folded into W)
# + shift + ReLU + separable 3x3/stride-2 maxpool.  Epilogue in f32.
# ---------------------------------------------------------------------------
def _conv_pool_kernel(lhs_ref, w_ref, shift_ref, o_ref, *, nb, ph, pw):
    """lhs_ref: (nb*4*ph*pw, Kp) bf16 parity-ordered im2col rows.
    w_ref: (Kp, 128) bf16 (BN scale folded).  shift_ref: (1, 128) f32.
    o_ref: (nb, ph, pw, 128) bf16 pooled output."""
    y = jnp.dot(lhs_ref[...], w_ref[...], preferred_element_type=jnp.float32)
    y = jnp.maximum(y + shift_ref[...], 0.0)            # folded-BN shift + ReLU
    m = ph * pw
    for n in range(nb):
        base = n * 4 * m
        p00 = y[base + 0 * m: base + 1 * m].reshape(ph, pw, 128)
        p01 = y[base + 1 * m: base + 2 * m].reshape(ph, pw, 128)
        p10 = y[base + 2 * m: base + 3 * m].reshape(ph, pw, 128)
        p11 = y[base + 3 * m: base + 4 * m].reshape(ph, pw, 128)
        # Separable 3x3/s2/p1 maxpool: rows {2po-1, 2po, 2po+1} map to parity
        # planes (a=1 shifted down, a=0, a=1); same for columns.  Zero fill is
        # valid because everything is post-ReLU (>= 0).
        zr = jnp.zeros((1, pw, 128), jnp.float32)
        p10s = jnp.concatenate([zr, p10[:ph - 1]], axis=0) if ph > 1 else zr
        p11s = jnp.concatenate([zr, p11[:ph - 1]], axis=0) if ph > 1 else zr
        rb0 = jnp.maximum(jnp.maximum(p10s, p00), p10)   # column parity b = 0
        rb1 = jnp.maximum(jnp.maximum(p11s, p01), p11)   # column parity b = 1
        zc = jnp.zeros((ph, 1, 128), jnp.float32)
        rb1s = jnp.concatenate([zc, rb1[:, :pw - 1]], axis=1) if pw > 1 else zc
        o_ref[n] = jnp.maximum(jnp.maximum(rb1s, rb0), rb1).astype(o_ref.dtype)


def conv_block(x, blk):
    """x: (N, H, W, C) -> (N, Ph, Pw, 128) bf16 (conv + BN + ReLU + maxpool)."""
    cfg = blk["cfg"]
    k, s, p = cfg["k"], cfg["s"], cfg["p"]
    assert (cfg["pool_k"], cfg["pool_s"], cfg["pool_p"]) == (3, 2, 1)
    N = x.shape[0]
    kpad = blk["Kp"]
    lhs, Ph, Pw = _im2col_parity(x, k, s, p, kpad)
    # Batch-tiled "parallel" grid (keeps both v7x TensorCores busy); fall back
    # to a single step when the tile would break (8, 128) block alignment.
    G = 2 if (N % 2 == 0 and N >= 2 and ((N // 2) * 4 * Ph * Pw) % 8 == 0) else 1
    NB = N // G
    Mt = NB * 4 * Ph * Pw
    kern = functools.partial(_conv_pool_kernel, nb=NB, ph=Ph, pw=Pw)
    return pl.pallas_call(
        kern,
        grid=(G,),
        in_specs=[
            pl.BlockSpec((Mt, kpad), lambda g: (g, 0)),
            pl.BlockSpec(blk["w"].shape, lambda g: (0, 0)),
            pl.BlockSpec(blk["shift"].shape, lambda g: (0, 0)),
        ],
        out_specs=pl.BlockSpec((NB, Ph, Pw, CPAD), lambda g: (g, 0, 0, 0)),
        out_shape=jax.ShapeDtypeStruct((N, Ph, Pw, CPAD), jnp.bfloat16),
        compiler_params=pltpu.CompilerParams(dimension_semantics=("parallel",)),
    )(lhs, blk["w"], blk["shift"])


# ---------------------------------------------------------------------------
# FC stack helpers + last-conv-block-fused-with-FC kernel.
# ---------------------------------------------------------------------------
def _fc_stack(h, fc_refs, n_fc):
    """(Linear -> ReLU)*(n-1) -> Linear -> Sigmoid, bf16 MXU / f32 epilogue."""
    for li in range(n_fc):
        w = fc_refs[2 * li][...]
        b = fc_refs[2 * li + 1][...]
        h = jnp.dot(h.astype(jnp.bfloat16), w,
                    preferred_element_type=jnp.float32) + b
        if li < n_fc - 1:
            h = jnp.maximum(h, 0.0)
            # TODO(synk): Dropout is identity at inference; training-mode
            # dropout is not implemented.
        else:
            h = jax.nn.sigmoid(h)
    return h


def _conv_fc_kernel(*refs, n, n_fc):
    """Last conv block (1x1 pooled output) fused with the whole FC stack."""
    lhs_ref, w_ref, shift_ref = refs[0], refs[1], refs[2]
    fc_refs = refs[3:3 + 2 * n_fc]
    o_ref = refs[3 + 2 * n_fc]
    y = jnp.dot(lhs_ref[...], w_ref[...], preferred_element_type=jnp.float32)
    y = jnp.maximum(y + shift_ref[...], 0.0)             # (4*n, 128)
    # Rows are ordered (parity, image); the 3x3/s2/p1 pool of a 2x2 conv
    # output is the max of its 4 pixels, so the pooled 128-lane row is
    # exactly the (zero-padded) flattened FC input vector.
    pooled = jnp.maximum(jnp.maximum(y[0:n], y[n:2 * n]),
                         jnp.maximum(y[2 * n:3 * n], y[3 * n:4 * n]))
    o_ref[...] = _fc_stack(pooled, fc_refs, n_fc)


def _fc_kernel(*refs, n_fc):
    x_ref = refs[0]
    fc_refs = refs[1:1 + 2 * n_fc]
    o_ref = refs[1 + 2 * n_fc]
    o_ref[...] = _fc_stack(x_ref[...], fc_refs, n_fc)


def conv_block_fc(x, blk, fc_layers):
    """Last conv block + FC stack in ONE pallas_call (needs 1x1 pooled map)."""
    cfg = blk["cfg"]
    k, s, p = cfg["k"], cfg["s"], cfg["p"]
    N = x.shape[0]
    kpad = blk["Kp"]
    lhs, Ph, Pw = _im2col_parity(x, k, s, p, kpad, parity_major=True)
    assert Ph == 1 and Pw == 1
    n_fc = len(fc_layers)
    args = [lhs, blk["w"], blk["shift"]]
    in_specs = [pl.BlockSpec(lhs.shape, lambda i: (0, 0)),
                pl.BlockSpec(blk["w"].shape, lambda i: (0, 0)),
                pl.BlockSpec(blk["shift"].shape, lambda i: (0, 0))]
    for l in fc_layers:
        args += [l["w"], l["b"]]
        in_specs += [pl.BlockSpec(l["w"].shape, lambda i: (0, 0)),
                     pl.BlockSpec(l["b"].shape, lambda i: (0, 0))]
    out_pad = fc_layers[-1]["w"].shape[1]
    return pl.pallas_call(
        functools.partial(_conv_fc_kernel, n=N, n_fc=n_fc),
        grid=(1,),
        in_specs=in_specs,
        out_specs=pl.BlockSpec((N, out_pad), lambda i: (0, 0)),
        out_shape=jax.ShapeDtypeStruct((N, out_pad), jnp.float32),
    )(*args)


def fc_chain(x_flat, fc_layers):
    """Standalone fused FC stack (fallback when the last pooled map isn't 1x1)."""
    N = x_flat.shape[0]
    n_fc = len(fc_layers)
    args = [x_flat]
    in_specs = [pl.BlockSpec(x_flat.shape, lambda i: (0, 0))]
    for l in fc_layers:
        args += [l["w"], l["b"]]
        in_specs += [pl.BlockSpec(l["w"].shape, lambda i: (0, 0)),
                     pl.BlockSpec(l["b"].shape, lambda i: (0, 0))]
    out_pad = fc_layers[-1]["w"].shape[1]
    return pl.pallas_call(
        functools.partial(_fc_kernel, n_fc=n_fc),
        grid=(1,),
        in_specs=in_specs,
        out_specs=pl.BlockSpec((N, out_pad), lambda i: (0, 0)),
        out_shape=jax.ShapeDtypeStruct((N, out_pad), jnp.float32),
    )(*args)


# ---------------------------------------------------------------------------
# Parameters (BN folded, channel-padded, bf16 weights) and forward pass.
# ---------------------------------------------------------------------------
def init_params(key, input_channels, output_dim, img_h, img_w,
                conv_filters, fc_sizes):
    params = {"conv": [], "fc": []}
    cur_c, cur_h, cur_w = input_channels, img_h, img_w
    for i, out_c in enumerate(conv_filters):
        assert out_c <= CPAD
        cfg = BLOCK_CONFIGS[min(i, len(BLOCK_CONFIGS) - 1)]
        k, s, p = cfg["k"], cfg["s"], cfg["p"]
        key, k1, k2, k3, k4, k5 = jax.random.split(key, 6)
        wc = 0.1 * jax.random.normal(k1, (k, k, cur_c, out_c), jnp.float32)  # HWIO
        gamma = 1.0 + 0.1 * jax.random.normal(k2, (out_c,), jnp.float32)
        beta = 0.05 * jax.random.normal(k3, (out_c,), jnp.float32)
        rmean = 0.05 * jax.random.normal(k4, (out_c,), jnp.float32)
        rvar = 1.0 + 0.1 * jax.random.uniform(k5, (out_c,), jnp.float32)
        # fold BatchNorm (inference, running stats): scale -> W, keep shift
        scale = gamma / jnp.sqrt(rvar + BN_EPS)
        shift = beta - rmean * scale
        cin_k = cur_c if i == 0 else CPAD    # kernel-side (padded) input channels
        K = k * k * cin_k
        Kp = _round_up(K, 128)
        w_full = jnp.zeros((k, k, cin_k, CPAD), jnp.float32)
        w_full = w_full.at[:, :, :cur_c, :out_c].set(wc * scale[None, None, None, :])
        w_pad = jnp.zeros((Kp, CPAD), jnp.float32).at[:K, :].set(
            w_full.reshape(K, CPAD)).astype(jnp.bfloat16)
        shift_pad = jnp.zeros((1, CPAD), jnp.float32).at[0, :out_c].set(shift)
        Ho = (cur_h + 2 * p - k) // s + 1
        Wo = (cur_w + 2 * p - k) // s + 1
        assert Ho % 2 == 0 and Wo % 2 == 0, "fused pool assumes even conv output"
        Ph = (Ho + 2 * cfg["pool_p"] - cfg["pool_k"]) // cfg["pool_s"] + 1
        Pw = (Wo + 2 * cfg["pool_p"] - cfg["pool_k"]) // cfg["pool_s"] + 1
        assert Ph == Ho // 2 and Pw == Wo // 2
        params["conv"].append(dict(w=w_pad, shift=shift_pad, cfg=cfg, cin=cur_c,
                                   cin_k=cin_k, cout=out_c, Kp=Kp, Ph=Ph, Pw=Pw))
        cur_c, cur_h, cur_w = out_c, Ph, Pw
    flattened = cur_c * cur_h * cur_w
    params["flattened"] = flattened
    params["final_c"] = cur_c
    params["output_dim"] = output_dim
    last_real = flattened
    last_pad = _round_up(flattened, CPAD)
    params["flat_pad"] = last_pad
    for size in list(fc_sizes) + [output_dim]:
        key, k1, k2 = jax.random.split(key, 3)
        wf = 0.1 * jax.random.normal(k1, (last_real, size), jnp.float32)
        bf = 0.05 * jax.random.normal(k2, (size,), jnp.float32)
        size_pad = _round_up(size, CPAD)
        w_pad = jnp.zeros((last_pad, size_pad), jnp.float32)
        w_pad = w_pad.at[:last_real, :size].set(wf).astype(jnp.bfloat16)
        b_pad = jnp.zeros((1, size_pad), jnp.float32).at[0, :size].set(bf)
        params["fc"].append(dict(w=w_pad, b=b_pad, in_real=last_real, out_real=size))
        last_real, last_pad = size, size_pad
    return params


def forward(params, x_nchw):
    """Matches LandingPointCNNParam.forward (inference mode)."""
    x = jnp.transpose(x_nchw, (0, 2, 3, 1)).astype(jnp.float32)  # NCHW -> NHWC
    blocks = params["conv"]
    last = blocks[-1]
    fuse_last = (last["Ph"] == 1 and last["Pw"] == 1)
    plain = blocks[:-1] if fuse_last else blocks
    for blk in plain:
        x = conv_block(x, blk)
    if fuse_last:
        out = conv_block_fc(x, last, params["fc"])
    else:
        c = last["cout"]
        x = conv_block(x, last)
        xf = jnp.transpose(x[..., :c].astype(jnp.float32), (0, 3, 1, 2))
        xf = xf.reshape(xf.shape[0], -1)                      # PyTorch (C,H,W) order
        xf = jnp.pad(xf, ((0, 0), (0, params["flat_pad"] - xf.shape[1])))
        out = fc_chain(xf.astype(jnp.bfloat16), params["fc"])
    return out[:, :params["output_dim"]]


def reference_forward(params, x_nchw):
    """Pure-XLA reference (same folded / padded / bf16 weights & activation
    rounding) used to validate the Pallas kernels."""
    x = jnp.transpose(x_nchw, (0, 2, 3, 1)).astype(jnp.float32)
    for blk in params["conv"]:
        cfg = blk["cfg"]
        k, s, p = cfg["k"], cfg["s"], cfg["p"]
        cin, cout, cin_k = blk["cin"], blk["cout"], blk["cin_k"]
        w = blk["w"][:k * k * cin_k].reshape(k, k, cin_k, CPAD)[:, :, :cin, :cout]
        shift = blk["shift"][0, :cout]
        y = lax.conv_general_dilated(
            x.astype(jnp.bfloat16), w,
            window_strides=(s, s), padding=[(p, p), (p, p)],
            dimension_numbers=("NHWC", "HWIO", "NHWC"),
            preferred_element_type=jnp.float32)
        y = jnp.maximum(y + shift.reshape(1, 1, 1, cout), 0.0)
        y = lax.reduce_window(y, -jnp.inf, lax.max,
                              (1, 3, 3, 1), (1, 2, 2, 1),
                              [(0, 0), (1, 1), (1, 1), (0, 0)])
        x = y.astype(jnp.bfloat16).astype(jnp.float32)   # match inter-block bf16
    x = jnp.transpose(x, (0, 3, 1, 2)).reshape(x.shape[0], -1)
    n_fc = len(params["fc"])
    for li, l in enumerate(params["fc"]):
        w = l["w"][:l["in_real"], :l["out_real"]]
        b = l["b"][0, :l["out_real"]]
        x = jnp.dot(x.astype(jnp.bfloat16), w,
                    preferred_element_type=jnp.float32) + b
        x = jnp.maximum(x, 0.0) if li < n_fc - 1 else jax.nn.sigmoid(x)
    return x


if __name__ == "__main__":
    key = jax.random.PRNGKey(0)
    batch, in_ch = 2, 4
    conv_filters = (8, 16, 32, 32)
    fc_sizes = (64, 32)
    output_dim = 2

    kparam, kx = jax.random.split(key)
    params = init_params(kparam, in_ch, output_dim, IMG_HEIGHT, IMG_WIDTH,
                         conv_filters, fc_sizes)
    x = jax.random.normal(kx, (batch, in_ch, IMG_HEIGHT, IMG_WIDTH), jnp.float32)

    fwd = jax.jit(lambda v: forward(params, v))
    ref_fwd = jax.jit(lambda v: reference_forward(params, v))

    out = jax.block_until_ready(fwd(x))
    ref = jax.block_until_ready(ref_fwd(x))

    assert out.shape == (batch, output_dim), out.shape
    assert bool(jnp.all(jnp.isfinite(out)))
    assert bool(jnp.all((out >= 0.0) & (out <= 1.0)))   # sigmoid range
    err = float(jnp.max(jnp.abs(out - ref)))
    assert err < 1e-2, f"mismatch vs XLA reference: {err}"
    print("KERNEL_OK")
</pallas_src>

<mosaic_0001>
module attributes {stable_mosaic.version = 11 : i64} {
  func.func @_conv_pool_kernel(%arg0: i32, %arg1: memref<256x256xbf16, #tpu.memory_space<vmem>>, %arg2: memref<256x128xbf16, #tpu.memory_space<vmem>>, %arg3: memref<1x128xf32, #tpu.memory_space<vmem>>, %arg4: memref<1x8x8x128xbf16, #tpu.memory_space<vmem>>) attributes {dimension_semantics = [#tpu.dimension_semantics<parallel>], iteration_bounds = array<i64: 2>, scalar_prefetch = 0 : i64, scratch_operands = 0 : i64, tpu.core_type = #tpu.core_type<tc>, window_params = [{transform_indices = @transform_0, window_bounds = array<i64: 256, 256>}, {pipeline_mode = #tpu.pipeline_mode<synchronous>, transform_indices = @transform_1, window_bounds = array<i64: 256, 128>}, {pipeline_mode = #tpu.pipeline_mode<synchronous>, transform_indices = @transform_2, window_bounds = array<i64: 1, 128>}, {transform_indices = @transform_3, window_bounds = array<i64: 1, 8, 8, 128>}]} {
    %c0 = arith.constant 0 : index
    %c0_0 = arith.constant 0 : index
    %0 = vector.load %arg1[%c0, %c0_0] : memref<256x256xbf16, #tpu.memory_space<vmem>>, vector<256x256xbf16>
    %c0_1 = arith.constant 0 : index
    %c0_2 = arith.constant 0 : index
    %1 = vector.load %arg2[%c0_1, %c0_2] : memref<256x128xbf16, #tpu.memory_space<vmem>>, vector<256x128xbf16>
    %cst = arith.constant dense<0.000000e+00> : vector<256x128xf32>
    %2 = tpu.matmul %0, %1, %cst {dimension_numbers = #tpu.dot_dimension_numbers<[1], [0], [0], [1], [0, 0, 1, 1], [], []>} : vector<256x256xbf16>, vector<256x128xbf16>, vector<256x128xf32> -> vector<256x128xf32>
    %c0_3 = arith.constant 0 : index
    %c0_4 = arith.constant 0 : index
    %3 = vector.load %arg3[%c0_3, %c0_4] : memref<1x128xf32, #tpu.memory_space<vmem>>, vector<1x128xf32>
    %4 = vector.broadcast %3 : vector<1x128xf32> to vector<256x128xf32>
    %5 = arith.addf %2, %4 : vector<256x128xf32>
    %cst_5 = arith.constant 0.000000e+00 : f32
    %6 = vector.broadcast %cst_5 : f32 to vector<256x128xf32>
    %7 = arith.maximumf %5, %6 : vector<256x128xf32>
    %8 = vector.extract_strided_slice %7 {offsets = [0, 0], sizes = [64, 128], strides = [1, 1]} : vector<256x128xf32> to vector<64x128xf32>
    %9 = vector.shape_cast %8 : vector<64x128xf32> to vector<8x8x128xf32>
    %10 = vector.extract_strided_slice %7 {offsets = [64, 0], sizes = [64, 128], strides = [1, 1]} : vector<256x128xf32> to vector<64x128xf32>
    %11 = vector.shape_cast %10 : vector<64x128xf32> to vector<8x8x128xf32>
    %12 = vector.extract_strided_slice %7 {offsets = [128, 0], sizes = [64, 128], strides = [1, 1]} : vector<256x128xf32> to vector<64x128xf32>
    %13 = vector.shape_cast %12 : vector<64x128xf32> to vector<8x8x128xf32>
    %14 = vector.extract_strided_slice %7 {offsets = [192, 0], sizes = [64, 128], strides = [1, 1]} : vector<256x128xf32> to vector<64x128xf32>
    %15 = vector.shape_cast %14 : vector<64x128xf32> to vector<8x8x128xf32>
    %cst_6 = arith.constant 0.000000e+00 : f32
    %16 = vector.broadcast %cst_6 : f32 to vector<1x8x128xf32>
    %17 = vector.extract_strided_slice %13 {offsets = [0, 0, 0], sizes = [7, 8, 128], strides = [1, 1, 1]} : vector<8x8x128xf32> to vector<7x8x128xf32>
    %18 = tpu.concatenate %16, %17 in 0 : vector<1x8x128xf32>, vector<7x8x128xf32> -> vector<8x8x128xf32>
    %19 = vector.extract_strided_slice %15 {offsets = [0, 0, 0], sizes = [7, 8, 128], strides = [1, 1, 1]} : vector<8x8x128xf32> to vector<7x8x128xf32>
    %20 = tpu.concatenate %16, %19 in 0 : vector<1x8x128xf32>, vector<7x8x128xf32> -> vector<8x8x128xf32>
    %21 = arith.maximumf %18, %9 : vector<8x8x128xf32>
    %22 = arith.maximumf %21, %13 : vector<8x8x128xf32>
    %23 = arith.maximumf %20, %11 : vector<8x8x128xf32>
    %24 = arith.maximumf %23, %15 : vector<8x8x128xf32>
    %cst_7 = arith.constant 0.000000e+00 : f32
    %25 = vector.broadcast %cst_7 : f32 to vector<8x1x128xf32>
    %26 = vector.extract_strided_slice %24 {offsets = [0, 0, 0], sizes = [8, 7, 128], strides = [1, 1, 1]} : vector<8x8x128xf32> to vector<8x7x128xf32>
    %27 = tpu.concatenate %25, %26 in 1 : vector<8x1x128xf32>, vector<8x7x128xf32> -> vector<8x8x128xf32>
    %28 = arith.maximumf %27, %22 : vector<8x8x128xf32>
    %29 = arith.maximumf %28, %24 : vector<8x8x128xf32>
    %30 = arith.truncf %29 : vector<8x8x128xf32> to vector<8x8x128xbf16>
    %c0_8 = arith.constant 0 : index
    %c0_9 = arith.constant 0 : index
    %c0_10 = arith.constant 0 : index
    %c0_11 = arith.constant 0 : index
    %31 = vector.load %arg4[%c0_8, %c0_9, %c0_10, %c0_11] : memref<1x8x8x128xbf16, #tpu.memory_space<vmem>>, vector<1x8x8x128xbf16>
    %32 = vector.shape_cast %31 : vector<1x8x8x128xbf16> to vector<8x8x128xbf16>
    %33 = vector.shape_cast %30 : vector<8x8x128xbf16> to vector<1x8x8x128xbf16>
    tpu.vector_store %arg4[%c0_8, %c0_9, %c0_10, %c0_11], %33 {strides = array<i32>} : memref<1x8x8x128xbf16, #tpu.memory_space<vmem>>, vector<1x8x8x128xbf16>,
    return
  }
  func.func @transform_0(%arg0: i32) -> (i32, i32) {
    %c0_i32 = arith.constant 0 : i32
    %c0_i32_0 = arith.constant 0 : i32
    return %arg0, %c0_i32 : i32, i32
  }
  func.func @transform_1(%arg0: i32) -> (i32, i32) {
    %c0_i32 = arith.constant 0 : i32
    %c0_i32_0 = arith.constant 0 : i32
    %c0_i32_1 = arith.constant 0 : i32
    return %c0_i32, %c0_i32_0 : i32, i32
  }
  func.func @transform_2(%arg0: i32) -> (i32, i32) {
    %c0_i32 = arith.constant 0 : i32
    %c0_i32_0 = arith.constant 0 : i32
    %c0_i32_1 = arith.constant 0 : i32
    return %c0_i32, %c0_i32_0 : i32, i32
  }
  func.func @transform_3(%arg0: i32) -> (i32, i32, i32, i32) {
    %c0_i32 = arith.constant 0 : i32
    %c0_i32_0 = arith.constant 0 : i32
    %c0_i32_1 = arith.constant 0 : i32
    %c0_i32_2 = arith.constant 0 : i32
    return %arg0, %c0_i32, %c0_i32_0, %c0_i32_1 : i32, i32, i32, i32
  }
}

module attributes {stable_mosaic.version = 11 : i64} {
  func.func @_conv_pool_kernel(%arg0: i32, %arg1: memref<64x3200xbf16, #tpu.memory_space<vmem>>, %arg2: memref<3200x128xbf16, #tpu.memory_space<vmem>>, %arg3: memref<1x128xf32, #tpu.memory_space<vmem>>, %arg4: memref<1x4x4x128xbf16, #tpu.memory_space<vmem>>) attributes {dimension_semantics = [#tpu.dimension_semantics<parallel>], iteration_bounds = array<i64: 2>, scalar_prefetch = 0 : i64, scratch_operands = 0 : i64, tpu.core_type = #tpu.core_type<tc>, window_params = [{transform_indices = @transform_0, window_bounds = array<i64: 64, 3200>}, {pipeline_mode = #tpu.pipeline_mode<synchronous>, transform_indices = @transform_1, window_bounds = array<i64: 3200, 128>}, {pipeline_mode = #tpu.pipeline_mode<synchronous>, transform_indices = @transform_2, window_bounds = array<i64: 1, 128>}, {transform_indices = @transform_3, window_bounds = array<i64: 1, 4, 4, 128>}]} {
    %c0 = arith.constant 0 : index
    %c0_0 = arith.constant 0 : index
    %0 = vector.load %arg1[%c0, %c0_0] : memref<64x3200xbf16, #tpu.memory_space<vmem>>, vector<64x3200xbf16>
    %c0_1 = arith.constant 0 : index
    %c0_2 = arith.constant 0 : index
    %1 = vector.load %arg2[%c0_1, %c0_2] : memref<3200x128xbf16, #tpu.memory_space<vmem>>, vector<3200x128xbf16>
    %cst = arith.constant dense<0.000000e+00> : vector<64x128xf32>
    %2 = tpu.matmul %0, %1, %cst {dimension_numbers = #tpu.dot_dimension_numbers<[1], [0], [0], [1], [0, 0, 1, 1], [], []>} : vector<64x3200xbf16>, vector<3200x128xbf16>, vector<64x128xf32> -> vector<64x128xf32>
    %c0_3 = arith.constant 0 : index
    %c0_4 = arith.constant 0 : index
    %3 = vector.load %arg3[%c0_3, %c0_4] : memref<1x128xf32, #tpu.memory_space<vmem>>, vector<1x128xf32>
    %4 = vector.broadcast %3 : vector<1x128xf32> to vector<64x128xf32>
    %5 = arith.addf %2, %4 : vector<64x128xf32>
    %cst_5 = arith.constant 0.000000e+00 : f32
    %6 = vector.broadcast %cst_5 : f32 to vector<64x128xf32>
    %7 = arith.maximumf %5, %6 : vector<64x128xf32>
    %8 = vector.extract_strided_slice %7 {offsets = [0, 0], sizes = [16, 128], strides = [1, 1]} : vector<64x128xf32> to vector<16x128xf32>
    %9 = vector.shape_cast %8 : vector<16x128xf32> to vector<4x4x128xf32>
    %10 = vector.extract_strided_slice %7 {offsets = [16, 0], sizes = [16, 128], strides = [1, 1]} : vector<64x128xf32> to vector<16x128xf32>
    %11 = vector.shape_cast %10 : vector<16x128xf32> to vector<4x4x128xf32>
    %12 = vector.extract_strided_slice %7 {offsets = [32, 0], sizes = [16, 128], strides = [1, 1]} : vector<64x128xf32> to vector<16x128xf32>
    %13 = vector.shape_cast %12 : vector<16x128xf32> to vector<4x4x128xf32>
    %14 = vector.extract_strided_slice %7 {offsets = [48, 0], sizes = [16, 128], strides = [1, 1]} : vector<64x128xf32> to vector<16x128xf32>
    %15 = vector.shape_cast %14 : vector<16x128xf32> to vector<4x4x128xf32>
    %cst_6 = arith.constant 0.000000e+00 : f32
    %16 = vector.broadcast %cst_6 : f32 to vector<1x4x128xf32>
    %17 = vector.extract_strided_slice %13 {offsets = [0, 0, 0], sizes = [3, 4, 128], strides = [1, 1, 1]} : vector<4x4x128xf32> to vector<3x4x128xf32>
    %18 = tpu.concatenate %16, %17 in 0 : vector<1x4x128xf32>, vector<3x4x128xf32> -> vector<4x4x128xf32>
    %19 = vector.extract_strided_slice %15 {offsets = [0, 0, 0], sizes = [3, 4, 128], strides = [1, 1, 1]} : vector<4x4x128xf32> to vector<3x4x128xf32>
    %20 = tpu.concatenate %16, %19 in 0 : vector<1x4x128xf32>, vector<3x4x128xf32> -> vector<4x4x128xf32>
    %21 = arith.maximumf %18, %9 : vector<4x4x128xf32>
    %22 = arith.maximumf %21, %13 : vector<4x4x128xf32>
    %23 = arith.maximumf %20, %11 : vector<4x4x128xf32>
    %24 = arith.maximumf %23, %15 : vector<4x4x128xf32>
    %cst_7 = arith.constant 0.000000e+00 : f32
    %25 = vector.broadcast %cst_7 : f32 to vector<4x1x128xf32>
    %26 = vector.extract_strided_slice %24 {offsets = [0, 0, 0], sizes = [4, 3, 128], strides = [1, 1, 1]} : vector<4x4x128xf32> to vector<4x3x128xf32>
    %27 = tpu.concatenate %25, %26 in 1 : vector<4x1x128xf32>, vector<4x3x128xf32> -> vector<4x4x128xf32>
    %28 = arith.maximumf %27, %22 : vector<4x4x128xf32>
    %29 = arith.maximumf %28, %24 : vector<4x4x128xf32>
    %30 = arith.truncf %29 : vector<4x4x128xf32> to vector<4x4x128xbf16>
    %c0_8 = arith.constant 0 : index
    %c0_9 = arith.constant 0 : index
    %c0_10 = arith.constant 0 : index
    %c0_11 = arith.constant 0 : index
    %31 = vector.load %arg4[%c0_8, %c0_9, %c0_10, %c0_11] : memref<1x4x4x128xbf16, #tpu.memory_space<vmem>>, vector<1x4x4x128xbf16>
    %32 = vector.shape_cast %31 : vector<1x4x4x128xbf16> to vector<4x4x128xbf16>
    %33 = vector.shape_cast %30 : vector<4x4x128xbf16> to vector<1x4x4x128xbf16>
    tpu.vector_store %arg4[%c0_8, %c0_9, %c0_10, %c0_11], %33 {strides = array<i32>} : memref<1x4x4x128xbf16, #tpu.memory_space<vmem>>, vector<1x4x4x128xbf16>,
    return
  }
  func.func @transform_0(%arg0: i32) -> (i32, i32) {
    %c0_i32 = arith.constant 0 : i32
    %c0_i32_0 = arith.constant 0 : i32
    return %arg0, %c0_i32 : i32, i32
  }
  func.func @transform_1(%arg0: i32) -> (i32, i32) {
    %c0_i32 = arith.constant 0 : i32
    %c0_i32_0 = arith.constant 0 : i32
    %c0_i32_1 = arith.constant 0 : i32
    return %c0_i32, %c0_i32_0 : i32, i32
  }
  func.func @transform_2(%arg0: i32) -> (i32, i32) {
    %c0_i32 = arith.constant 0 : i32
    %c0_i32_0 = arith.constant 0 : i32
    %c0_i32_1 = arith.constant 0 : i32
    return %c0_i32, %c0_i32_0 : i32, i32
  }
  func.func @transform_3(%arg0: i32) -> (i32, i32, i32, i32) {
    %c0_i32 = arith.constant 0 : i32
    %c0_i32_0 = arith.constant 0 : i32
    %c0_i32_1 = arith.constant 0 : i32
    %c0_i32_2 = arith.constant 0 : i32
    return %arg0, %c0_i32, %c0_i32_0, %c0_i32_1 : i32, i32, i32, i32
  }
}

module attributes {stable_mosaic.version = 11 : i64} {
  func.func @_conv_pool_kernel(%arg0: i32, %arg1: memref<16x1152xbf16, #tpu.memory_space<vmem>>, %arg2: memref<1152x128xbf16, #tpu.memory_space<vmem>>, %arg3: memref<1x128xf32, #tpu.memory_space<vmem>>, %arg4: memref<1x2x2x128xbf16, #tpu.memory_space<vmem>>) attributes {dimension_semantics = [#tpu.dimension_semantics<parallel>], iteration_bounds = array<i64: 2>, scalar_prefetch = 0 : i64, scratch_operands = 0 : i64, tpu.core_type = #tpu.core_type<tc>, window_params = [{transform_indices = @transform_0, window_bounds = array<i64: 16, 1152>}, {pipeline_mode = #tpu.pipeline_mode<synchronous>, transform_indices = @transform_1, window_bounds = array<i64: 1152, 128>}, {pipeline_mode = #tpu.pipeline_mode<synchronous>, transform_indices = @transform_2, window_bounds = array<i64: 1, 128>}, {transform_indices = @transform_3, window_bounds = array<i64: 1, 2, 2, 128>}]} {
    %c0 = arith.constant 0 : index
    %c0_0 = arith.constant 0 : index
    %0 = vector.load %arg1[%c0, %c0_0] : memref<16x1152xbf16, #tpu.memory_space<vmem>>, vector<16x1152xbf16>
    %c0_1 = arith.constant 0 : index
    %c0_2 = arith.constant 0 : index
    %1 = vector.load %arg2[%c0_1, %c0_2] : memref<1152x128xbf16, #tpu.memory_space<vmem>>, vector<1152x128xbf16>
    %cst = arith.constant dense<0.000000e+00> : vector<16x128xf32>
    %2 = tpu.matmul %0, %1, %cst {dimension_numbers = #tpu.dot_dimension_numbers<[1], [0], [0], [1], [0, 0, 1, 1], [], []>} : vector<16x1152xbf16>, vector<1152x128xbf16>, vector<16x128xf32> -> vector<16x128xf32>
    %c0_3 = arith.constant 0 : index
    %c0_4 = arith.constant 0 : index
    %3 = vector.load %arg3[%c0_3, %c0_4] : memref<1x128xf32, #tpu.memory_space<vmem>>, vector<1x128xf32>
    %4 = vector.broadcast %3 : vector<1x128xf32> to vector<16x128xf32>
    %5 = arith.addf %2, %4 : vector<16x128xf32>
    %cst_5 = arith.constant 0.000000e+00 : f32
    %6 = vector.broadcast %cst_5 : f32 to vector<16x128xf32>
    %7 = arith.maximumf %5, %6 : vector<16x128xf32>
    %8 = vector.extract_strided_slice %7 {offsets = [0, 0], sizes = [4, 128], strides = [1, 1]} : vector<16x128xf32> to vector<4x128xf32>
    %9 = vector.shape_cast %8 : vector<4x128xf32> to vector<2x2x128xf32>
    %10 = vector.extract_strided_slice %7 {offsets = [4, 0], sizes = [4, 128], strides = [1, 1]} : vector<16x128xf32> to vector<4x128xf32>
    %11 = vector.shape_cast %10 : vector<4x128xf32> to vector<2x2x128xf32>
    %12 = vector.extract_strided_slice %7 {offsets = [8, 0], sizes = [4, 128], strides = [1, 1]} : vector<16x128xf32> to vector<4x128xf32>
    %13 = vector.shape_cast %12 : vector<4x128xf32> to vector<2x2x128xf32>
    %14 = vector.extract_strided_slice %7 {offsets = [12, 0], sizes = [4, 128], strides = [1, 1]} : vector<16x128xf32> to vector<4x128xf32>
    %15 = vector.shape_cast %14 : vector<4x128xf32> to vector<2x2x128xf32>
    %cst_6 = arith.constant 0.000000e+00 : f32
    %16 = vector.broadcast %cst_6 : f32 to vector<1x2x128xf32>
    %17 = vector.extract_strided_slice %13 {offsets = [0, 0, 0], sizes = [1, 2, 128], strides = [1, 1, 1]} : vector<2x2x128xf32> to vector<1x2x128xf32>
    %18 = tpu.concatenate %16, %17 in 0 : vector<1x2x128xf32>, vector<1x2x128xf32> -> vector<2x2x128xf32>
    %19 = vector.extract_strided_slice %15 {offsets = [0, 0, 0], sizes = [1, 2, 128], strides = [1, 1, 1]} : vector<2x2x128xf32> to vector<1x2x128xf32>
    %20 = tpu.concatenate %16, %19 in 0 : vector<1x2x128xf32>, vector<1x2x128xf32> -> vector<2x2x128xf32>
    %21 = arith.maximumf %18, %9 : vector<2x2x128xf32>
    %22 = arith.maximumf %21, %13 : vector<2x2x128xf32>
    %23 = arith.maximumf %20, %11 : vector<2x2x128xf32>
    %24 = arith.maximumf %23, %15 : vector<2x2x128xf32>
    %cst_7 = arith.constant 0.000000e+00 : f32
    %25 = vector.broadcast %cst_7 : f32 to vector<2x1x128xf32>
    %26 = vector.extract_strided_slice %24 {offsets = [0, 0, 0], sizes = [2, 1, 128], strides = [1, 1, 1]} : vector<2x2x128xf32> to vector<2x1x128xf32>
    %27 = tpu.concatenate %25, %26 in 1 : vector<2x1x128xf32>, vector<2x1x128xf32> -> vector<2x2x128xf32>
    %28 = arith.maximumf %27, %22 : vector<2x2x128xf32>
    %29 = arith.maximumf %28, %24 : vector<2x2x128xf32>
    %30 = arith.truncf %29 : vector<2x2x128xf32> to vector<2x2x128xbf16>
    %c0_8 = arith.constant 0 : index
    %c0_9 = arith.constant 0 : index
    %c0_10 = arith.constant 0 : index
    %c0_11 = arith.constant 0 : index
    %31 = vector.load %arg4[%c0_8, %c0_9, %c0_10, %c0_11] : memref<1x2x2x128xbf16, #tpu.memory_space<vmem>>, vector<1x2x2x128xbf16>
    %32 = vector.shape_cast %31 : vector<1x2x2x128xbf16> to vector<2x2x128xbf16>
    %33 = vector.shape_cast %30 : vector<2x2x128xbf16> to vector<1x2x2x128xbf16>
    tpu.vector_store %arg4[%c0_8, %c0_9, %c0_10, %c0_11], %33 {strides = array<i32>} : memref<1x2x2x128xbf16, #tpu.memory_space<vmem>>, vector<1x2x2x128xbf16>,
    return
  }
  func.func @transform_0(%arg0: i32) -> (i32, i32) {
    %c0_i32 = arith.constant 0 : i32
    %c0_i32_0 = arith.constant 0 : i32
    return %arg0, %c0_i32 : i32, i32
  }
  func.func @transform_1(%arg0: i32) -> (i32, i32) {
    %c0_i32 = arith.constant 0 : i32
    %c0_i32_0 = arith.constant 0 : i32
    %c0_i32_1 = arith.constant 0 : i32
    return %c0_i32, %c0_i32_0 : i32, i32
  }
  func.func @transform_2(%arg0: i32) -> (i32, i32) {
    %c0_i32 = arith.constant 0 : i32
    %c0_i32_0 = arith.constant 0 : i32
    %c0_i32_1 = arith.constant 0 : i32
    return %c0_i32, %c0_i32_0 : i32, i32
  }
  func.func @transform_3(%arg0: i32) -> (i32, i32, i32, i32) {
    %c0_i32 = arith.constant 0 : i32
    %c0_i32_0 = arith.constant 0 : i32
    %c0_i32_1 = arith.constant 0 : i32
    %c0_i32_2 = arith.constant 0 : i32
    return %arg0, %c0_i32, %c0_i32_0, %c0_i32_1 : i32, i32, i32, i32
  }
}

module attributes {stable_mosaic.version = 11 : i64} {
  func.func @_conv_fc_kernel(%arg0: i32, %arg1: memref<8x1152xbf16, #tpu.memory_space<vmem>>, %arg2: memref<1152x128xbf16, #tpu.memory_space<vmem>>, %arg3: memref<1x128xf32, #tpu.memory_space<vmem>>, %arg4: memref<128x128xbf16, #tpu.memory_space<vmem>>, %arg5: memref<1x128xf32, #tpu.memory_space<vmem>>, %arg6: memref<128x128xbf16, #tpu.memory_space<vmem>>, %arg7: memref<1x128xf32, #tpu.memory_space<vmem>>, %arg8: memref<128x128xbf16, #tpu.memory_space<vmem>>, %arg9: memref<1x128xf32, #tpu.memory_space<vmem>>, %arg10: memref<2x128xf32, #tpu.memory_space<vmem>>) attributes {dimension_semantics = [#tpu.dimension_semantics<arbitrary>], iteration_bounds = array<i64: 1>, scalar_prefetch = 0 : i64, scratch_operands = 0 : i64, tpu.core_type = #tpu.core_type<tc>, window_params = [{pipeline_mode = #tpu.pipeline_mode<synchronous>, transform_indices = @transform_0, window_bounds = array<i64: 8, 1152>}, {pipeline_mode = #tpu.pipeline_mode<synchronous>, transform_indices = @transform_1, window_bounds = array<i64: 1152, 128>}, {pipeline_mode = #tpu.pipeline_mode<synchronous>, transform_indices = @transform_2, window_bounds = array<i64: 1, 128>}, {pipeline_mode = #tpu.pipeline_mode<synchronous>, transform_indices = @transform_3, window_bounds = array<i64: 128, 128>}, {pipeline_mode = #tpu.pipeline_mode<synchronous>, transform_indices = @transform_4, window_bounds = array<i64: 1, 128>}, {pipeline_mode = #tpu.pipeline_mode<synchronous>, transform_indices = @transform_5, window_bounds = array<i64: 128, 128>}, {pipeline_mode = #tpu.pipeline_mode<synchronous>, transform_indices = @transform_6, window_bounds = array<i64: 1, 128>}, {pipeline_mode = #tpu.pipeline_mode<synchronous>, transform_indices = @transform_7, window_bounds = array<i64: 128, 128>}, {pipeline_mode = #tpu.pipeline_mode<synchronous>, transform_indices = @transform_8, window_bounds = array<i64: 1, 128>}, {pipeline_mode = #tpu.pipeline_mode<synchronous>, transform_indices = @transform_9, window_bounds = array<i64: 2, 128>}]} {
    %c0 = arith.constant 0 : index
    %c0_0 = arith.constant 0 : index
    %0 = vector.load %arg1[%c0, %c0_0] : memref<8x1152xbf16, #tpu.memory_space<vmem>>, vector<8x1152xbf16>
    %c0_1 = arith.constant 0 : index
    %c0_2 = arith.constant 0 : index
    %1 = vector.load %arg2[%c0_1, %c0_2] : memref<1152x128xbf16, #tpu.memory_space<vmem>>, vector<1152x128xbf16>
    %cst = arith.constant dense<0.000000e+00> : vector<8x128xf32>
    %2 = tpu.matmul %0, %1, %cst {dimension_numbers = #tpu.dot_dimension_numbers<[1], [0], [0], [1], [0, 0, 1, 1], [], []>} : vector<8x1152xbf16>, vector<1152x128xbf16>, vector<8x128xf32> -> vector<8x128xf32>
    %c0_3 = arith.constant 0 : index
    %c0_4 = arith.constant 0 : index
    %3 = vector.load %arg3[%c0_3, %c0_4] : memref<1x128xf32, #tpu.memory_space<vmem>>, vector<1x128xf32>
    %4 = vector.broadcast %3 : vector<1x128xf32> to vector<8x128xf32>
    %5 = arith.addf %2, %4 : vector<8x128xf32>
    %cst_5 = arith.constant 0.000000e+00 : f32
    %6 = vector.broadcast %cst_5 : f32 to vector<8x128xf32>
    %7 = arith.maximumf %5, %6 : vector<8x128xf32>
    %8 = vector.extract_strided_slice %7 {offsets = [0, 0], sizes = [2, 128], strides = [1, 1]} : vector<8x128xf32> to vector<2x128xf32>
    %9 = vector.extract_strided_slice %7 {offsets = [2, 0], sizes = [2, 128], strides = [1, 1]} : vector<8x128xf32> to vector<2x128xf32>
    %10 = arith.maximumf %8, %9 : vector<2x128xf32>
    %11 = vector.extract_strided_slice %7 {offsets = [4, 0], sizes = [2, 128], strides = [1, 1]} : vector<8x128xf32> to vector<2x128xf32>
    %12 = vector.extract_strided_slice %7 {offsets = [6, 0], sizes = [2, 128], strides = [1, 1]} : vector<8x128xf32> to vector<2x128xf32>
    %13 = arith.maximumf %11, %12 : vector<2x128xf32>
    %14 = arith.maximumf %10, %13 : vector<2x128xf32>
    %c0_6 = arith.constant 0 : index
    %c0_7 = arith.constant 0 : index
    %15 = vector.load %arg4[%c0_6, %c0_7] : memref<128x128xbf16, #tpu.memory_space<vmem>>, vector<128x128xbf16>
    %c0_8 = arith.constant 0 : index
    %c0_9 = arith.constant 0 : index
    %16 = vector.load %arg5[%c0_8, %c0_9] : memref<1x128xf32, #tpu.memory_space<vmem>>, vector<1x128xf32>
    %17 = arith.truncf %14 : vector<2x128xf32> to vector<2x128xbf16>
    %cst_10 = arith.constant dense<0.000000e+00> : vector<2x128xf32>
    %18 = tpu.matmul %17, %15, %cst_10 {dimension_numbers = #tpu.dot_dimension_numbers<[1], [0], [0], [1], [0, 0, 1, 1], [], []>} : vector<2x128xbf16>, vector<128x128xbf16>, vector<2x128xf32> -> vector<2x128xf32>
    %19 = vector.broadcast %16 : vector<1x128xf32> to vector<2x128xf32>
    %20 = arith.addf %18, %19 : vector<2x128xf32>
    %cst_11 = arith.constant 0.000000e+00 : f32
    %21 = vector.broadcast %cst_11 : f32 to vector<2x128xf32>
    %22 = arith.maximumf %20, %21 : vector<2x128xf32>
    %c0_12 = arith.constant 0 : index
    %c0_13 = arith.constant 0 : index
    %23 = vector.load %arg6[%c0_12, %c0_13] : memref<128x128xbf16, #tpu.memory_space<vmem>>, vector<128x128xbf16>
    %c0_14 = arith.constant 0 : index
    %c0_15 = arith.constant 0 : index
    %24 = vector.load %arg7[%c0_14, %c0_15] : memref<1x128xf32, #tpu.memory_space<vmem>>, vector<1x128xf32>
    %25 = arith.truncf %22 : vector<2x128xf32> to vector<2x128xbf16>
    %cst_16 = arith.constant dense<0.000000e+00> : vector<2x128xf32>
    %26 = tpu.matmul %25, %23, %cst_16 {dimension_numbers = #tpu.dot_dimension_numbers<[1], [0], [0], [1], [0, 0, 1, 1], [], []>} : vector<2x128xbf16>, vector<128x128xbf16>, vector<2x128xf32> -> vector<2x128xf32>
    %27 = vector.broadcast %24 : vector<1x128xf32> to vector<2x128xf32>
    %28 = arith.addf %26, %27 : vector<2x128xf32>
    %cst_17 = arith.constant 0.000000e+00 : f32
    %29 = vector.broadcast %cst_17 : f32 to vector<2x128xf32>
    %30 = arith.maximumf %28, %29 : vector<2x128xf32>
    %c0_18 = arith.constant 0 : index
    %c0_19 = arith.constant 0 : index
    %31 = vector.load %arg8[%c0_18, %c0_19] : memref<128x128xbf16, #tpu.memory_space<vmem>>, vector<128x128xbf16>
    %c0_20 = arith.constant 0 : index
    %c0_21 = arith.constant 0 : index
    %32 = vector.load %arg9[%c0_20, %c0_21] : memref<1x128xf32, #tpu.memory_space<vmem>>, vector<1x128xf32>
    %33 = arith.truncf %30 : vector<2x128xf32> to vector<2x128xbf16>
    %cst_22 = arith.constant dense<0.000000e+00> : vector<2x128xf32>
    %34 = tpu.matmul %33, %31, %cst_22 {dimension_numbers = #tpu.dot_dimension_numbers<[1], [0], [0], [1], [0, 0, 1, 1], [], []>} : vector<2x128xbf16>, vector<128x128xbf16>, vector<2x128xf32> -> vector<2x128xf32>
    %35 = vector.broadcast %32 : vector<1x128xf32> to vector<2x128xf32>
    %36 = arith.addf %34, %35 : vector<2x128xf32>
    %37 = arith.negf %36 : vector<2x128xf32>
    %38 = math.exp %37 : vector<2x128xf32>
    %cst_23 = arith.constant 1.000000e+00 : f32
    %39 = vector.broadcast %cst_23 : f32 to vector<2x128xf32>
    %40 = arith.addf %39, %38 : vector<2x128xf32>
    %41 = arith.divf %39, %40 : vector<2x128xf32>
    %c0_24 = arith.constant 0 : index
    %c0_25 = arith.constant 0 : index
    %42 = vector.load %arg10[%c0_24, %c0_25] : memref<2x128xf32, #tpu.memory_space<vmem>>, vector<2x128xf32>
    tpu.vector_store %arg10[%c0_24, %c0_25], %41 {strides = array<i32>} : memref<2x128xf32, #tpu.memory_space<vmem>>, vector<2x128xf32>,
    return
  }
  func.func @transform_0(%arg0: i32) -> (i32, i32) {
    %c0_i32 = arith.constant 0 : i32
    %c0_i32_0 = arith.constant 0 : i32
    %c0_i32_1 = arith.constant 0 : i32
    return %c0_i32, %c0_i32_0 : i32, i32
  }
  func.func @transform_1(%arg0: i32) -> (i32, i32) {
    %c0_i32 = arith.constant 0 : i32
    %c0_i32_0 = arith.constant 0 : i32
    %c0_i32_1 = arith.constant 0 : i32
    return %c0_i32, %c0_i32_0 : i32, i32
  }
  func.func @transform_2(%arg0: i32) -> (i32, i32) {
    %c0_i32 = arith.constant 0 : i32
    %c0_i32_0 = arith.constant 0 : i32
    %c0_i32_1 = arith.constant 0 : i32
    return %c0_i32, %c0_i32_0 : i32, i32
  }
  func.func @transform_3(%arg0: i32) -> (i32, i32) {
    %c0_i32 = arith.constant 0 : i32
    %c0_i32_0 = arith.constant 0 : i32
    %c0_i32_1 = arith.constant 0 : i32
    return %c0_i32, %c0_i32_0 : i32, i32
  }
  func.func @transform_4(%arg0: i32) -> (i32, i32) {
    %c0_i32 = arith.constant 0 : i32
    %c0_i32_0 = arith.constant 0 : i32
    %c0_i32_1 = arith.constant 0 : i32
    return %c0_i32, %c0_i32_0 : i32, i32
  }
  func.func @transform_5(%arg0: i32) -> (i32, i32) {
    %c0_i32 = arith.constant 0 : i32
    %c0_i32_0 = arith.constant 0 : i32
    %c0_i32_1 = arith.constant 0 : i32
    return %c0_i32, %c0_i32_0 : i32, i32
  }
  func.func @transform_6(%arg0: i32) -> (i32, i32) {
    %c0_i32 = arith.constant 0 : i32
    %c0_i32_0 = arith.constant 0 : i32
    %c0_i32_1 = arith.constant 0 : i32
    return %c0_i32, %c0_i32_0 : i32, i32
  }
  func.func @transform_7(%arg0: i32) -> (i32, i32) {
    %c0_i32 = arith.constant 0 : i32
    %c0_i32_0 = arith.constant 0 : i32
    %c0_i32_1 = arith.constant 0 : i32
    return %c0_i32, %c0_i32_0 : i32, i32
  }
  func.func @transform_8(%arg0: i32) -> (i32, i32) {
    %c0_i32 = arith.constant 0 : i32
    %c0_i32_0 = arith.constant 0 : i32
    %c0_i32_1 = arith.constant 0 : i32
    return %c0_i32, %c0_i32_0 : i32, i32
  }
  func.func @transform_9(%arg0: i32) -> (i32, i32) {
    %c0_i32 = arith.constant 0 : i32
    %c0_i32_0 = arith.constant 0 : i32
    %c0_i32_1 = arith.constant 0 : i32
    return %c0_i32, %c0_i32_0 : i32, i32
  }
}

</mosaic_0001>

<llo_original>
// kernel: _lambda_.4
$region0: #{_lambda_.4}
  #allocation0 [shape = 'u32[]', space=smem, size = 0x4, offset = 0x4, fixed_abs, tag = 'smem constant byte address 0x4 - core index']
  #allocation1 [shape = 'u32[144,128]{1,0:T(1,128)}', space=vmem, size = 0x12000, scoped, tag = 'internal scratch']
  %s0 = inlined_call_operand.vmem [shape: bf16[512,256], index: 0, kind: input, shape index: {}]
  %s1 = inlined_call_operand.vmem [shape: bf16[256,128], index: 1, kind: input, shape index: {}]
  %s2 = inlined_call_operand.vmem [shape: f32[1,128], index: 2, kind: input, shape index: {}]
  %s3 = inlined_call_operand.vmem [shape: bf16[2,8,8,128], index: 3, kind: output, shape index: {}]
  %s4 = sld [smem:[#allocation0]]
  $region45: #{_lambda_.4} parent=0
    _
  %s6 = ssub.s32 1, %s4
  %s7 = scalar_select 0, %s6, %s4
  loop: start=0, step=1, limit=4
  $region2: #{_lambda_.4} parent=0 // loop_pre_header
    _
  $region3: #{_lambda_.4} parent=0 // loop_header
    %s9 = sphi 0, %s13
    %p10 = scmp.ge.s32.totalorder %s9, 4
    %s19 = sphi 0, %s21
    %s22 = sphi 0, %s19
    %s23 = sphi 0, %s22
    %s39 = sphi 0, %s23
    %s43 = sphi 0, %s43
    %s45 = sphi 0, %s43
    %s46 = sphi 0, %s45
    %s60 = sphi 0, %s46
    %s64 = sphi 0, %s64
    %s66 = sphi 0, %s64
    %s67 = sphi 0, %s66
    %s81 = sphi 0, %s67
    %s87 = sphi 0, %s89
    %s90 = sphi 0, %s87
    %s91 = sphi 0, %s90
    %s107 = sphi 0, %s91
  $region4: #{_lambda_.4} parent=0 // loop_header_branch
    %12 = sbr.rel (%p10) target = $region8
  $region5: #{_lambda_.4} parent=0 // loop_body
    %s14 = ssub.s32 %s9, 1
    %s15 = ssub.s32 %s9, 2
    %s16 = sadd.s32 %s9, 1
    %s17 = ssub.s32 %s9, %s16
    %p18 = scmp.eq.s32.totalorder %s17, 0
    %s20 = sadd.s32 %s19, 1
    %s21 = scalar_select %p18, %s19, %s20
    %p24 = pneg %p18
    %p25 = scmp.eq.s32.totalorder %s9, 1
    %p26 = por %p24, %p25
    %p27 = scmp.ne.s32.totalorder %s19, %s22
    %p28 = scmp.eq.s32.totalorder %s9, 0
    %p29 = por %p27, %p28
    %p30 = scmp.ne.s32.totalorder %s19, %s22
    %p31 = scmp.eq.s32.totalorder %s14, 1
    %p32 = por %p30, %p31
    %p33 = scmp.ne.s32.totalorder %s22, %s23
    %p34 = scmp.eq.s32.totalorder %s14, 0
    %p35 = por %p33, %p34
    %p36 = scmp.ne.s32.totalorder %s22, %s23
    %p37 = scmp.eq.s32.totalorder %s15, 1
    %p38 = por %p36, %p37
    %p40 = scmp.ne.s32.totalorder %s23, %s39
    %p41 = scmp.eq.s32.totalorder %s15, 0
    %p42 = por %p40, %p41
    %s44 = sadd.s32 %s43, 1
    %p47 = scmp.eq.s32.totalorder %s9, 1
    %p48 = scmp.ne.s32.totalorder %s43, %s45
    %p49 = scmp.eq.s32.totalorder %s9, 0
    %p50 = por %p48, %p49
    %p51 = scmp.ne.s32.totalorder %s43, %s45
    %p52 = scmp.eq.s32.totalorder %s14, 1
    %p53 = por %p51, %p52
    %p54 = scmp.ne.s32.totalorder %s45, %s46
    %p55 = scmp.eq.s32.totalorder %s14, 0
    %p56 = por %p54, %p55
    %p57 = scmp.ne.s32.totalorder %s45, %s46
    %p58 = scmp.eq.s32.totalorder %s15, 1
    %p59 = por %p57, %p58
    %p61 = scmp.ne.s32.totalorder %s46, %s60
    %p62 = scmp.eq.s32.totalorder %s15, 0
    %p63 = por %p61, %p62
    %s65 = sadd.s32 %s64, 1
    %p68 = scmp.eq.s32.totalorder %s9, 1
    %p69 = scmp.ne.s32.totalorder %s64, %s66
    %p70 = scmp.eq.s32.totalorder %s9, 0
    %p71 = por %p69, %p70
    %p72 = scmp.ne.s32.totalorder %s64, %s66
    %p73 = scmp.eq.s32.totalorder %s14, 1
    %p74 = por %p72, %p73
    %p75 = scmp.ne.s32.totalorder %s66, %s67
    %p76 = scmp.eq.s32.totalorder %s14, 0
    %p77 = por %p75, %p76
    %p78 = scmp.ne.s32.totalorder %s66, %s67
    %p79 = scmp.eq.s32.totalorder %s15, 1
    %p80 = por %p78, %p79
    %p82 = scmp.ne.s32.totalorder %s67, %s81
    %p83 = scmp.eq.s32.totalorder %s15, 0
    %p84 = por %p82, %p83
    %s85 = ssub.s32 %s9, %s16
    %p86 = scmp.eq.s32.totalorder %s85, 0
    %s88 = sadd.s32 %s87, 1
    %s89 = scalar_select %p86, %s87, %s88
    %p92 = pneg %p86
    %p93 = scmp.eq.s32.totalorder %s9, 1
    %p94 = por %p92, %p93
    %p95 = scmp.ne.s32.totalorder %s87, %s90
    %p96 = scmp.eq.s32.totalorder %s9, 0
    %p97 = por %p95, %p96
    %p98 = scmp.ne.s32.totalorder %s87, %s90
    %p99 = scmp.eq.s32.totalorder %s14, 1
    %p100 = por %p98, %p99
    %p101 = scmp.ne.s32.totalorder %s90, %s91
    %p102 = scmp.eq.s32.totalorder %s14, 0
    %p103 = por %p101, %p102
    %p104 = scmp.ne.s32.totalorder %s90, %s91
    %p105 = scmp.eq.s32.totalorder %s15, 1
    %p106 = por %p104, %p105
    %p108 = scmp.ne.s32.totalorder %s91, %s107
    %p109 = scmp.eq.s32.totalorder %s15, 0
    %p110 = por %p108, %p109
    %p111 = scmp.le.s32.totalorder 1, %s9
    %p112 = scmp.lt.s32.totalorder %s9, 3
    %p113 = pnand %p111, %p112
    %p114 = pneg %p113
    // Predicated region
    $region9: #{_lambda_.4} parent=5 // pred_check
      _
    $region10: #{_lambda_.4} parent=5 // pred_check_branch
      %116 = sbr.rel (%p113) target = $region12
    $region11: #{_lambda_.4} parent=5 // pred_region
      %s117 = ssub.s32 %s9, 1
      // Predicated region
      $region13: #{_lambda_.4} parent=11 // pred_check
        %p118 = pneg %p56
      $region14: #{_lambda_.4} parent=11 // pred_check_branch
        %120 = sbr.rel (%p118) target = $region16
      $region15: #{_lambda_.4} parent=11 // pred_region
        _
      $region16: #{_lambda_.4} parent=11 // pred_fallthru
        _
      // Predicated region
      $region17: #{_lambda_.4} parent=11 // pred_check
        %p121 = pneg %p77
      $region18: #{_lambda_.4} parent=11 // pred_check_branch
        %123 = sbr.rel (%p121) target = $region20
      $region19: #{_lambda_.4} parent=11 // pred_region
        _
      $region20: #{_lambda_.4} parent=11 // pred_fallthru
        _
    $region12: #{_lambda_.4} parent=5 // pred_fallthru
      _
    %p124 = scmp.lt.s32.totalorder %s9, 2
    // Predicated region
    $region21: #{_lambda_.4} parent=5 // pred_check
      %p125 = pneg %p124
    $region22: #{_lambda_.4} parent=5 // pred_check_branch
      %127 = sbr.rel (%p125) target = $region24
    $region23: #{_lambda_.4} parent=5 // pred_region
      // Predicated region
      $region25: #{_lambda_.4} parent=23 // pred_check
        %p128 = pneg %p29
      $region26: #{_lambda_.4} parent=23 // pred_check_branch
        %130 = sbr.rel (%p128) target = $region28
      $region27: #{_lambda_.4} parent=23 // pred_region
        %s131 = smul.u32 32, %s9
        %p132 = scmp.lt.s32.totalorder %s131, 63
        %s133 = scalar_select %p132, %s131, 63
        %s134 = smul.addr %s133, 2
        %s135 = smul.addr %s134, 4
        %s136 = scalar_lea.vmem %s0, %s135
        %s137 = smul.u32 32, %s9
      $region28: #{_lambda_.4} parent=23 // pred_fallthru
        _
    $region24: #{_lambda_.4} parent=5 // pred_fallthru
      _
    %p138 = scmp.le.s32.totalorder 1, %s9
    %p139 = scmp.lt.s32.totalorder %s9, 3
    %p140 = pnand %p138, %p139
    %p141 = pneg %p140
    // Predicated region
    $region29: #{_lambda_.4} parent=5 // pred_check
      _
    $region30: #{_lambda_.4} parent=5 // pred_check_branch
      %143 = sbr.rel (%p140) target = $region32
    $region31: #{_lambda_.4} parent=5 // pred_region
      %s144 = ssub.s32 %s9, 1
      %s145 = smul.u32 32, %s14
      %p146 = scmp.lt.s32.totalorder %s145, 63
      %s147 = scalar_select %p146, %s145, 63
      %s148 = smul.addr %s147, 2
      %s149 = smul.addr %s148, 4
      %s150 = scalar_lea.vmem %s0, %s149
      %p151 = pneg %p35
      %p152 = pneg %p32
      %p153 = pneg %p56
      %p154 = pneg %p53
      %p155 = pneg %p77
      %p156 = pneg %p74
      %p157 = pneg %p103
      %p158 = pneg %p100
      %p159 = scmp.lt.s32.totalorder %s14, 1
      %s160 = scalar_select %p159, %s14, 1
      %s161 = smul.addr %s160, 8
      %s162 = smul.addr %s161, 4
      %s163 = scalar_lea.vmem %s3, %s162
      %s164 = smul.u32 32, %s14
      %p165 = scmp.lt.s32.totalorder %s164, 63
      %s166 = scalar_select %p165, %s164, 63
      %s167 = smul.addr %s166, 2
      %s168 = smul.addr %s167, 4
      %s169 = scalar_lea.vmem %s0, %s168
      %s170 = smul.u32 32, %s14
      %p171 = scmp.lt.s32.totalorder %s14, 1
      %s172 = scalar_select %p171, %s14, 1
      %s173 = smul.addr %s172, 8
      %s174 = smul.addr %s173, 4
      %s175 = scalar_lea.vmem %s3, %s174
      %v177 = vld [vmem:[%s169] sm:$0xff]
      %v178 = vld [vmem:[%s169 + $0x8] sm:$0xff]
      %v179 = vld [vmem:[%s169 + $0x10] sm:$0xff]
      %v180 = vld [vmem:[%s169 + $0x18] sm:$0xff]
      %v181 = vld [vmem:[%s169 + $0x20] sm:$0xff]
      %v182 = vld [vmem:[%s169 + $0x28] sm:$0xff]
      %v183 = vld [vmem:[%s169 + $0x30] sm:$0xff]
      %v184 = vld [vmem:[%s169 + $0x38] sm:$0xff]
      %v185 = vld [vmem:[%s169 + $0x40] sm:$0xff]
      %v186 = vld [vmem:[%s169 + $0x48] sm:$0xff]
      %v187 = vld [vmem:[%s169 + $0x50] sm:$0xff]
      %v188 = vld [vmem:[%s169 + $0x58] sm:$0xff]
      %v189 = vld [vmem:[%s169 + $0x60] sm:$0xff]
      %v190 = vld [vmem:[%s169 + $0x68] sm:$0xff]
      %v191 = vld [vmem:[%s169 + $0x70] sm:$0xff]
      %v192 = vld [vmem:[%s169 + $0x78] sm:$0xff]
      %v193 = vld [vmem:[%s169 + $0x80] sm:$0xff]
      %v194 = vld [vmem:[%s169 + $0x88] sm:$0xff]
      %v195 = vld [vmem:[%s169 + $0x90] sm:$0xff]
      %v196 = vld [vmem:[%s169 + $0x98] sm:$0xff]
      %v197 = vld [vmem:[%s169 + $0xa0] sm:$0xff]
      %v198 = vld [vmem:[%s169 + $0xa8] sm:$0xff]
      %v199 = vld [vmem:[%s169 + $0xb0] sm:$0xff]
      %v200 = vld [vmem:[%s169 + $0xb8] sm:$0xff]
      %v201 = vld [vmem:[%s169 + $0xc0] sm:$0xff]
      %v202 = vld [vmem:[%s169 + $0xc8] sm:$0xff]
      %v203 = vld [vmem:[%s169 + $0xd0] sm:$0xff]
      %v204 = vld [vmem:[%s169 + $0xd8] sm:$0xff]
      %v205 = vld [vmem:[%s169 + $0xe0] sm:$0xff]
      %v206 = vld [vmem:[%s169 + $0xe8] sm:$0xff]
      %v207 = vld [vmem:[%s169 + $0xf0] sm:$0xff]
      %v208 = vld [vmem:[%s169 + $0xf8] sm:$0xff]
      %v209 = vld [vmem:[%s1] sm:$0xf]
      %v210 = vld [vmem:[%s1 + $0x4] sm:$0xf]
      %v211 = vld [vmem:[%s1 + $0x8] sm:$0xf]
      %v212 = vld [vmem:[%s1 + $0xc] sm:$0xf]
      %v213 = vld [vmem:[%s1 + $0x10] sm:$0xf]
      %v214 = vld [vmem:[%s1 + $0x14] sm:$0xf]
      %v215 = vld [vmem:[%s1 + $0x18] sm:$0xf]
      %v216 = vld [vmem:[%s1 + $0x1c] sm:$0xf]
      %v217 = vld [vmem:[%s1 + $0x20] sm:$0xf]
      %v218 = vld [vmem:[%s1 + $0x24] sm:$0xf]
      %v219 = vld [vmem:[%s1 + $0x28] sm:$0xf]
      %v220 = vld [vmem:[%s1 + $0x2c] sm:$0xf]
      %v221 = vld [vmem:[%s1 + $0x30] sm:$0xf]
      %v222 = vld [vmem:[%s1 + $0x34] sm:$0xf]
      %v223 = vld [vmem:[%s1 + $0x38] sm:$0xf]
      %v224 = vld [vmem:[%s1 + $0x3c] sm:$0xf]
      %v225 = vld [vmem:[%s1 + $0x40] sm:$0xf]
      %v226 = vld [vmem:[%s1 + $0x44] sm:$0xf]
      %v227 = vld [vmem:[%s1 + $0x48] sm:$0xf]
      %v228 = vld [vmem:[%s1 + $0x4c] sm:$0xf]
      %v229 = vld [vmem:[%s1 + $0x50] sm:$0xf]
      %v230 = vld [vmem:[%s1 + $0x54] sm:$0xf]
      %v231 = vld [vmem:[%s1 + $0x58] sm:$0xf]
      %v232 = vld [vmem:[%s1 + $0x5c] sm:$0xf]
      %v233 = vld [vmem:[%s1 + $0x60] sm:$0xf]
      %v234 = vld [vmem:[%s1 + $0x64] sm:$0xf]
      %v235 = vld [vmem:[%s1 + $0x68] sm:$0xf]
      %v236 = vld [vmem:[%s1 + $0x6c] sm:$0xf]
      %v237 = vld [vmem:[%s1 + $0x70] sm:$0xf]
      %v238 = vld [vmem:[%s1 + $0x74] sm:$0xf]
      %v239 = vld [vmem:[%s1 + $0x78] sm:$0xf]
      %v240 = vld [vmem:[%s1 + $0x7c] sm:$0xf]
      %v241 = vld [vmem:[%s2] sm:$0x1]
      %v243 = vlaneseq
      %v244 = vshrl.u32 %v243, 7
      %v245 = vsub.s32 0, %v244
      %v246 = vrot.slane %v241, %v245
      %v280 = vunpack.c.l.b16 %v177
      %v281 = vunpack.c.h.b16 %v177
      %v282 = vunpack.c.l.b16 %v178
      %v283 = vunpack.c.h.b16 %v178
      %v284 = vunpack.c.l.b16 %v179
      %v285 = vunpack.c.h.b16 %v179
      %v286 = vunpack.c.l.b16 %v180
      %v287 = vunpack.c.h.b16 %v180
      %v288 = vunpack.c.l.b16 %v181
      %v289 = vunpack.c.h.b16 %v181
      %v290 = vunpack.c.l.b16 %v182
      %v291 = vunpack.c.h.b16 %v182
      %v292 = vunpack.c.l.b16 %v183
      %v293 = vunpack.c.h.b16 %v183
      %v294 = vunpack.c.l.b16 %v184
      %v295 = vunpack.c.h.b16 %v184
      %v296 = vunpack.c.l.b16 %v185
      %v297 = vunpack.c.h.b16 %v185
      %v298 = vunpack.c.l.b16 %v186
      %v299 = vunpack.c.h.b16 %v186
      %v300 = vunpack.c.l.b16 %v187
      %v301 = vunpack.c.h.b16 %v187
      %v302 = vunpack.c.l.b16 %v188
      %v303 = vunpack.c.h.b16 %v188
      %v304 = vunpack.c.l.b16 %v189
      %v305 = vunpack.c.h.b16 %v189
      %v306 = vunpack.c.l.b16 %v190
      %v307 = vunpack.c.h.b16 %v190
      %v308 = vunpack.c.l.b16 %v191
      %v309 = vunpack.c.h.b16 %v191
      %v310 = vunpack.c.l.b16 %v192
      %v311 = vunpack.c.h.b16 %v192
      %v312 = vunpack.c.l.b16 %v193
      %v313 = vunpack.c.h.b16 %v193
      %v314 = vunpack.c.l.b16 %v194
      %v315 = vunpack.c.h.b16 %v194
      %v316 = vunpack.c.l.b16 %v195
      %v317 = vunpack.c.h.b16 %v195
      %v318 = vunpack.c.l.b16 %v196
      %v319 = vunpack.c.h.b16 %v196
      %v320 = vunpack.c.l.b16 %v197
      %v321 = vunpack.c.h.b16 %v197
      %v322 = vunpack.c.l.b16 %v198
      %v323 = vunpack.c.h.b16 %v198
      %v324 = vunpack.c.l.b16 %v199
      %v325 = vunpack.c.h.b16 %v199
      %v326 = vunpack.c.l.b16 %v200
      %v327 = vunpack.c.h.b16 %v200
      %v328 = vunpack.c.l.b16 %v201
      %v329 = vunpack.c.h.b16 %v201
      %v330 = vunpack.c.l.b16 %v202
      %v331 = vunpack.c.h.b16 %v202
      %v332 = vunpack.c.l.b16 %v203
      %v333 = vunpack.c.h.b16 %v203
      %v334 = vunpack.c.l.b16 %v204
      %v335 = vunpack.c.h.b16 %v204
      %v336 = vunpack.c.l.b16 %v205
      %v337 = vunpack.c.h.b16 %v205
      %v338 = vunpack.c.l.b16 %v206
      %v339 = vunpack.c.h.b16 %v206
      %v340 = vunpack.c.l.b16 %v207
      %v341 = vunpack.c.h.b16 %v207
      %v342 = vunpack.c.l.b16 %v208
      %v343 = vunpack.c.h.b16 %v208
      %v344 = vpack.c.b16 %v282, %v280
      %v345 = vpack.c.b16 %v283, %v281
      %v346 = vpack.c.b16 %v286, %v284
      %v347 = vpack.c.b16 %v287, %v285
      %v348 = vpack.c.b16 %v290, %v288
      %v349 = vpack.c.b16 %v291, %v289
      %v350 = vpack.c.b16 %v294, %v292
      %v351 = vpack.c.b16 %v295, %v293
      %v352 = vpack.c.b16 %v298, %v296
      %v353 = vpack.c.b16 %v299, %v297
      %v354 = vpack.c.b16 %v302, %v300
      %v355 = vpack.c.b16 %v303, %v301
      %v356 = vpack.c.b16 %v306, %v304
      %v357 = vpack.c.b16 %v307, %v305
      %v358 = vpack.c.b16 %v310, %v308
      %v359 = vpack.c.b16 %v311, %v309
      %v360 = vpack.c.b16 %v314, %v312
      %v361 = vpack.c.b16 %v315, %v313
      %v362 = vpack.c.b16 %v318, %v316
      %v363 = vpack.c.b16 %v319, %v317
      %v364 = vpack.c.b16 %v322, %v320
      %v365 = vpack.c.b16 %v323, %v321
      %v366 = vpack.c.b16 %v326, %v324
      %v367 = vpack.c.b16 %v327, %v325
      %v368 = vpack.c.b16 %v330, %v328
      %v369 = vpack.c.b16 %v331, %v329
      %v370 = vpack.c.b16 %v334, %v332
      %v371 = vpack.c.b16 %v335, %v333
      %v372 = vpack.c.b16 %v338, %v336
      %v373 = vpack.c.b16 %v339, %v337
      %v374 = vpack.c.b16 %v342, %v340
      %v375 = vpack.c.b16 %v343, %v341
      %v440 = vunpack.c.l.b16 %v209
      %v441 = vunpack.c.l.b16 %v210
      %v442 = vunpack.c.l.b16 %v211
      %v443 = vunpack.c.l.b16 %v212
      %v444 = vunpack.c.l.b16 %v213
      %v445 = vunpack.c.l.b16 %v214
      %v446 = vunpack.c.l.b16 %v215
      %v447 = vunpack.c.l.b16 %v216
      %v448 = vunpack.c.l.b16 %v217
      %v449 = vunpack.c.l.b16 %v218
      %v450 = vunpack.c.l.b16 %v219
      %v451 = vunpack.c.l.b16 %v220
      %v452 = vunpack.c.l.b16 %v221
      %v453 = vunpack.c.l.b16 %v222
      %v454 = vunpack.c.l.b16 %v223
      %v455 = vunpack.c.l.b16 %v224
      %v456 = vunpack.c.l.b16 %v225
      %v457 = vunpack.c.l.b16 %v226
      %v458 = vunpack.c.l.b16 %v227
      %v459 = vunpack.c.l.b16 %v228
      %v460 = vunpack.c.l.b16 %v229
      %v461 = vunpack.c.l.b16 %v230
      %v462 = vunpack.c.l.b16 %v231
      %v463 = vunpack.c.l.b16 %v232
      %v464 = vunpack.c.l.b16 %v233
      %v465 = vunpack.c.l.b16 %v234
      %v466 = vunpack.c.l.b16 %v235
      %v467 = vunpack.c.l.b16 %v236
      %v468 = vunpack.c.l.b16 %v237
      %v469 = vunpack.c.l.b16 %v238
      %v470 = vunpack.c.l.b16 %v239
      %v471 = vunpack.c.l.b16 %v240
      %v472 = vpack.c.b16 %v441, %v440
      %v473 = vpack.c.b16 %v443, %v442
      %v474 = vpack.c.b16 %v445, %v444
      %v475 = vpack.c.b16 %v447, %v446
      %v476 = vpack.c.b16 %v449, %v448
      %v477 = vpack.c.b16 %v451, %v450
      %v478 = vpack.c.b16 %v453, %v452
      %v479 = vpack.c.b16 %v455, %v454
      %v480 = vpack.c.b16 %v457, %v456
      %v481 = vpack.c.b16 %v459, %v458
      %v482 = vpack.c.b16 %v461, %v460
      %v483 = vpack.c.b16 %v463, %v462
      %v484 = vpack.c.b16 %v465, %v464
      %v485 = vpack.c.b16 %v467, %v466
      %v486 = vpack.c.b16 %v469, %v468
      %v487 = vpack.c.b16 %v471, %v470
      %504 = vmatprep.subr.bf16.mxu0 0
      %505 = vmatpush1.bf16.msra.mxu0 %v472
      %506 = vmatprep.subr.bf16.mxu0 0
      %507 = vmatpush1.bf16.msra.mxu0 %v473
      %508 = vmatprep.subr.bf16.mxu0 0
      %509 = vmatpush1.bf16.msra.mxu0 %v474
      %510 = vmatprep.subr.bf16.mxu0 0
      %511 = vmatpush1.bf16.msra.mxu0 %v475
      %512 = vmatprep.subr.bf16.mxu0 0
      %513 = vmatpush1.bf16.msra.mxu0 %v476
      %514 = vmatprep.subr.bf16.mxu0 0
      %515 = vmatpush1.bf16.msra.mxu0 %v477
      %516 = vmatprep.subr.bf16.mxu0 0
      %517 = vmatpush1.bf16.msra.mxu0 %v478
      %518 = vmatprep.subr.bf16.mxu0 0
      %519 = vmatpush1.bf16.msra.mxu0 %v479
      %520 = vmatprep.subr.bf16.mxu0 0
      %521 = vmatpush1.bf16.msra.mxu0 %v480
      %522 = vmatprep.subr.bf16.mxu0 0
      %523 = vmatpush1.bf16.msra.mxu0 %v481
      %524 = vmatprep.subr.bf16.mxu0 0
      %525 = vmatpush1.bf16.msra.mxu0 %v482
      %526 = vmatprep.subr.bf16.mxu0 0
      %527 = vmatpush1.bf16.msra.mxu0 %v483
      %528 = vmatprep.subr.bf16.mxu0 0
      %529 = vmatpush1.bf16.msra.mxu0 %v484
      %530 = vmatprep.subr.bf16.mxu0 0
      %531 = vmatpush1.bf16.msra.mxu0 %v485
      %532 = vmatprep.subr.bf16.mxu0 0
      %533 = vmatpush1.bf16.msra.mxu0 %v486
      %534 = vmatprep.subr.bf16.mxu0 0
      %535 = vmatpush1.bf16.msra.mxu0 %v487
      %536 = vmatprep.mubr.bf16.mxu0 %v345
      %537 = vmatmul.mubr.bf16.gmra.mrb[0].mxu0 %v344
      %v538 = vpop.f32.mrb[0].mxu0
      %v539 = vadd.f32 %v246, %v538
      %v540 = vpop.f32.mrb[0].mxu0
      %v541 = vpop.f32.mrb[0].mxu0
      %v542 = vadd.f32 %v246, %v541
      %v543 = vpop.f32.mrb[0].mxu0
      %544 = vmatprep.mubr.bf16.mxu0 %v347
      %545 = vmatmul.mubr.bf16.gmra.mrb[0].mxu0 %v346
      %v546 = vpop.f32.mrb[0].mxu0
      %v547 = vadd.f32 %v246, %v546
      %v548 = vpop.f32.mrb[0].mxu0
      %v549 = vpop.f32.mrb[0].mxu0
      %v550 = vadd.f32 %v246, %v549
      %v551 = vpop.f32.mrb[0].mxu0
      %552 = vmatprep.mubr.bf16.mxu0 %v349
      %553 = vmatmul.mubr.bf16.gmra.mrb[0].mxu0 %v348
      %v554 = vpop.f32.mrb[0].mxu0
      %v555 = vadd.f32 %v246, %v554
      %v556 = vpop.f32.mrb[0].mxu0
      %v557 = vpop.f32.mrb[0].mxu0
      %v558 = vadd.f32 %v246, %v557
      %v559 = vpop.f32.mrb[0].mxu0
      %560 = vmatprep.mubr.bf16.mxu0 %v351
      %561 = vmatmul.mubr.bf16.gmra.mrb[0].mxu0 %v350
      %v562 = vpop.f32.mrb[0].mxu0
      %v563 = vadd.f32 %v246, %v562
      %v564 = vpop.f32.mrb[0].mxu0
      %v565 = vpop.f32.mrb[0].mxu0
      %v566 = vadd.f32 %v246, %v565
      %v567 = vpop.f32.mrb[0].mxu0
      %568 = vmatprep.mubr.bf16.mxu0 %v353
      %569 = vmatmul.mubr.bf16.gmra.mrb[0].mxu0 %v352
      %v570 = vpop.f32.mrb[0].mxu0
      %v571 = vadd.f32 %v246, %v570
      %v572 = vpop.f32.mrb[0].mxu0
      %v573 = vpop.f32.mrb[0].mxu0
      %v574 = vadd.f32 %v246, %v573
      %v575 = vpop.f32.mrb[0].mxu0
      %576 = vmatprep.mubr.bf16.mxu0 %v355
      %577 = vmatmul.mubr.bf16.gmra.mrb[0].mxu0 %v354
      %v578 = vpop.f32.mrb[0].mxu0
      %v579 = vadd.f32 %v246, %v578
      %v580 = vpop.f32.mrb[0].mxu0
      %v581 = vpop.f32.mrb[0].mxu0
      %v582 = vadd.f32 %v246, %v581
      %v583 = vpop.f32.mrb[0].mxu0
      %584 = vmatprep.mubr.bf16.mxu0 %v357
      %585 = vmatmul.mubr.bf16.gmra.mrb[0].mxu0 %v356
      %v586 = vpop.f32.mrb[0].mxu0
      %v587 = vadd.f32 %v246, %v586
      %v588 = vpop.f32.mrb[0].mxu0
      %v589 = vpop.f32.mrb[0].mxu0
      %v590 = vadd.f32 %v246, %v589
      %v591 = vpop.f32.mrb[0].mxu0
      %592 = vmatprep.mubr.bf16.mxu0 %v359
      %593 = vmatmul.mubr.bf16.gmra.mrb[0].mxu0 %v358
      %v594 = vpop.f32.mrb[0].mxu0
      %v595 = vadd.f32 %v246, %v594
      %v596 = vpop.f32.mrb[0].mxu0
      %v597 = vpop.f32.mrb[0].mxu0
      %v598 = vadd.f32 %v246, %v597
      %v599 = vpop.f32.mrb[0].mxu0
      %600 = vmatprep.mubr.bf16.mxu0 %v361
      %601 = vmatmul.mubr.bf16.gmra.mrb[0].mxu0 %v360
      %v602 = vpop.f32.mrb[0].mxu0
      %v603 = vadd.f32 %v246, %v602
      %v604 = vpop.f32.mrb[0].mxu0
      %v605 = vpop.f32.mrb[0].mxu0
      %v606 = vadd.f32 %v246, %v605
      %v607 = vpop.f32.mrb[0].mxu0
      %608 = vmatprep.mubr.bf16.mxu0 %v363
      %609 = vmatmul.mubr.bf16.gmra.mrb[0].mxu0 %v362
      %v610 = vpop.f32.mrb[0].mxu0
      %v611 = vadd.f32 %v246, %v610
      %v612 = vpop.f32.mrb[0].mxu0
      %v613 = vpop.f32.mrb[0].mxu0
      %v614 = vadd.f32 %v246, %v613
      %v615 = vpop.f32.mrb[0].mxu0
      %616 = vmatprep.mubr.bf16.mxu0 %v365
      %617 = vmatmul.mubr.bf16.gmra.mrb[0].mxu0 %v364
      %v618 = vpop.f32.mrb[0].mxu0
      %v619 = vadd.f32 %v246, %v618
      %v620 = vpop.f32.mrb[0].mxu0
      %v621 = vpop.f32.mrb[0].mxu0
      %v622 = vadd.f32 %v246, %v621
      %v623 = vpop.f32.mrb[0].mxu0
      %624 = vmatprep.mubr.bf16.mxu0 %v367
      %625 = vmatmul.mubr.bf16.gmra.mrb[0].mxu0 %v366
      %v626 = vpop.f32.mrb[0].mxu0
      %v627 = vadd.f32 %v246, %v626
      %v628 = vpop.f32.mrb[0].mxu0
      %v629 = vpop.f32.mrb[0].mxu0
      %v630 = vadd.f32 %v246, %v629
      %v631 = vpop.f32.mrb[0].mxu0
      %632 = vmatprep.mubr.bf16.mxu0 %v369
      %633 = vmatmul.mubr.bf16.gmra.mrb[0].mxu0 %v368
      %v634 = vpop.f32.mrb[0].mxu0
      %v635 = vadd.f32 %v246, %v634
      %v636 = vpop.f32.mrb[0].mxu0
      %v637 = vpop.f32.mrb[0].mxu0
      %v638 = vadd.f32 %v246, %v637
      %v639 = vpop.f32.mrb[0].mxu0
      %640 = vmatprep.mubr.bf16.mxu0 %v371
      %641 = vmatmul.mubr.bf16.gmra.mrb[0].mxu0 %v370
      %v642 = vpop.f32.mrb[0].mxu0
      %v643 = vadd.f32 %v246, %v642
      %v644 = vpop.f32.mrb[0].mxu0
      %v645 = vpop.f32.mrb[0].mxu0
      %v646 = vadd.f32 %v246, %v645
      %v647 = vpop.f32.mrb[0].mxu0
      %648 = vmatprep.mubr.bf16.mxu0 %v373
      %649 = vmatmul.mubr.bf16.gmra.mrb[0].mxu0 %v372
      %v650 = vpop.f32.mrb[0].mxu0
      %v651 = vadd.f32 %v246, %v650
      %v652 = vpop.f32.mrb[0].mxu0
      %v653 = vpop.f32.mrb[0].mxu0
      %v654 = vadd.f32 %v246, %v653
      %v655 = vpop.f32.mrb[0].mxu0
      %656 = vmatprep.mubr.bf16.mxu0 %v375
      %657 = vmatmul.mubr.bf16.gmra.mrb[0].mxu0 %v374
      %v658 = vpop.f32.mrb[0].mxu0
      %v659 = vadd.f32 %v246, %v658
      %v660 = vpop.f32.mrb[0].mxu0
      %v661 = vpop.f32.mrb[0].mxu0
      %v662 = vadd.f32 %v246, %v661
      %v663 = vpop.f32.mrb[0].mxu0
      %664 = vdwg.mxu0
      %v665 = vmax.f32 %v539, 0.0
      %v666 = vmax.f32 %v542, 0.0
      %v667 = vmax.f32 %v547, 0.0
      %v668 = vmax.f32 %v550, 0.0
      %v669 = vmax.f32 %v555, 0.0
      %v670 = vmax.f32 %v558, 0.0
      %v671 = vmax.f32 %v563, 0.0
      %v672 = vmax.f32 %v566, 0.0
      %v673 = vmax.f32 %v571, 0.0
      %v674 = vmax.f32 %v574, 0.0
      %v675 = vmax.f32 %v579, 0.0
      %v676 = vmax.f32 %v582, 0.0
      %v677 = vmax.f32 %v587, 0.0
      %v678 = vmax.f32 %v590, 0.0
      %v679 = vmax.f32 %v595, 0.0
      %v680 = vmax.f32 %v598, 0.0
      %v681 = vmax.f32 %v603, 0.0
      %v682 = vmax.f32 %v606, 0.0
      %v683 = vmax.f32 %v611, 0.0
      %v684 = vmax.f32 %v614, 0.0
      %v685 = vmax.f32 %v619, 0.0
      %v686 = vmax.f32 %v622, 0.0
      %v687 = vmax.f32 %v627, 0.0
      %v688 = vmax.f32 %v630, 0.0
      %v689 = vmax.f32 %v635, 0.0
      %v690 = vmax.f32 %v638, 0.0
      %v691 = vmax.f32 %v643, 0.0
      %v692 = vmax.f32 %v646, 0.0
      %v693 = vmax.f32 %v651, 0.0
      %v694 = vmax.f32 %v654, 0.0
      %v695 = vmax.f32 %v659, 0.0
      %v696 = vmax.f32 %v662, 0.0
      %v697 = vmax.f32 %v665, 0.0
      %v698 = vmax.f32 %v681, %v666
      %v699 = vmax.f32 %v682, %v667
      %v700 = vmax.f32 %v683, %v668
      %v701 = vmax.f32 %v684, %v669
      %v702 = vmax.f32 %v685, %v670
      %v703 = vmax.f32 %v686, %v671
      %v704 = vmax.f32 %v687, %v672
      %v705 = vmax.f32 %v697, %v681
      %v706 = vmax.f32 %v698, %v682
      %v707 = vmax.f32 %v699, %v683
      %v708 = vmax.f32 %v700, %v684
      %v709 = vmax.f32 %v701, %v685
      %v710 = vmax.f32 %v702, %v686
      %v711 = vmax.f32 %v703, %v687
      %v712 = vmax.f32 %v704, %v688
      %v713 = vmax.f32 %v673, 0.0
      %v714 = vmax.f32 %v689, %v674
      %v715 = vmax.f32 %v690, %v675
      %v716 = vmax.f32 %v691, %v676
      %v717 = vmax.f32 %v692, %v677
      %v718 = vmax.f32 %v693, %v678
      %v719 = vmax.f32 %v694, %v679
      %v720 = vmax.f32 %v695, %v680
      %v721 = vmax.f32 %v713, %v689
      %v722 = vmax.f32 %v714, %v690
      %v723 = vmax.f32 %v715, %v691
      %v724 = vmax.f32 %v716, %v692
      %v725 = vmax.f32 %v717, %v693
      %v726 = vmax.f32 %v718, %v694
      %v727 = vmax.f32 %v719, %v695
      %v728 = vmax.f32 %v720, %v696
      %v737 = vrot.slane %v721, 7
      %v738 = vrot.slane %v722, 7
      %v739 = vrot.slane %v723, 7
      %v740 = vrot.slane %v724, 7
      %v741 = vrot.slane %v725, 7
      %v742 = vrot.slane %v726, 7
      %v743 = vrot.slane %v727, 7
      %v744 = vrot.slane %v728, 7
      %vm753 = vcmask 1040384
      %v754 = vsel %vm753, 0.0, %v737
      %v755 = vsel %vm753, 0.0, %v738
      %v756 = vsel %vm753, 0.0, %v739
      %v757 = vsel %vm753, 0.0, %v740
      %v758 = vsel %vm753, 0.0, %v741
      %v759 = vsel %vm753, 0.0, %v742
      %v760 = vsel %vm753, 0.0, %v743
      %v761 = vsel %vm753, 0.0, %v744
      %v762 = vmax.f32 %v754, %v705
      %v763 = vmax.f32 %v755, %v706
      %v764 = vmax.f32 %v756, %v707
      %v765 = vmax.f32 %v757, %v708
      %v766 = vmax.f32 %v758, %v709
      %v767 = vmax.f32 %v759, %v710
      %v768 = vmax.f32 %v760, %v711
      %v769 = vmax.f32 %v761, %v712
      %v770 = vmax.f32 %v762, %v721
      %v771 = vmax.f32 %v763, %v722
      %v772 = vmax.f32 %v764, %v723
      %v773 = vmax.f32 %v765, %v724
      %v774 = vmax.f32 %v766, %v725
      %v775 = vmax.f32 %v767, %v726
      %v776 = vmax.f32 %v768, %v727
      %v777 = vmax.f32 %v769, %v728
      %v778 = vpack.c.bf16 %v770, %v770
      %v779 = vpack.c.bf16 %v771, %v771
      %v780 = vpack.c.bf16 %v772, %v772
      %v781 = vpack.c.bf16 %v773, %v773
      %v782 = vpack.c.bf16 %v774, %v774
      %v783 = vpack.c.bf16 %v775, %v775
      %v784 = vpack.c.bf16 %v776, %v776
      %v785 = vpack.c.bf16 %v777, %v777
      %786 = vst [vmem:[%s175] sm:$0xf] %v778
      %787 = vst [vmem:[%s175 + $0x4] sm:$0xf] %v779
      %788 = vst [vmem:[%s175 + $0x8] sm:$0xf] %v780
      %789 = vst [vmem:[%s175 + $0xc] sm:$0xf] %v781
      %790 = vst [vmem:[%s175 + $0x10] sm:$0xf] %v782
      %791 = vst [vmem:[%s175 + $0x14] sm:$0xf] %v783
      %792 = vst [vmem:[%s175 + $0x18] sm:$0xf] %v784
      %793 = vst [vmem:[%s175 + $0x1c] sm:$0xf] %v785
      %p794 = scmp.lt.s32.totalorder %s14, 1
      %s795 = scalar_select %p794, %s14, 1
      %s796 = smul.addr %s795, 8
      %s797 = smul.addr %s796, 4
      %s798 = scalar_lea.vmem %s3, %s797
      // Predicated region
      $region33: #{_lambda_.4} parent=31 // pred_check
        %p799 = pneg %p100
      $region34: #{_lambda_.4} parent=31 // pred_check_branch
        %801 = sbr.rel (%p799) target = $region36
      $region35: #{_lambda_.4} parent=31 // pred_region
        _
      $region36: #{_lambda_.4} parent=31 // pred_fallthru
        _
    $region32: #{_lambda_.4} parent=5 // pred_fallthru
      _
    %p802 = scmp.le.s32.totalorder 2, %s9
    // Predicated region
    $region37: #{_lambda_.4} parent=5 // pred_check
      %p803 = pneg %p802
    $region38: #{_lambda_.4} parent=5 // pred_check_branch
      %805 = sbr.rel (%p803) target = $region40
    $region39: #{_lambda_.4} parent=5 // pred_region
      %s806 = ssub.s32 %s9, 2
      // Predicated region
      $region41: #{_lambda_.4} parent=39 // pred_check
        %p807 = pneg %p106
      $region42: #{_lambda_.4} parent=39 // pred_check_branch
        %809 = sbr.rel (%p807) target = $region44
      $region43: #{_lambda_.4} parent=39 // pred_region
        %p810 = scmp.lt.s32.totalorder %s15, 1
        %s811 = scalar_select %p810, %s15, 1
        %s812 = smul.addr %s811, 8
        %s813 = smul.addr %s812, 4
        %s814 = scalar_lea.vmem %s3, %s813
      $region44: #{_lambda_.4} parent=39 // pred_fallthru
        _
    $region40: #{_lambda_.4} parent=5 // pred_fallthru
      _
  $region6: #{_lambda_.4} parent=0 // loop_footer
    %s13 = sadd.s32 1, %s9
  $region7: #{_lambda_.4} parent=0 // loop_footer_branch
    %8 = sbr.rel target = $region3
  $region8: #{_lambda_.4} parent=0 // loop_exit
    _

// kernel: _lambda_.5
$region0: #{_lambda_.5}
  #allocation0 [shape = 'u32[]', space=smem, size = 0x4, offset = 0x4, fixed_abs, tag = 'smem constant byte address 0x4 - core index']
  #allocation1 [shape = 'u32[144,128]{1,0:T(1,128)}', space=vmem, size = 0x12000, scoped, tag = 'internal scratch']
  %s0 = inlined_call_operand.vmem [shape: bf16[128,3200], index: 0, kind: input, shape index: {}]
  %s1 = inlined_call_operand.vmem [shape: bf16[3200,128], index: 1, kind: input, shape index: {}]
  %s2 = inlined_call_operand.vmem [shape: f32[1,128], index: 2, kind: input, shape index: {}]
  %s3 = inlined_call_operand.vmem [shape: bf16[2,4,4,128], index: 3, kind: output, shape index: {}]
  %s4 = sld [smem:[#allocation0]]
  $region45: #{_lambda_.5} parent=0
    _
  %s6 = ssub.s32 1, %s4
  %s7 = scalar_select 0, %s6, %s4
  loop: start=0, step=1, limit=4
  $region2: #{_lambda_.5} parent=0 // loop_pre_header
    _
  $region3: #{_lambda_.5} parent=0 // loop_header
    %s9 = sphi 0, %s13
    %p10 = scmp.ge.s32.totalorder %s9, 4
    %s19 = sphi 0, %s21
    %s22 = sphi 0, %s19
    %s23 = sphi 0, %s22
    %s39 = sphi 0, %s23
    %s43 = sphi 0, %s43
    %s45 = sphi 0, %s43
    %s46 = sphi 0, %s45
    %s60 = sphi 0, %s46
    %s64 = sphi 0, %s64
    %s66 = sphi 0, %s64
    %s67 = sphi 0, %s66
    %s81 = sphi 0, %s67
    %s87 = sphi 0, %s89
    %s90 = sphi 0, %s87
    %s91 = sphi 0, %s90
    %s107 = sphi 0, %s91
  $region4: #{_lambda_.5} parent=0 // loop_header_branch
    %12 = sbr.rel (%p10) target = $region8
  $region5: #{_lambda_.5} parent=0 // loop_body
    %s14 = ssub.s32 %s9, 1
    %s15 = ssub.s32 %s9, 2
    %s16 = sadd.s32 %s9, 1
    %s17 = ssub.s32 %s9, %s16
    %p18 = scmp.eq.s32.totalorder %s17, 0
    %s20 = sadd.s32 %s19, 1
    %s21 = scalar_select %p18, %s19, %s20
    %p24 = pneg %p18
    %p25 = scmp.eq.s32.totalorder %s9, 1
    %p26 = por %p24, %p25
    %p27 = scmp.ne.s32.totalorder %s19, %s22
    %p28 = scmp.eq.s32.totalorder %s9, 0
    %p29 = por %p27, %p28
    %p30 = scmp.ne.s32.totalorder %s19, %s22
    %p31 = scmp.eq.s32.totalorder %s14, 1
    %p32 = por %p30, %p31
    %p33 = scmp.ne.s32.totalorder %s22, %s23
    %p34 = scmp.eq.s32.totalorder %s14, 0
    %p35 = por %p33, %p34
    %p36 = scmp.ne.s32.totalorder %s22, %s23
    %p37 = scmp.eq.s32.totalorder %s15, 1
    %p38 = por %p36, %p37
    %p40 = scmp.ne.s32.totalorder %s23, %s39
    %p41 = scmp.eq.s32.totalorder %s15, 0
    %p42 = por %p40, %p41
    %s44 = sadd.s32 %s43, 1
    %p47 = scmp.eq.s32.totalorder %s9, 1
    %p48 = scmp.ne.s32.totalorder %s43, %s45
    %p49 = scmp.eq.s32.totalorder %s9, 0
    %p50 = por %p48, %p49
    %p51 = scmp.ne.s32.totalorder %s43, %s45
    %p52 = scmp.eq.s32.totalorder %s14, 1
    %p53 = por %p51, %p52
    %p54 = scmp.ne.s32.totalorder %s45, %s46
    %p55 = scmp.eq.s32.totalorder %s14, 0
    %p56 = por %p54, %p55
    %p57 = scmp.ne.s32.totalorder %s45, %s46
    %p58 = scmp.eq.s32.totalorder %s15, 1
    %p59 = por %p57, %p58
    %p61 = scmp.ne.s32.totalorder %s46, %s60
    %p62 = scmp.eq.s32.totalorder %s15, 0
    %p63 = por %p61, %p62
    %s65 = sadd.s32 %s64, 1
    %p68 = scmp.eq.s32.totalorder %s9, 1
    %p69 = scmp.ne.s32.totalorder %s64, %s66
    %p70 = scmp.eq.s32.totalorder %s9, 0
    %p71 = por %p69, %p70
    %p72 = scmp.ne.s32.totalorder %s64, %s66
    %p73 = scmp.eq.s32.totalorder %s14, 1
    %p74 = por %p72, %p73
    %p75 = scmp.ne.s32.totalorder %s66, %s67
    %p76 = scmp.eq.s32.totalorder %s14, 0
    %p77 = por %p75, %p76
    %p78 = scmp.ne.s32.totalorder %s66, %s67
    %p79 = scmp.eq.s32.totalorder %s15, 1
    %p80 = por %p78, %p79
    %p82 = scmp.ne.s32.totalorder %s67, %s81
    %p83 = scmp.eq.s32.totalorder %s15, 0
    %p84 = por %p82, %p83
    %s85 = ssub.s32 %s9, %s16
    %p86 = scmp.eq.s32.totalorder %s85, 0
    %s88 = sadd.s32 %s87, 1
    %s89 = scalar_select %p86, %s87, %s88
    %p92 = pneg %p86
    %p93 = scmp.eq.s32.totalorder %s9, 1
    %p94 = por %p92, %p93
    %p95 = scmp.ne.s32.totalorder %s87, %s90
    %p96 = scmp.eq.s32.totalorder %s9, 0
    %p97 = por %p95, %p96
    %p98 = scmp.ne.s32.totalorder %s87, %s90
    %p99 = scmp.eq.s32.totalorder %s14, 1
    %p100 = por %p98, %p99
    %p101 = scmp.ne.s32.totalorder %s90, %s91
    %p102 = scmp.eq.s32.totalorder %s14, 0
    %p103 = por %p101, %p102
    %p104 = scmp.ne.s32.totalorder %s90, %s91
    %p105 = scmp.eq.s32.totalorder %s15, 1
    %p106 = por %p104, %p105
    %p108 = scmp.ne.s32.totalorder %s91, %s107
    %p109 = scmp.eq.s32.totalorder %s15, 0
    %p110 = por %p108, %p109
    %p111 = scmp.le.s32.totalorder 1, %s9
    %p112 = scmp.lt.s32.totalorder %s9, 3
    %p113 = pnand %p111, %p112
    %p114 = pneg %p113
    // Predicated region
    $region9: #{_lambda_.5} parent=5 // pred_check
      _
    $region10: #{_lambda_.5} parent=5 // pred_check_branch
      %116 = sbr.rel (%p113) target = $region12
    $region11: #{_lambda_.5} parent=5 // pred_region
      %s117 = ssub.s32 %s9, 1
      // Predicated region
      $region13: #{_lambda_.5} parent=11 // pred_check
        %p118 = pneg %p56
      $region14: #{_lambda_.5} parent=11 // pred_check_branch
        %120 = sbr.rel (%p118) target = $region16
      $region15: #{_lambda_.5} parent=11 // pred_region
        _
      $region16: #{_lambda_.5} parent=11 // pred_fallthru
        _
      // Predicated region
      $region17: #{_lambda_.5} parent=11 // pred_check
        %p121 = pneg %p77
      $region18: #{_lambda_.5} parent=11 // pred_check_branch
        %123 = sbr.rel (%p121) target = $region20
      $region19: #{_lambda_.5} parent=11 // pred_region
        _
      $region20: #{_lambda_.5} parent=11 // pred_fallthru
        _
    $region12: #{_lambda_.5} parent=5 // pred_fallthru
      _
    %p124 = scmp.lt.s32.totalorder %s9, 2
    // Predicated region
    $region21: #{_lambda_.5} parent=5 // pred_check
      %p125 = pneg %p124
    $region22: #{_lambda_.5} parent=5 // pred_check_branch
      %127 = sbr.rel (%p125) target = $region24
    $region23: #{_lambda_.5} parent=5 // pred_region
      // Predicated region
      $region25: #{_lambda_.5} parent=23 // pred_check
        %p128 = pneg %p29
      $region26: #{_lambda_.5} parent=23 // pred_check_branch
        %130 = sbr.rel (%p128) target = $region28
      $region27: #{_lambda_.5} parent=23 // pred_region
        %s131 = smul.u32 8, %s9
        %p132 = scmp.lt.s32.totalorder %s131, 15
        %s133 = scalar_select %p132, %s131, 15
        %s134 = smul.addr %s133, 25
        %s135 = smul.addr %s134, 4
        %s136 = scalar_lea.vmem %s0, %s135
        %s137 = smul.u32 8, %s9
      $region28: #{_lambda_.5} parent=23 // pred_fallthru
        _
    $region24: #{_lambda_.5} parent=5 // pred_fallthru
      _
    %p138 = scmp.le.s32.totalorder 1, %s9
    %p139 = scmp.lt.s32.totalorder %s9, 3
    %p140 = pnand %p138, %p139
    %p141 = pneg %p140
    // Predicated region
    $region29: #{_lambda_.5} parent=5 // pred_check
      _
    $region30: #{_lambda_.5} parent=5 // pred_check_branch
      %143 = sbr.rel (%p140) target = $region32
    $region31: #{_lambda_.5} parent=5 // pred_region
      %s144 = ssub.s32 %s9, 1
      %s145 = smul.u32 8, %s14
      %p146 = scmp.lt.s32.totalorder %s145, 15
      %s147 = scalar_select %p146, %s145, 15
      %s148 = smul.addr %s147, 25
      %s149 = smul.addr %s148, 4
      %s150 = scalar_lea.vmem %s0, %s149
      %p151 = pneg %p35
      %p152 = pneg %p32
      %p153 = pneg %p56
      %p154 = pneg %p53
      %p155 = pneg %p77
      %p156 = pneg %p74
      %p157 = pneg %p103
      %p158 = pneg %p100
      %p159 = scmp.lt.s32.totalorder %s14, 1
      %s160 = scalar_select %p159, %s14, 1
      %s161 = smul.addr %s160, 4
      %s162 = smul.addr %s161, 2
      %s163 = scalar_lea.vmem %s3, %s162
      %s164 = smul.u32 8, %s14
      %p165 = scmp.lt.s32.totalorder %s164, 15
      %s166 = scalar_select %p165, %s164, 15
      %s167 = smul.addr %s166, 25
      %s168 = smul.addr %s167, 4
      %s169 = scalar_lea.vmem %s0, %s168
      %s170 = smul.u32 8, %s14
      %p171 = scmp.lt.s32.totalorder %s14, 1
      %s172 = scalar_select %p171, %s14, 1
      %s173 = smul.addr %s172, 4
      %s174 = smul.addr %s173, 2
      %s175 = scalar_lea.vmem %s3, %s174
      %v177 = vld [vmem:[%s169] sm:$0xff]
      %v178 = vld [vmem:[%s169 + $0x8] sm:$0xff]
      %v179 = vld [vmem:[%s169 + $0x10] sm:$0xff]
      %v180 = vld [vmem:[%s169 + $0x18] sm:$0xff]
      %v181 = vld [vmem:[%s169 + $0x20] sm:$0xff]
      %v182 = vld [vmem:[%s169 + $0x28] sm:$0xff]
      %v183 = vld [vmem:[%s169 + $0x30] sm:$0xff]
      %v184 = vld [vmem:[%s169 + $0x38] sm:$0xff]
      %v185 = vld [vmem:[%s169 + $0x40] sm:$0xff]
      %v186 = vld [vmem:[%s169 + $0x48] sm:$0xff]
      %v187 = vld [vmem:[%s169 + $0x50] sm:$0xff]
      %v188 = vld [vmem:[%s169 + $0x58] sm:$0xff]
      %v189 = vld [vmem:[%s169 + $0x60] sm:$0xf]
      %v190 = vld [vmem:[%s169 + $0x64] sm:$0xff]
      %v191 = vld [vmem:[%s169 + $0x6c] sm:$0xff]
      %v192 = vld [vmem:[%s169 + $0x74] sm:$0xff]
      %v193 = vld [vmem:[%s169 + $0x7c] sm:$0xff]
      %v194 = vld [vmem:[%s169 + $0x84] sm:$0xff]
      %v195 = vld [vmem:[%s169 + $0x8c] sm:$0xff]
      %v196 = vld [vmem:[%s169 + $0x94] sm:$0xff]
      %v197 = vld [vmem:[%s169 + $0x9c] sm:$0xff]
      %v198 = vld [vmem:[%s169 + $0xa4] sm:$0xff]
      %v199 = vld [vmem:[%s169 + $0xac] sm:$0xff]
      %v200 = vld [vmem:[%s169 + $0xb4] sm:$0xff]
      %v201 = vld [vmem:[%s169 + $0xbc] sm:$0xff]
      %v202 = vld [vmem:[%s169 + $0xc4] sm:$0xf]
      %v203 = vld [vmem:[%s169 + $0xc8] sm:$0xff]
      %v204 = vld [vmem:[%s169 + $0xd0] sm:$0xff]
      %v205 = vld [vmem:[%s169 + $0xd8] sm:$0xff]
      %v206 = vld [vmem:[%s169 + $0xe0] sm:$0xff]
      %v207 = vld [vmem:[%s169 + $0xe8] sm:$0xff]
      %v208 = vld [vmem:[%s169 + $0xf0] sm:$0xff]
      %v209 = vld [vmem:[%s169 + $0xf8] sm:$0xff]
      %v210 = vld [vmem:[%s169 + $0x100] sm:$0xff]
      %v211 = vld [vmem:[%s169 + $0x108] sm:$0xff]
      %v212 = vld [vmem:[%s169 + $0x110] sm:$0xff]
      %v213 = vld [vmem:[%s169 + $0x118] sm:$0xff]
      %v214 = vld [vmem:[%s169 + $0x120] sm:$0xff]
      %v215 = vld [vmem:[%s169 + $0x128] sm:$0xf]
      %v216 = vld [vmem:[%s169 + $0x12c] sm:$0xff]
      %v217 = vld [vmem:[%s169 + $0x134] sm:$0xff]
      %v218 = vld [vmem:[%s169 + $0x13c] sm:$0xff]
      %v219 = vld [vmem:[%s169 + $0x144] sm:$0xff]
      %v220 = vld [vmem:[%s169 + $0x14c] sm:$0xff]
      %v221 = vld [vmem:[%s169 + $0x154] sm:$0xff]
      %v222 = vld [vmem:[%s169 + $0x15c] sm:$0xff]
      %v223 = vld [vmem:[%s169 + $0x164] sm:$0xff]
      %v224 = vld [vmem:[%s169 + $0x16c] sm:$0xff]
      %v225 = vld [vmem:[%s169 + $0x174] sm:$0xff]
      %v226 = vld [vmem:[%s169 + $0x17c] sm:$0xff]
      %v227 = vld [vmem:[%s169 + $0x184] sm:$0xff]
      %v228 = vld [vmem:[%s169 + $0x18c] sm:$0xf]
      %v229 = vld [vmem:[%s169 + $0x190] sm:$0xff]
      %v230 = vld [vmem:[%s169 + $0x198] sm:$0xff]
      %v231 = vld [vmem:[%s169 + $0x1a0] sm:$0xff]
      %v232 = vld [vmem:[%s169 + $0x1a8] sm:$0xff]
      %v233 = vld [vmem:[%s169 + $0x1b0] sm:$0xff]
      %v234 = vld [vmem:[%s169 + $0x1b8] sm:$0xff]
      %v235 = vld [vmem:[%s169 + $0x1c0] sm:$0xff]
      %v236 = vld [vmem:[%s169 + $0x1c8] sm:$0xff]
      %v237 = vld [vmem:[%s169 + $0x1d0] sm:$0xff]
      %v238 = vld [vmem:[%s169 + $0x1d8] sm:$0xff]
      %v239 = vld [vmem:[%s169 + $0x1e0] sm:$0xff]
      %v240 = vld [vmem:[%s169 + $0x1e8] sm:$0xff]
      %v241 = vld [vmem:[%s169 + $0x1f0] sm:$0xf]
      %v242 = vld [vmem:[%s169 + $0x1f4] sm:$0xff]
      %v243 = vld [vmem:[%s169 + $0x1fc] sm:$0xff]
      %v244 = vld [vmem:[%s169 + $0x204] sm:$0xff]
      %v245 = vld [vmem:[%s169 + $0x20c] sm:$0xff]
      %v246 = vld [vmem:[%s169 + $0x214] sm:$0xff]
      %v247 = vld [vmem:[%s169 + $0x21c] sm:$0xff]
      %v248 = vld [vmem:[%s169 + $0x224] sm:$0xff]
      %v249 = vld [vmem:[%s169 + $0x22c] sm:$0xff]
      %v250 = vld [vmem:[%s169 + $0x234] sm:$0xff]
      %v251 = vld [vmem:[%s169 + $0x23c] sm:$0xff]
      %v252 = vld [vmem:[%s169 + $0x244] sm:$0xff]
      %v253 = vld [vmem:[%s169 + $0x24c] sm:$0xff]
      %v254 = vld [vmem:[%s169 + $0x254] sm:$0xf]
      %v255 = vld [vmem:[%s169 + $0x258] sm:$0xff]
      %v256 = vld [vmem:[%s169 + $0x260] sm:$0xff]
      %v257 = vld [vmem:[%s169 + $0x268] sm:$0xff]
      %v258 = vld [vmem:[%s169 + $0x270] sm:$0xff]
      %v259 = vld [vmem:[%s169 + $0x278] sm:$0xff]
      %v260 = vld [vmem:[%s169 + $0x280] sm:$0xff]
      %v261 = vld [vmem:[%s169 + $0x288] sm:$0xff]
      %v262 = vld [vmem:[%s169 + $0x290] sm:$0xff]
      %v263 = vld [vmem:[%s169 + $0x298] sm:$0xff]
      %v264 = vld [vmem:[%s169 + $0x2a0] sm:$0xff]
      %v265 = vld [vmem:[%s169 + $0x2a8] sm:$0xff]
      %v266 = vld [vmem:[%s169 + $0x2b0] sm:$0xff]
      %v267 = vld [vmem:[%s169 + $0x2b8] sm:$0xf]
      %v268 = vld [vmem:[%s169 + $0x2bc] sm:$0xff]
      %v269 = vld [vmem:[%s169 + $0x2c4] sm:$0xff]
      %v270 = vld [vmem:[%s169 + $0x2cc] sm:$0xff]
      %v271 = vld [vmem:[%s169 + $0x2d4] sm:$0xff]
      %v272 = vld [vmem:[%s169 + $0x2dc] sm:$0xff]
      %v273 = vld [vmem:[%s169 + $0x2e4] sm:$0xff]
      %v274 = vld [vmem:[%s169 + $0x2ec] sm:$0xff]
      %v275 = vld [vmem:[%s169 + $0x2f4] sm:$0xff]
      %v276 = vld [vmem:[%s169 + $0x2fc] sm:$0xff]
      %v277 = vld [vmem:[%s169 + $0x304] sm:$0xff]
      %v278 = vld [vmem:[%s169 + $0x30c] sm:$0xff]
      %v279 = vld [vmem:[%s169 + $0x314] sm:$0xff]
      %v280 = vld [vmem:[%s169 + $0x31c] sm:$0xf]
      %v281 = vld [vmem:[%s1] sm:$0xf]
      %v282 = vld [vmem:[%s1 + $0x4] sm:$0xf]
      %v283 = vld [vmem:[%s1 + $0x8] sm:$0xf]
      %v284 = vld [vmem:[%s1 + $0xc] sm:$0xf]
      %v285 = vld [vmem:[%s1 + $0x10] sm:$0xf]
      %v286 = vld [vmem:[%s1 + $0x14] sm:$0xf]
      %v287 = vld [vmem:[%s1 + $0x18] sm:$0xf]
      %v288 = vld [vmem:[%s1 + $0x1c] sm:$0xf]
      %v289 = vld [vmem:[%s1 + $0x20] sm:$0xf]
      %v290 = vld [vmem:[%s1 + $0x24] sm:$0xf]
      %v291 = vld [vmem:[%s1 + $0x28] sm:$0xf]
      %v292 = vld [vmem:[%s1 + $0x2c] sm:$0xf]
      %v293 = vld [vmem:[%s1 + $0x30] sm:$0xf]
      %v294 = vld [vmem:[%s1 + $0x34] sm:$0xf]
      %v295 = vld [vmem:[%s1 + $0x38] sm:$0xf]
      %v296 = vld [vmem:[%s1 + $0x3c] sm:$0xf]
      %v297 = vld [vmem:[%s1 + $0x40] sm:$0xf]
      %v298 = vld [vmem:[%s1 + $0x44] sm:$0xf]
      %v299 = vld [vmem:[%s1 + $0x48] sm:$0xf]
      %v300 = vld [vmem:[%s1 + $0x4c] sm:$0xf]
      %v301 = vld [vmem:[%s1 + $0x50] sm:$0xf]
      %v302 = vld [vmem:[%s1 + $0x54] sm:$0xf]
      %v303 = vld [vmem:[%s1 + $0x58] sm:$0xf]
      %v304 = vld [vmem:[%s1 + $0x5c] sm:$0xf]
      %v305 = vld [vmem:[%s1 + $0x60] sm:$0xf]
      %v306 = vld [vmem:[%s1 + $0x64] sm:$0xf]
      %v307 = vld [vmem:[%s1 + $0x68] sm:$0xf]
      %v308 = vld [vmem:[%s1 + $0x6c] sm:$0xf]
      %v309 = vld [vmem:[%s1 + $0x70] sm:$0xf]
      %v310 = vld [vmem:[%s1 + $0x74] sm:$0xf]
      %v311 = vld [vmem:[%s1 + $0x78] sm:$0xf]
      %v312 = vld [vmem:[%s1 + $0x7c] sm:$0xf]
      %v313 = vld [vmem:[%s1 + $0x80] sm:$0xf]
      %v314 = vld [vmem:[%s1 + $0x84] sm:$0xf]
      %v315 = vld [vmem:[%s1 + $0x88] sm:$0xf]
      %v316 = vld [vmem:[%s1 + $0x8c] sm:$0xf]
      %v317 = vld [vmem:[%s1 + $0x90] sm:$0xf]
      %v318 = vld [vmem:[%s1 + $0x94] sm:$0xf]
      %v319 = vld [vmem:[%s1 + $0x98] sm:$0xf]
      %v320 = vld [vmem:[%s1 + $0x9c] sm:$0xf]
      %v321 = vld [vmem:[%s1 + $0xa0] sm:$0xf]
      %v322 = vld [vmem:[%s1 + $0xa4] sm:$0xf]
      %v323 = vld [vmem:[%s1 + $0xa8] sm:$0xf]
      %v324 = vld [vmem:[%s1 + $0xac] sm:$0xf]
      %v325 = vld [vmem:[%s1 + $0xb0] sm:$0xf]
      %v326 = vld [vmem:[%s1 + $0xb4] sm:$0xf]
      %v327 = vld [vmem:[%s1 + $0xb8] sm:$0xf]
      %v328 = vld [vmem:[%s1 + $0xbc] sm:$0xf]
      %v329 = vld [vmem:[%s1 + $0xc0] sm:$0xf]
      %v330 = vld [vmem:[%s1 + $0xc4] sm:$0xf]
      %v331 = vld [vmem:[%s1 + $0xc8] sm:$0xf]
      %v332 = vld [vmem:[%s1 + $0xcc] sm:$0xf]
      %v333 = vld [vmem:[%s1 + $0xd0] sm:$0xf]
      %v334 = vld [vmem:[%s1 + $0xd4] sm:$0xf]
      %v335 = vld [vmem:[%s1 + $0xd8] sm:$0xf]
      %v336 = vld [vmem:[%s1 + $0xdc] sm:$0xf]
      %v337 = vld [vmem:[%s1 + $0xe0] sm:$0xf]
      %v338 = vld [vmem:[%s1 + $0xe4] sm:$0xf]
      %v339 = vld [vmem:[%s1 + $0xe8] sm:$0xf]
      %v340 = vld [vmem:[%s1 + $0xec] sm:$0xf]
      %v341 = vld [vmem:[%s1 + $0xf0] sm:$0xf]
      %v342 = vld [vmem:[%s1 + $0xf4] sm:$0xf]
      %v343 = vld [vmem:[%s1 + $0xf8] sm:$0xf]
      %v344 = vld [vmem:[%s1 + $0xfc] sm:$0xf]
      %v345 = vld [vmem:[%s1 + $0x100] sm:$0xf]
      %v346 = vld [vmem:[%s1 + $0x104] sm:$0xf]
      %v347 = vld [vmem:[%s1 + $0x108] sm:$0xf]
      %v348 = vld [vmem:[%s1 + $0x10c] sm:$0xf]
      %v349 = vld [vmem:[%s1 + $0x110] sm:$0xf]
      %v350 = vld [vmem:[%s1 + $0x114] sm:$0xf]
      %v351 = vld [vmem:[%s1 + $0x118] sm:$0xf]
      %v352 = vld [vmem:[%s1 + $0x11c] sm:$0xf]
      %v353 = vld [vmem:[%s1 + $0x120] sm:$0xf]
      %v354 = vld [vmem:[%s1 + $0x124] sm:$0xf]
      %v355 = vld [vmem:[%s1 + $0x128] sm:$0xf]
      %v356 = vld [vmem:[%s1 + $0x12c] sm:$0xf]
      %v357 = vld [vmem:[%s1 + $0x130] sm:$0xf]
      %v358 = vld [vmem:[%s1 + $0x134] sm:$0xf]
      %v359 = vld [vmem:[%s1 + $0x138] sm:$0xf]
      %v360 = vld [vmem:[%s1 + $0x13c] sm:$0xf]
      %v361 = vld [vmem:[%s1 + $0x140] sm:$0xf]
      %v362 = vld [vmem:[%s1 + $0x144] sm:$0xf]
      %v363 = vld [vmem:[%s1 + $0x148] sm:$0xf]
      %v364 = vld [vmem:[%s1 + $0x14c] sm:$0xf]
      %v365 = vld [vmem:[%s1 + $0x150] sm:$0xf]
      %v366 = vld [vmem:[%s1 + $0x154] sm:$0xf]
      %v367 = vld [vmem:[%s1 + $0x158] sm:$0xf]
      %v368 = vld [vmem:[%s1 + $0x15c] sm:$0xf]
      %v369 = vld [vmem:[%s1 + $0x160] sm:$0xf]
      %v370 = vld [vmem:[%s1 + $0x164] sm:$0xf]
      %v371 = vld [vmem:[%s1 + $0x168] sm:$0xf]
      %v372 = vld [vmem:[%s1 + $0x16c] sm:$0xf]
      %v373 = vld [vmem:[%s1 + $0x170] sm:$0xf]
      %v374 = vld [vmem:[%s1 + $0x174] sm:$0xf]
      %v375 = vld [vmem:[%s1 + $0x178] sm:$0xf]
      %v376 = vld [vmem:[%s1 + $0x17c] sm:$0xf]
      %v377 = vld [vmem:[%s1 + $0x180] sm:$0xf]
      %v378 = vld [vmem:[%s1 + $0x184] sm:$0xf]
      %v379 = vld [vmem:[%s1 + $0x188] sm:$0xf]
      %v380 = vld [vmem:[%s1 + $0x18c] sm:$0xf]
      %v381 = vld [vmem:[%s1 + $0x190] sm:$0xf]
      %v382 = vld [vmem:[%s1 + $0x194] sm:$0xf]
      %v383 = vld [vmem:[%s1 + $0x198] sm:$0xf]
      %v384 = vld [vmem:[%s1 + $0x19c] sm:$0xf]
      %v385 = vld [vmem:[%s1 + $0x1a0] sm:$0xf]
      %v386 = vld [vmem:[%s1 + $0x1a4] sm:$0xf]
      %v387 = vld [vmem:[%s1 + $0x1a8] sm:$0xf]
      %v388 = vld [vmem:[%s1 + $0x1ac] sm:$0xf]
      %v389 = vld [vmem:[%s1 + $0x1b0] sm:$0xf]
      %v390 = vld [vmem:[%s1 + $0x1b4] sm:$0xf]
      %v391 = vld [vmem:[%s1 + $0x1b8] sm:$0xf]
      %v392 = vld [vmem:[%s1 + $0x1bc] sm:$0xf]
      %v393 = vld [vmem:[%s1 + $0x1c0] sm:$0xf]
      %v394 = vld [vmem:[%s1 + $0x1c4] sm:$0xf]
      %v395 = vld [vmem:[%s1 + $0x1c8] sm:$0xf]
      %v396 = vld [vmem:[%s1 + $0x1cc] sm:$0xf]
      %v397 = vld [vmem:[%s1 + $0x1d0] sm:$0xf]
      %v398 = vld [vmem:[%s1 + $0x1d4] sm:$0xf]
      %v399 = vld [vmem:[%s1 + $0x1d8] sm:$0xf]
      %v400 = vld [vmem:[%s1 + $0x1dc] sm:$0xf]
      %v401 = vld [vmem:[%s1 + $0x1e0] sm:$0xf]
      %v402 = vld [vmem:[%s1 + $0x1e4] sm:$0xf]
      %v403 = vld [vmem:[%s1 + $0x1e8] sm:$0xf]
      %v404 = vld [vmem:[%s1 + $0x1ec] sm:$0xf]
      %v405 = vld [vmem:[%s1 + $0x1f0] sm:$0xf]
      %v406 = vld [vmem:[%s1 + $0x1f4] sm:$0xf]
      %v407 = vld [vmem:[%s1 + $0x1f8] sm:$0xf]
      %v408 = vld [vmem:[%s1 + $0x1fc] sm:$0xf]
      %v409 = vld [vmem:[%s1 + $0x200] sm:$0xf]
      %v410 = vld [vmem:[%s1 + $0x204] sm:$0xf]
      %v411 = vld [vmem:[%s1 + $0x208] sm:$0xf]
      %v412 = vld [vmem:[%s1 + $0x20c] sm:$0xf]
      %v413 = vld [vmem:[%s1 + $0x210] sm:$0xf]
      %v414 = vld [vmem:[%s1 + $0x214] sm:$0xf]
      %v415 = vld [vmem:[%s1 + $0x218] sm:$0xf]
      %v416 = vld [vmem:[%s1 + $0x21c] sm:$0xf]
      %v417 = vld [vmem:[%s1 + $0x220] sm:$0xf]
      %v418 = vld [vmem:[%s1 + $0x224] sm:$0xf]
      %v419 = vld [vmem:[%s1 + $0x228] sm:$0xf]
      %v420 = vld [vmem:[%s1 + $0x22c] sm:$0xf]
      %v421 = vld [vmem:[%s1 + $0x230] sm:$0xf]
      %v422 = vld [vmem:[%s1 + $0x234] sm:$0xf]
      %v423 = vld [vmem:[%s1 + $0x238] sm:$0xf]
      %v424 = vld [vmem:[%s1 + $0x23c] sm:$0xf]
      %v425 = vld [vmem:[%s1 + $0x240] sm:$0xf]
      %v426 = vld [vmem:[%s1 + $0x244] sm:$0xf]
      %v427 = vld [vmem:[%s1 + $0x248] sm:$0xf]
      %v428 = vld [vmem:[%s1 + $0x24c] sm:$0xf]
      %v429 = vld [vmem:[%s1 + $0x250] sm:$0xf]
      %v430 = vld [vmem:[%s1 + $0x254] sm:$0xf]
      %v431 = vld [vmem:[%s1 + $0x258] sm:$0xf]
      %v432 = vld [vmem:[%s1 + $0x25c] sm:$0xf]
      %v433 = vld [vmem:[%s1 + $0x260] sm:$0xf]
      %v434 = vld [vmem:[%s1 + $0x264] sm:$0xf]
      %v435 = vld [vmem:[%s1 + $0x268] sm:$0xf]
      %v436 = vld [vmem:[%s1 + $0x26c] sm:$0xf]
      %v437 = vld [vmem:[%s1 + $0x270] sm:$0xf]
      %v438 = vld [vmem:[%s1 + $0x274] sm:$0xf]
      %v439 = vld [vmem:[%s1 + $0x278] sm:$0xf]
      %v440 = vld [vmem:[%s1 + $0x27c] sm:$0xf]
      %v441 = vld [vmem:[%s1 + $0x280] sm:$0xf]
      %v442 = vld [vmem:[%s1 + $0x284] sm:$0xf]
      %v443 = vld [vmem:[%s1 + $0x288] sm:$0xf]
      %v444 = vld [vmem:[%s1 + $0x28c] sm:$0xf]
      %v445 = vld [vmem:[%s1 + $0x290] sm:$0xf]
      %v446 = vld [vmem:[%s1 + $0x294] sm:$0xf]
      %v447 = vld [vmem:[%s1 + $0x298] sm:$0xf]
      %v448 = vld [vmem:[%s1 + $0x29c] sm:$0xf]
      %v449 = vld [vmem:[%s1 + $0x2a0] sm:$0xf]
      %v450 = vld [vmem:[%s1 + $0x2a4] sm:$0xf]
      %v451 = vld [vmem:[%s1 + $0x2a8] sm:$0xf]
      %v452 = vld [vmem:[%s1 + $0x2ac] sm:$0xf]
      %v453 = vld [vmem:[%s1 + $0x2b0] sm:$0xf]
      %v454 = vld [vmem:[%s1 + $0x2b4] sm:$0xf]
      %v455 = vld [vmem:[%s1 + $0x2b8] sm:$0xf]
      %v456 = vld [vmem:[%s1 + $0x2bc] sm:$0xf]
      %v457 = vld [vmem:[%s1 + $0x2c0] sm:$0xf]
      %v458 = vld [vmem:[%s1 + $0x2c4] sm:$0xf]
      %v459 = vld [vmem:[%s1 + $0x2c8] sm:$0xf]
      %v460 = vld [vmem:[%s1 + $0x2cc] sm:$0xf]
      %v461 = vld [vmem:[%s1 + $0x2d0] sm:$0xf]
      %v462 = vld [vmem:[%s1 + $0x2d4] sm:$0xf]
      %v463 = vld [vmem:[%s1 + $0x2d8] sm:$0xf]
      %v464 = vld [vmem:[%s1 + $0x2dc] sm:$0xf]
      %v465 = vld [vmem:[%s1 + $0x2e0] sm:$0xf]
      %v466 = vld [vmem:[%s1 + $0x2e4] sm:$0xf]
      %v467 = vld [vmem:[%s1 + $0x2e8] sm:$0xf]
      %v468 = vld [vmem:[%s1 + $0x2ec] sm:$0xf]
      %v469 = vld [vmem:[%s1 + $0x2f0] sm:$0xf]
      %v470 = vld [vmem:[%s1 + $0x2f4] sm:$0xf]
      %v471 = vld [vmem:[%s1 + $0x2f8] sm:$0xf]
      %v472 = vld [vmem:[%s1 + $0x2fc] sm:$0xf]
      %v473 = vld [vmem:[%s1 + $0x300] sm:$0xf]
      %v474 = vld [vmem:[%s1 + $0x304] sm:$0xf]
      %v475 = vld [vmem:[%s1 + $0x308] sm:$0xf]
      %v476 = vld [vmem:[%s1 + $0x30c] sm:$0xf]
      %v477 = vld [vmem:[%s1 + $0x310] sm:$0xf]
      %v478 = vld [vmem:[%s1 + $0x314] sm:$0xf]
      %v479 = vld [vmem:[%s1 + $0x318] sm:$0xf]
      %v480 = vld [vmem:[%s1 + $0x31c] sm:$0xf]
      %v481 = vld [vmem:[%s1 + $0x320] sm:$0xf]
      %v482 = vld [vmem:[%s1 + $0x324] sm:$0xf]
      %v483 = vld [vmem:[%s1 + $0x328] sm:$0xf]
      %v484 = vld [vmem:[%s1 + $0x32c] sm:$0xf]
      %v485 = vld [vmem:[%s1 + $0x330] sm:$0xf]
      %v486 = vld [vmem:[%s1 + $0x334] sm:$0xf]
      %v487 = vld [vmem:[%s1 + $0x338] sm:$0xf]
      %v488 = vld [vmem:[%s1 + $0x33c] sm:$0xf]
      %v489 = vld [vmem:[%s1 + $0x340] sm:$0xf]
      %v490 = vld [vmem:[%s1 + $0x344] sm:$0xf]
      %v491 = vld [vmem:[%s1 + $0x348] sm:$0xf]
      %v492 = vld [vmem:[%s1 + $0x34c] sm:$0xf]
      %v493 = vld [vmem:[%s1 + $0x350] sm:$0xf]
      %v494 = vld [vmem:[%s1 + $0x354] sm:$0xf]
      %v495 = vld [vmem:[%s1 + $0x358] sm:$0xf]
      %v496 = vld [vmem:[%s1 + $0x35c] sm:$0xf]
      %v497 = vld [vmem:[%s1 + $0x360] sm:$0xf]
      %v498 = vld [vmem:[%s1 + $0x364] sm:$0xf]
      %v499 = vld [vmem:[%s1 + $0x368] sm:$0xf]
      %v500 = vld [vmem:[%s1 + $0x36c] sm:$0xf]
      %v501 = vld [vmem:[%s1 + $0x370] sm:$0xf]
      %v502 = vld [vmem:[%s1 + $0x374] sm:$0xf]
      %v503 = vld [vmem:[%s1 + $0x378] sm:$0xf]
      %v504 = vld [vmem:[%s1 + $0x37c] sm:$0xf]
      %v505 = vld [vmem:[%s1 + $0x380] sm:$0xf]
      %v506 = vld [vmem:[%s1 + $0x384] sm:$0xf]
      %v507 = vld [vmem:[%s1 + $0x388] sm:$0xf]
      %v508 = vld [vmem:[%s1 + $0x38c] sm:$0xf]
      %v509 = vld [vmem:[%s1 + $0x390] sm:$0xf]
      %v510 = vld [vmem:[%s1 + $0x394] sm:$0xf]
      %v511 = vld [vmem:[%s1 + $0x398] sm:$0xf]
      %v512 = vld [vmem:[%s1 + $0x39c] sm:$0xf]
      %v513 = vld [vmem:[%s1 + $0x3a0] sm:$0xf]
      %v514 = vld [vmem:[%s1 + $0x3a4] sm:$0xf]
      %v515 = vld [vmem:[%s1 + $0x3a8] sm:$0xf]
      %v516 = vld [vmem:[%s1 + $0x3ac] sm:$0xf]
      %v517 = vld [vmem:[%s1 + $0x3b0] sm:$0xf]
      %v518 = vld [vmem:[%s1 + $0x3b4] sm:$0xf]
      %v519 = vld [vmem:[%s1 + $0x3b8] sm:$0xf]
      %v520 = vld [vmem:[%s1 + $0x3bc] sm:$0xf]
      %v521 = vld [vmem:[%s1 + $0x3c0] sm:$0xf]
      %v522 = vld [vmem:[%s1 + $0x3c4] sm:$0xf]
      %v523 = vld [vmem:[%s1 + $0x3c8] sm:$0xf]
      %v524 = vld [vmem:[%s1 + $0x3cc] sm:$0xf]
      %v525 = vld [vmem:[%s1 + $0x3d0] sm:$0xf]
      %v526 = vld [vmem:[%s1 + $0x3d4] sm:$0xf]
      %v527 = vld [vmem:[%s1 + $0x3d8] sm:$0xf]
      %v528 = vld [vmem:[%s1 + $0x3dc] sm:$0xf]
      %v529 = vld [vmem:[%s1 + $0x3e0] sm:$0xf]
      %v530 = vld [vmem:[%s1 + $0x3e4] sm:$0xf]
      %v531 = vld [vmem:[%s1 + $0x3e8] sm:$0xf]
      %v532 = vld [vmem:[%s1 + $0x3ec] sm:$0xf]
      %v533 = vld [vmem:[%s1 + $0x3f0] sm:$0xf]
      %v534 = vld [vmem:[%s1 + $0x3f4] sm:$0xf]
      %v535 = vld [vmem:[%s1 + $0x3f8] sm:$0xf]
      %v536 = vld [vmem:[%s1 + $0x3fc] sm:$0xf]
      %v537 = vld [vmem:[%s1 + $0x400] sm:$0xf]
      %v538 = vld [vmem:[%s1 + $0x404] sm:$0xf]
      %v539 = vld [vmem:[%s1 + $0x408] sm:$0xf]
      %v540 = vld [vmem:[%s1 + $0x40c] sm:$0xf]
      %v541 = vld [vmem:[%s1 + $0x410] sm:$0xf]
      %v542 = vld [vmem:[%s1 + $0x414] sm:$0xf]
      %v543 = vld [vmem:[%s1 + $0x418] sm:$0xf]
      %v544 = vld [vmem:[%s1 + $0x41c] sm:$0xf]
      %v545 = vld [vmem:[%s1 + $0x420] sm:$0xf]
      %v546 = vld [vmem:[%s1 + $0x424] sm:$0xf]
      %v547 = vld [vmem:[%s1 + $0x428] sm:$0xf]
      %v548 = vld [vmem:[%s1 + $0x42c] sm:$0xf]
      %v549 = vld [vmem:[%s1 + $0x430] sm:$0xf]
      %v550 = vld [vmem:[%s1 + $0x434] sm:$0xf]
      %v551 = vld [vmem:[%s1 + $0x438] sm:$0xf]
      %v552 = vld [vmem:[%s1 + $0x43c] sm:$0xf]
      %v553 = vld [vmem:[%s1 + $0x440] sm:$0xf]
      %v554 = vld [vmem:[%s1 + $0x444] sm:$0xf]
      %v555 = vld [vmem:[%s1 + $0x448] sm:$0xf]
      %v556 = vld [vmem:[%s1 + $0x44c] sm:$0xf]
      %v557 = vld [vmem:[%s1 + $0x450] sm:$0xf]
      %v558 = vld [vmem:[%s1 + $0x454] sm:$0xf]
      %v559 = vld [vmem:[%s1 + $0x458] sm:$0xf]
      %v560 = vld [vmem:[%s1 + $0x45c] sm:$0xf]
      %v561 = vld [vmem:[%s1 + $0x460] sm:$0xf]
      %v562 = vld [vmem:[%s1 + $0x464] sm:$0xf]
      %v563 = vld [vmem:[%s1 + $0x468] sm:$0xf]
      %v564 = vld [vmem:[%s1 + $0x46c] sm:$0xf]
      %v565 = vld [vmem:[%s1 + $0x470] sm:$0xf]
      %v566 = vld [vmem:[%s1 + $0x474] sm:$0xf]
      %v567 = vld [vmem:[%s1 + $0x478] sm:$0xf]
      %v568 = vld [vmem:[%s1 + $0x47c] sm:$0xf]
      %v569 = vld [vmem:[%s1 + $0x480] sm:$0xf]
      %v570 = vld [vmem:[%s1 + $0x484] sm:$0xf]
      %v571 = vld [vmem:[%s1 + $0x488] sm:$0xf]
      %v572 = vld [vmem:[%s1 + $0x48c] sm:$0xf]
      %v573 = vld [vmem:[%s1 + $0x490] sm:$0xf]
      %v574 = vld [vmem:[%s1 + $0x494] sm:$0xf]
      %v575 = vld [vmem:[%s1 + $0x498] sm:$0xf]
      %v576 = vld [vmem:[%s1 + $0x49c] sm:$0xf]
      %v577 = vld [vmem:[%s1 + $0x4a0] sm:$0xf]
      %v578 = vld [vmem:[%s1 + $0x4a4] sm:$0xf]
      %v579 = vld [vmem:[%s1 + $0x4a8] sm:$0xf]
      %v580 = vld [vmem:[%s1 + $0x4ac] sm:$0xf]
      %v581 = vld [vmem:[%s1 + $0x4b0] sm:$0xf]
      %v582 = vld [vmem:[%s1 + $0x4b4] sm:$0xf]
      %v583 = vld [vmem:[%s1 + $0x4b8] sm:$0xf]
      %v584 = vld [vmem:[%s1 + $0x4bc] sm:$0xf]
      %v585 = vld [vmem:[%s1 + $0x4c0] sm:$0xf]
      %v586 = vld [vmem:[%s1 + $0x4c4] sm:$0xf]
      %v587 = vld [vmem:[%s1 + $0x4c8] sm:$0xf]
      %v588 = vld [vmem:[%s1 + $0x4cc] sm:$0xf]
      %v589 = vld [vmem:[%s1 + $0x4d0] sm:$0xf]
      %v590 = vld [vmem:[%s1 + $0x4d4] sm:$0xf]
      %v591 = vld [vmem:[%s1 + $0x4d8] sm:$0xf]
      %v592 = vld [vmem:[%s1 + $0x4dc] sm:$0xf]
      %v593 = vld [vmem:[%s1 + $0x4e0] sm:$0xf]
      %v594 = vld [vmem:[%s1 + $0x4e4] sm:$0xf]
      %v595 = vld [vmem:[%s1 + $0x4e8] sm:$0xf]
      %v596 = vld [vmem:[%s1 + $0x4ec] sm:$0xf]
      %v597 = vld [vmem:[%s1 + $0x4f0] sm:$0xf]
      %v598 = vld [vmem:[%s1 + $0x4f4] sm:$0xf]
      %v599 = vld [vmem:[%s1 + $0x4f8] sm:$0xf]
      %v600 = vld [vmem:[%s1 + $0x4fc] sm:$0xf]
      %v601 = vld [vmem:[%s1 + $0x500] sm:$0xf]
      %v602 = vld [vmem:[%s1 + $0x504] sm:$0xf]
      %v603 = vld [vmem:[%s1 + $0x508] sm:$0xf]
      %v604 = vld [vmem:[%s1 + $0x50c] sm:$0xf]
      %v605 = vld [vmem:[%s1 + $0x510] sm:$0xf]
      %v606 = vld [vmem:[%s1 + $0x514] sm:$0xf]
      %v607 = vld [vmem:[%s1 + $0x518] sm:$0xf]
      %v608 = vld [vmem:[%s1 + $0x51c] sm:$0xf]
      %v609 = vld [vmem:[%s1 + $0x520] sm:$0xf]
      %v610 = vld [vmem:[%s1 + $0x524] sm:$0xf]
      %v611 = vld [vmem:[%s1 + $0x528] sm:$0xf]
      %v612 = vld [vmem:[%s1 + $0x52c] sm:$0xf]
      %v613 = vld [vmem:[%s1 + $0x530] sm:$0xf]
      %v614 = vld [vmem:[%s1 + $0x534] sm:$0xf]
      %v615 = vld [vmem:[%s1 + $0x538] sm:$0xf]
      %v616 = vld [vmem:[%s1 + $0x53c] sm:$0xf]
      %v617 = vld [vmem:[%s1 + $0x540] sm:$0xf]
      %v618 = vld [vmem:[%s1 + $0x544] sm:$0xf]
      %v619 = vld [vmem:[%s1 + $0x548] sm:$0xf]
      %v620 = vld [vmem:[%s1 + $0x54c] sm:$0xf]
      %v621 = vld [vmem:[%s1 + $0x550] sm:$0xf]
      %v622 = vld [vmem:[%s1 + $0x554] sm:$0xf]
      %v623 = vld [vmem:[%s1 + $0x558] sm:$0xf]
      %v624 = vld [vmem:[%s1 + $0x55c] sm:$0xf]
      %v625 = vld [vmem:[%s1 + $0x560] sm:$0xf]
      %v626 = vld [vmem:[%s1 + $0x564] sm:$0xf]
      %v627 = vld [vmem:[%s1 + $0x568] sm:$0xf]
      %v628 = vld [vmem:[%s1 + $0x56c] sm:$0xf]
      %v629 = vld [vmem:[%s1 + $0x570] sm:$0xf]
      %v630 = vld [vmem:[%s1 + $0x574] sm:$0xf]
      %v631 = vld [vmem:[%s1 + $0x578] sm:$0xf]
      %v632 = vld [vmem:[%s1 + $0x57c] sm:$0xf]
      %v633 = vld [vmem:[%s1 + $0x580] sm:$0xf]
      %v634 = vld [vmem:[%s1 + $0x584] sm:$0xf]
      %v635 = vld [vmem:[%s1 + $0x588] sm:$0xf]
      %v636 = vld [vmem:[%s1 + $0x58c] sm:$0xf]
      %v637 = vld [vmem:[%s1 + $0x590] sm:$0xf]
      %v638 = vld [vmem:[%s1 + $0x594] sm:$0xf]
      %v639 = vld [vmem:[%s1 + $0x598] sm:$0xf]
      %v640 = vld [vmem:[%s1 + $0x59c] sm:$0xf]
      %v641 = vld [vmem:[%s1 + $0x5a0] sm:$0xf]
      %v642 = vld [vmem:[%s1 + $0x5a4] sm:$0xf]
      %v643 = vld [vmem:[%s1 + $0x5a8] sm:$0xf]
      %v644 = vld [vmem:[%s1 + $0x5ac] sm:$0xf]
      %v645 = vld [vmem:[%s1 + $0x5b0] sm:$0xf]
      %v646 = vld [vmem:[%s1 + $0x5b4] sm:$0xf]
      %v647 = vld [vmem:[%s1 + $0x5b8] sm:$0xf]
      %v648 = vld [vmem:[%s1 + $0x5bc] sm:$0xf]
      %v649 = vld [vmem:[%s1 + $0x5c0] sm:$0xf]
      %v650 = vld [vmem:[%s1 + $0x5c4] sm:$0xf]
      %v651 = vld [vmem:[%s1 + $0x5c8] sm:$0xf]
      %v652 = vld [vmem:[%s1 + $0x5cc] sm:$0xf]
      %v653 = vld [vmem:[%s1 + $0x5d0] sm:$0xf]
      %v654 = vld [vmem:[%s1 + $0x5d4] sm:$0xf]
      %v655 = vld [vmem:[%s1 + $0x5d8] sm:$0xf]
      %v656 = vld [vmem:[%s1 + $0x5dc] sm:$0xf]
      %v657 = vld [vmem:[%s1 + $0x5e0] sm:$0xf]
      %v658 = vld [vmem:[%s1 + $0x5e4] sm:$0xf]
      %v659 = vld [vmem:[%s1 + $0x5e8] sm:$0xf]
      %v660 = vld [vmem:[%s1 + $0x5ec] sm:$0xf]
      %v661 = vld [vmem:[%s1 + $0x5f0] sm:$0xf]
      %v662 = vld [vmem:[%s1 + $0x5f4] sm:$0xf]
      %v663 = vld [vmem:[%s1 + $0x5f8] sm:$0xf]
      %v664 = vld [vmem:[%s1 + $0x5fc] sm:$0xf]
      %v665 = vld [vmem:[%s1 + $0x600] sm:$0xf]
      %v666 = vld [vmem:[%s1 + $0x604] sm:$0xf]
      %v667 = vld [vmem:[%s1 + $0x608] sm:$0xf]
      %v668 = vld [vmem:[%s1 + $0x60c] sm:$0xf]
      %v669 = vld [vmem:[%s1 + $0x610] sm:$0xf]
      %v670 = vld [vmem:[%s1 + $0x614] sm:$0xf]
      %v671 = vld [vmem:[%s1 + $0x618] sm:$0xf]
      %v672 = vld [vmem:[%s1 + $0x61c] sm:$0xf]
      %v673 = vld [vmem:[%s1 + $0x620] sm:$0xf]
      %v674 = vld [vmem:[%s1 + $0x624] sm:$0xf]
      %v675 = vld [vmem:[%s1 + $0x628] sm:$0xf]
      %v676 = vld [vmem:[%s1 + $0x62c] sm:$0xf]
      %v677 = vld [vmem:[%s1 + $0x630] sm:$0xf]
      %v678 = vld [vmem:[%s1 + $0x634] sm:$0xf]
      %v679 = vld [vmem:[%s1 + $0x638] sm:$0xf]
      %v680 = vld [vmem:[%s1 + $0x63c] sm:$0xf]
      %v681 = vld [vmem:[%s2] sm:$0x1]
      %v683 = vlaneseq
      %v684 = vshrl.u32 %v683, 7
      %v685 = vsub.s32 0, %v684
      %v686 = vrot.slane %v681, %v685
      %v792 = vunpack.c.l.b16 %v177
      %v793 = vunpack.c.h.b16 %v177
      %v794 = vunpack.c.l.b16 %v178
      %v795 = vunpack.c.h.b16 %v178
      %v796 = vunpack.c.l.b16 %v179
      %v797 = vunpack.c.h.b16 %v179
      %v798 = vunpack.c.l.b16 %v180
      %v799 = vunpack.c.h.b16 %v180
      %v800 = vunpack.c.l.b16 %v181
      %v801 = vunpack.c.h.b16 %v181
      %v802 = vunpack.c.l.b16 %v182
      %v803 = vunpack.c.h.b16 %v182
      %v804 = vunpack.c.l.b16 %v183
      %v805 = vunpack.c.h.b16 %v183
      %v806 = vunpack.c.l.b16 %v184
      %v807 = vunpack.c.h.b16 %v184
      %v808 = vunpack.c.l.b16 %v185
      %v809 = vunpack.c.h.b16 %v185
      %v810 = vunpack.c.l.b16 %v186
      %v811 = vunpack.c.h.b16 %v186
      %v812 = vunpack.c.l.b16 %v187
      %v813 = vunpack.c.h.b16 %v187
      %v814 = vunpack.c.l.b16 %v188
      %v815 = vunpack.c.h.b16 %v188
      %v816 = vunpack.c.l.b16 %v189
      %v817 = vunpack.c.l.b16 %v190
      %v818 = vunpack.c.h.b16 %v190
      %v819 = vunpack.c.l.b16 %v191
      %v820 = vunpack.c.h.b16 %v191
      %v821 = vunpack.c.l.b16 %v192
      %v822 = vunpack.c.h.b16 %v192
      %v823 = vunpack.c.l.b16 %v193
      %v824 = vunpack.c.h.b16 %v193
      %v825 = vunpack.c.l.b16 %v194
      %v826 = vunpack.c.h.b16 %v194
      %v827 = vunpack.c.l.b16 %v195
      %v828 = vunpack.c.h.b16 %v195
      %v829 = vunpack.c.l.b16 %v196
      %v830 = vunpack.c.h.b16 %v196
      %v831 = vunpack.c.l.b16 %v197
      %v832 = vunpack.c.h.b16 %v197
      %v833 = vunpack.c.l.b16 %v198
      %v834 = vunpack.c.h.b16 %v198
      %v835 = vunpack.c.l.b16 %v199
      %v836 = vunpack.c.h.b16 %v199
      %v837 = vunpack.c.l.b16 %v200
      %v838 = vunpack.c.h.b16 %v200
      %v839 = vunpack.c.l.b16 %v201
      %v840 = vunpack.c.h.b16 %v201
      %v841 = vunpack.c.l.b16 %v202
      %v842 = vunpack.c.l.b16 %v203
      %v843 = vunpack.c.h.b16 %v203
      %v844 = vunpack.c.l.b16 %v204
      %v845 = vunpack.c.h.b16 %v204
      %v846 = vunpack.c.l.b16 %v205
      %v847 = vunpack.c.h.b16 %v205
      %v848 = vunpack.c.l.b16 %v206
      %v849 = vunpack.c.h.b16 %v206
      %v850 = vunpack.c.l.b16 %v207
      %v851 = vunpack.c.h.b16 %v207
      %v852 = vunpack.c.l.b16 %v208
      %v853 = vunpack.c.h.b16 %v208
      %v854 = vunpack.c.l.b16 %v209
      %v855 = vunpack.c.h.b16 %v209
      %v856 = vunpack.c.l.b16 %v210
      %v857 = vunpack.c.h.b16 %v210
      %v858 = vunpack.c.l.b16 %v211
      %v859 = vunpack.c.h.b16 %v211
      %v860 = vunpack.c.l.b16 %v212
      %v861 = vunpack.c.h.b16 %v212
      %v862 = vunpack.c.l.b16 %v213
      %v863 = vunpack.c.h.b16 %v213
      %v864 = vunpack.c.l.b16 %v214
      %v865 = vunpack.c.h.b16 %v214
      %v866 = vunpack.c.l.b16 %v215
      %v867 = vunpack.c.l.b16 %v216
      %v868 = vunpack.c.h.b16 %v216
      %v869 = vunpack.c.l.b16 %v217
      %v870 = vunpack.c.h.b16 %v217
      %v871 = vunpack.c.l.b16 %v218
      %v872 = vunpack.c.h.b16 %v218
      %v873 = vunpack.c.l.b16 %v219
      %v874 = vunpack.c.h.b16 %v219
      %v875 = vunpack.c.l.b16 %v220
      %v876 = vunpack.c.h.b16 %v220
      %v877 = vunpack.c.l.b16 %v221
      %v878 = vunpack.c.h.b16 %v221
      %v879 = vunpack.c.l.b16 %v222
      %v880 = vunpack.c.h.b16 %v222
      %v881 = vunpack.c.l.b16 %v223
      %v882 = vunpack.c.h.b16 %v223
      %v883 = vunpack.c.l.b16 %v224
      %v884 = vunpack.c.h.b16 %v224
      %v885 = vunpack.c.l.b16 %v225
      %v886 = vunpack.c.h.b16 %v225
      %v887 = vunpack.c.l.b16 %v226
      %v888 = vunpack.c.h.b16 %v226
      %v889 = vunpack.c.l.b16 %v227
      %v890 = vunpack.c.h.b16 %v227
      %v891 = vunpack.c.l.b16 %v228
      %v892 = vunpack.c.l.b16 %v229
      %v893 = vunpack.c.h.b16 %v229
      %v894 = vunpack.c.l.b16 %v230
      %v895 = vunpack.c.h.b16 %v230
      %v896 = vunpack.c.l.b16 %v231
      %v897 = vunpack.c.h.b16 %v231
      %v898 = vunpack.c.l.b16 %v232
      %v899 = vunpack.c.h.b16 %v232
      %v900 = vunpack.c.l.b16 %v233
      %v901 = vunpack.c.h.b16 %v233
      %v902 = vunpack.c.l.b16 %v234
      %v903 = vunpack.c.h.b16 %v234
      %v904 = vunpack.c.l.b16 %v235
      %v905 = vunpack.c.h.b16 %v235
      %v906 = vunpack.c.l.b16 %v236
      %v907 = vunpack.c.h.b16 %v236
      %v908 = vunpack.c.l.b16 %v237
      %v909 = vunpack.c.h.b16 %v237
      %v910 = vunpack.c.l.b16 %v238
      %v911 = vunpack.c.h.b16 %v238
      %v912 = vunpack.c.l.b16 %v239
      %v913 = vunpack.c.h.b16 %v239
      %v914 = vunpack.c.l.b16 %v240
      %v915 = vunpack.c.h.b16 %v240
      %v916 = vunpack.c.l.b16 %v241
      %v917 = vunpack.c.l.b16 %v242
      %v918 = vunpack.c.h.b16 %v242
      %v919 = vunpack.c.l.b16 %v243
      %v920 = vunpack.c.h.b16 %v243
      %v921 = vunpack.c.l.b16 %v244
      %v922 = vunpack.c.h.b16 %v244
      %v923 = vunpack.c.l.b16 %v245
      %v924 = vunpack.c.h.b16 %v245
      %v925 = vunpack.c.l.b16 %v246
      %v926 = vunpack.c.h.b16 %v246
      %v927 = vunpack.c.l.b16 %v247
      %v928 = vunpack.c.h.b16 %v247
      %v929 = vunpack.c.l.b16 %v248
      %v930 = vunpack.c.h.b16 %v248
      %v931 = vunpack.c.l.b16 %v249
      %v932 = vunpack.c.h.b16 %v249
      %v933 = vunpack.c.l.b16 %v250
      %v934 = vunpack.c.h.b16 %v250
      %v935 = vunpack.c.l.b16 %v251
      %v936 = vunpack.c.h.b16 %v251
      %v937 = vunpack.c.l.b16 %v252
      %v938 = vunpack.c.h.b16 %v252
      %v939 = vunpack.c.l.b16 %v253
      %v940 = vunpack.c.h.b16 %v253
      %v941 = vunpack.c.l.b16 %v254
      %v942 = vunpack.c.l.b16 %v255
      %v943 = vunpack.c.h.b16 %v255
      %v944 = vunpack.c.l.b16 %v256
      %v945 = vunpack.c.h.b16 %v256
      %v946 = vunpack.c.l.b16 %v257
      %v947 = vunpack.c.h.b16 %v257
      %v948 = vunpack.c.l.b16 %v258
      %v949 = vunpack.c.h.b16 %v258
      %v950 = vunpack.c.l.b16 %v259
      %v951 = vunpack.c.h.b16 %v259
      %v952 = vunpack.c.l.b16 %v260
      %v953 = vunpack.c.h.b16 %v260
      %v954 = vunpack.c.l.b16 %v261
      %v955 = vunpack.c.h.b16 %v261
      %v956 = vunpack.c.l.b16 %v262
      %v957 = vunpack.c.h.b16 %v262
      %v958 = vunpack.c.l.b16 %v263
      %v959 = vunpack.c.h.b16 %v263
      %v960 = vunpack.c.l.b16 %v264
      %v961 = vunpack.c.h.b16 %v264
      %v962 = vunpack.c.l.b16 %v265
      %v963 = vunpack.c.h.b16 %v265
      %v964 = vunpack.c.l.b16 %v266
      %v965 = vunpack.c.h.b16 %v266
      %v966 = vunpack.c.l.b16 %v267
      %v967 = vunpack.c.l.b16 %v268
      %v968 = vunpack.c.h.b16 %v268
      %v969 = vunpack.c.l.b16 %v269
      %v970 = vunpack.c.h.b16 %v269
      %v971 = vunpack.c.l.b16 %v270
      %v972 = vunpack.c.h.b16 %v270
      %v973 = vunpack.c.l.b16 %v271
      %v974 = vunpack.c.h.b16 %v271
      %v975 = vunpack.c.l.b16 %v272
      %v976 = vunpack.c.h.b16 %v272
      %v977 = vunpack.c.l.b16 %v273
      %v978 = vunpack.c.h.b16 %v273
      %v979 = vunpack.c.l.b16 %v274
      %v980 = vunpack.c.h.b16 %v274
      %v981 = vunpack.c.l.b16 %v275
      %v982 = vunpack.c.h.b16 %v275
      %v983 = vunpack.c.l.b16 %v276
      %v984 = vunpack.c.h.b16 %v276
      %v985 = vunpack.c.l.b16 %v277
      %v986 = vunpack.c.h.b16 %v277
      %v987 = vunpack.c.l.b16 %v278
      %v988 = vunpack.c.h.b16 %v278
      %v989 = vunpack.c.l.b16 %v279
      %v990 = vunpack.c.h.b16 %v279
      %v991 = vunpack.c.l.b16 %v280
      %v992 = vpack.c.b16 %v817, %v792
      %v993 = vpack.c.b16 %v818, %v793
      %v994 = vpack.c.b16 %v819, %v794
      %v995 = vpack.c.b16 %v820, %v795
      %v996 = vpack.c.b16 %v821, %v796
      %v997 = vpack.c.b16 %v822, %v797
      %v998 = vpack.c.b16 %v823, %v798
      %v999 = vpack.c.b16 %v824, %v799
      %v1000 = vpack.c.b16 %v825, %v800
      %v1001 = vpack.c.b16 %v826, %v801
      %v1002 = vpack.c.b16 %v827, %v802
      %v1003 = vpack.c.b16 %v828, %v803
      %v1004 = vpack.c.b16 %v829, %v804
      %v1005 = vpack.c.b16 %v830, %v805
      %v1006 = vpack.c.b16 %v831, %v806
      %v1007 = vpack.c.b16 %v832, %v807
      %v1008 = vpack.c.b16 %v833, %v808
      %v1009 = vpack.c.b16 %v834, %v809
      %v1010 = vpack.c.b16 %v835, %v810
      %v1011 = vpack.c.b16 %v836, %v811
      %v1012 = vpack.c.b16 %v837, %v812
      %v1013 = vpack.c.b16 %v838, %v813
      %v1014 = vpack.c.b16 %v839, %v814
      %v1015 = vpack.c.b16 %v840, %v815
      %v1016 = vpack.c.b16 %v841, %v816
      %v1017 = vpack.c.b16 %v867, %v842
      %v1018 = vpack.c.b16 %v868, %v843
      %v1019 = vpack.c.b16 %v869, %v844
      %v1020 = vpack.c.b16 %v870, %v845
      %v1021 = vpack.c.b16 %v871, %v846
      %v1022 = vpack.c.b16 %v872, %v847
      %v1023 = vpack.c.b16 %v873, %v848
      %v1024 = vpack.c.b16 %v874, %v849
      %v1025 = vpack.c.b16 %v875, %v850
      %v1026 = vpack.c.b16 %v876, %v851
      %v1027 = vpack.c.b16 %v877, %v852
      %v1028 = vpack.c.b16 %v878, %v853
      %v1029 = vpack.c.b16 %v879, %v854
      %v1030 = vpack.c.b16 %v880, %v855
      %v1031 = vpack.c.b16 %v881, %v856
      %v1032 = vpack.c.b16 %v882, %v857
      %v1033 = vpack.c.b16 %v883, %v858
      %v1034 = vpack.c.b16 %v884, %v859
      %v1035 = vpack.c.b16 %v885, %v860
      %v1036 = vpack.c.b16 %v886, %v861
      %v1037 = vpack.c.b16 %v887, %v862
      %v1038 = vpack.c.b16 %v888, %v863
      %v1039 = vpack.c.b16 %v889, %v864
      %v1040 = vpack.c.b16 %v890, %v865
      %v1041 = vpack.c.b16 %v891, %v866
      %v1042 = vpack.c.b16 %v917, %v892
      %v1043 = vpack.c.b16 %v918, %v893
      %v1044 = vpack.c.b16 %v919, %v894
      %v1045 = vpack.c.b16 %v920, %v895
      %v1046 = vpack.c.b16 %v921, %v896
      %v1047 = vpack.c.b16 %v922, %v897
      %v1048 = vpack.c.b16 %v923, %v898
      %v1049 = vpack.c.b16 %v924, %v899
      %v1050 = vpack.c.b16 %v925, %v900
      %v1051 = vpack.c.b16 %v926, %v901
      %v1052 = vpack.c.b16 %v927, %v902
      %v1053 = vpack.c.b16 %v928, %v903
      %v1054 = vpack.c.b16 %v929, %v904
      %v1055 = vpack.c.b16 %v930, %v905
      %v1056 = vpack.c.b16 %v931, %v906
      %v1057 = vpack.c.b16 %v932, %v907
      %v1058 = vpack.c.b16 %v933, %v908
      %v1059 = vpack.c.b16 %v934, %v909
      %v1060 = vpack.c.b16 %v935, %v910
      %v1061 = vpack.c.b16 %v936, %v911
      %v1062 = vpack.c.b16 %v937, %v912
      %v1063 = vpack.c.b16 %v938, %v913
      %v1064 = vpack.c.b16 %v939, %v914
      %v1065 = vpack.c.b16 %v940, %v915
      %v1066 = vpack.c.b16 %v941, %v916
      %v1067 = vpack.c.b16 %v967, %v942
      %v1068 = vpack.c.b16 %v968, %v943
      %v1069 = vpack.c.b16 %v969, %v944
      %v1070 = vpack.c.b16 %v970, %v945
      %v1071 = vpack.c.b16 %v971, %v946
      %v1072 = vpack.c.b16 %v972, %v947
      %v1073 = vpack.c.b16 %v973, %v948
      %v1074 = vpack.c.b16 %v974, %v949
      %v1075 = vpack.c.b16 %v975, %v950
      %v1076 = vpack.c.b16 %v976, %v951
      %v1077 = vpack.c.b16 %v977, %v952
      %v1078 = vpack.c.b16 %v978, %v953
      %v1079 = vpack.c.b16 %v979, %v954
      %v1080 = vpack.c.b16 %v980, %v955
      %v1081 = vpack.c.b16 %v981, %v956
      %v1082 = vpack.c.b16 %v982, %v957
      %v1083 = vpack.c.b16 %v983, %v958
      %v1084 = vpack.c.b16 %v984, %v959
      %v1085 = vpack.c.b16 %v985, %v960
      %v1086 = vpack.c.b16 %v986, %v961
      %v1087 = vpack.c.b16 %v987, %v962
      %v1088 = vpack.c.b16 %v988, %v963
      %v1089 = vpack.c.b16 %v989, %v964
      %v1090 = vpack.c.b16 %v990, %v965
      %v1091 = vpack.c.b16 %v991, %v966
      %v1592 = vunpack.c.l.b16 %v281
      %v1593 = vunpack.c.l.b16 %v282
      %v1594 = vunpack.c.l.b16 %v283
      %v1595 = vunpack.c.l.b16 %v284
      %v1596 = vunpack.c.l.b16 %v285
      %v1597 = vunpack.c.l.b16 %v286
      %v1598 = vunpack.c.l.b16 %v287
      %v1599 = vunpack.c.l.b16 %v288
      %v1600 = vunpack.c.l.b16 %v289
      %v1601 = vunpack.c.l.b16 %v290
      %v1602 = vunpack.c.l.b16 %v291
      %v1603 = vunpack.c.l.b16 %v292
      %v1604 = vunpack.c.l.b16 %v293
      %v1605 = vunpack.c.l.b16 %v294
      %v1606 = vunpack.c.l.b16 %v295
      %v1607 = vunpack.c.l.b16 %v296
      %v1608 = vunpack.c.l.b16 %v297
      %v1609 = vunpack.c.l.b16 %v298
      %v1610 = vunpack.c.l.b16 %v299
      %v1611 = vunpack.c.l.b16 %v300
      %v1612 = vunpack.c.l.b16 %v301
      %v1613 = vunpack.c.l.b16 %v302
      %v1614 = vunpack.c.l.b16 %v303
      %v1615 = vunpack.c.l.b16 %v304
      %v1616 = vunpack.c.l.b16 %v305
      %v1617 = vunpack.c.l.b16 %v306
      %v1618 = vunpack.c.l.b16 %v307
      %v1619 = vunpack.c.l.b16 %v308
      %v1620 = vunpack.c.l.b16 %v309
      %v1621 = vunpack.c.l.b16 %v310
      %v1622 = vunpack.c.l.b16 %v311
      %v1623 = vunpack.c.l.b16 %v312
      %v1624 = vunpack.c.l.b16 %v313
      %v1625 = vunpack.c.l.b16 %v314
      %v1626 = vunpack.c.l.b16 %v315
      %v1627 = vunpack.c.l.b16 %v316
      %v1628 = vunpack.c.l.b16 %v317
      %v1629 = vunpack.c.l.b16 %v318
      %v1630 = vunpack.c.l.b16 %v319
      %v1631 = vunpack.c.l.b16 %v320
      %v1632 = vunpack.c.l.b16 %v321
      %v1633 = vunpack.c.l.b16 %v322
      %v1634 = vunpack.c.l.b16 %v323
      %v1635 = vunpack.c.l.b16 %v324
      %v1636 = vunpack.c.l.b16 %v325
      %v1637 = vunpack.c.l.b16 %v326
      %v1638 = vunpack.c.l.b16 %v327
      %v1639 = vunpack.c.l.b16 %v328
      %v1640 = vunpack.c.l.b16 %v329
      %v1641 = vunpack.c.l.b16 %v330
      %v1642 = vunpack.c.l.b16 %v331
      %v1643 = vunpack.c.l.b16 %v332
      %v1644 = vunpack.c.l.b16 %v333
      %v1645 = vunpack.c.l.b16 %v334
      %v1646 = vunpack.c.l.b16 %v335
      %v1647 = vunpack.c.l.b16 %v336
      %v1648 = vunpack.c.l.b16 %v337
      %v1649 = vunpack.c.l.b16 %v338
      %v1650 = vunpack.c.l.b16 %v339
      %v1651 = vunpack.c.l.b16 %v340
      %v1652 = vunpack.c.l.b16 %v341
      %v1653 = vunpack.c.l.b16 %v342
      %v1654 = vunpack.c.l.b16 %v343
      %v1655 = vunpack.c.l.b16 %v344
      %v1656 = vunpack.c.l.b16 %v345
      %v1657 = vunpack.c.l.b16 %v346
      %v1658 = vunpack.c.l.b16 %v347
      %v1659 = vunpack.c.l.b16 %v348
      %v1660 = vunpack.c.l.b16 %v349
      %v1661 = vunpack.c.l.b16 %v350
      %v1662 = vunpack.c.l.b16 %v351
      %v1663 = vunpack.c.l.b16 %v352
      %v1664 = vunpack.c.l.b16 %v353
      %v1665 = vunpack.c.l.b16 %v354
      %v1666 = vunpack.c.l.b16 %v355
      %v1667 = vunpack.c.l.b16 %v356
      %v1668 = vunpack.c.l.b16 %v357
      %v1669 = vunpack.c.l.b16 %v358
      %v1670 = vunpack.c.l.b16 %v359
      %v1671 = vunpack.c.l.b16 %v360
      %v1672 = vunpack.c.l.b16 %v361
      %v1673 = vunpack.c.l.b16 %v362
      %v1674 = vunpack.c.l.b16 %v363
      %v1675 = vunpack.c.l.b16 %v364
      %v1676 = vunpack.c.l.b16 %v365
      %v1677 = vunpack.c.l.b16 %v366
      %v1678 = vunpack.c.l.b16 %v367
      %v1679 = vunpack.c.l.b16 %v368
      %v1680 = vunpack.c.l.b16 %v369
      %v1681 = vunpack.c.l.b16 %v370
      %v1682 = vunpack.c.l.b16 %v371
      %v1683 = vunpack.c.l.b16 %v372
      %v1684 = vunpack.c.l.b16 %v373
      %v1685 = vunpack.c.l.b16 %v374
      %v1686 = vunpack.c.l.b16 %v375
      %v1687 = vunpack.c.l.b16 %v376
      %v1688 = vunpack.c.l.b16 %v377
      %v1689 = vunpack.c.l.b16 %v378
      %v1690 = vunpack.c.l.b16 %v379
      %v1691 = vunpack.c.l.b16 %v380
      %v1692 = vunpack.c.l.b16 %v381
      %v1693 = vunpack.c.l.b16 %v382
      %v1694 = vunpack.c.l.b16 %v383
      %v1695 = vunpack.c.l.b16 %v384
      %v1696 = vunpack.c.l.b16 %v385
      %v1697 = vunpack.c.l.b16 %v386
      %v1698 = vunpack.c.l.b16 %v387
      %v1699 = vunpack.c.l.b16 %v388
      %v1700 = vunpack.c.l.b16 %v389
      %v1701 = vunpack.c.l.b16 %v390
      %v1702 = vunpack.c.l.b16 %v391
      %v1703 = vunpack.c.l.b16 %v392
      %v1704 = vunpack.c.l.b16 %v393
      %v1705 = vunpack.c.l.b16 %v394
      %v1706 = vunpack.c.l.b16 %v395
      %v1707 = vunpack.c.l.b16 %v396
      %v1708 = vunpack.c.l.b16 %v397
      %v1709 = vunpack.c.l.b16 %v398
      %v1710 = vunpack.c.l.b16 %v399
      %v1711 = vunpack.c.l.b16 %v400
      %v1712 = vunpack.c.l.b16 %v401
      %v1713 = vunpack.c.l.b16 %v402
      %v1714 = vunpack.c.l.b16 %v403
      %v1715 = vunpack.c.l.b16 %v404
      %v1716 = vunpack.c.l.b16 %v405
      %v1717 = vunpack.c.l.b16 %v406
      %v1718 = vunpack.c.l.b16 %v407
      %v1719 = vunpack.c.l.b16 %v408
      %v1720 = vunpack.c.l.b16 %v409
      %v1721 = vunpack.c.l.b16 %v410
      %v1722 = vunpack.c.l.b16 %v411
      %v1723 = vunpack.c.l.b16 %v412
      %v1724 = vunpack.c.l.b16 %v413
      %v1725 = vunpack.c.l.b16 %v414
      %v1726 = vunpack.c.l.b16 %v415
      %v1727 = vunpack.c.l.b16 %v416
      %v1728 = vunpack.c.l.b16 %v417
      %v1729 = vunpack.c.l.b16 %v418
      %v1730 = vunpack.c.l.b16 %v419
      %v1731 = vunpack.c.l.b16 %v420
      %v1732 = vunpack.c.l.b16 %v421
      %v1733 = vunpack.c.l.b16 %v422
      %v1734 = vunpack.c.l.b16 %v423
      %v1735 = vunpack.c.l.b16 %v424
      %v1736 = vunpack.c.l.b16 %v425
      %v1737 = vunpack.c.l.b16 %v426
      %v1738 = vunpack.c.l.b16 %v427
      %v1739 = vunpack.c.l.b16 %v428
      %v1740 = vunpack.c.l.b16 %v429
      %v1741 = vunpack.c.l.b16 %v430
      %v1742 = vunpack.c.l.b16 %v431
      %v1743 = vunpack.c.l.b16 %v432
      %v1744 = vunpack.c.l.b16 %v433
      %v1745 = vunpack.c.l.b16 %v434
      %v1746 = vunpack.c.l.b16 %v435
      %v1747 = vunpack.c.l.b16 %v436
      %v1748 = vunpack.c.l.b16 %v437
      %v1749 = vunpack.c.l.b16 %v438
      %v1750 = vunpack.c.l.b16 %v439
      %v1751 = vunpack.c.l.b16 %v440
      %v1752 = vunpack.c.l.b16 %v441
      %v1753 = vunpack.c.l.b16 %v442
      %v1754 = vunpack.c.l.b16 %v443
      %v1755 = vunpack.c.l.b16 %v444
      %v1756 = vunpack.c.l.b16 %v445
      %v1757 = vunpack.c.l.b16 %v446
      %v1758 = vunpack.c.l.b16 %v447
      %v1759 = vunpack.c.l.b16 %v448
      %v1760 = vunpack.c.l.b16 %v449
      %v1761 = vunpack.c.l.b16 %v450
      %v1762 = vunpack.c.l.b16 %v451
      %v1763 = vunpack.c.l.b16 %v452
      %v1764 = vunpack.c.l.b16 %v453
      %v1765 = vunpack.c.l.b16 %v454
      %v1766 = vunpack.c.l.b16 %v455
      %v1767 = vunpack.c.l.b16 %v456
      %v1768 = vunpack.c.l.b16 %v457
      %v1769 = vunpack.c.l.b16 %v458
      %v1770 = vunpack.c.l.b16 %v459
      %v1771 = vunpack.c.l.b16 %v460
      %v1772 = vunpack.c.l.b16 %v461
      %v1773 = vunpack.c.l.b16 %v462
      %v1774 = vunpack.c.l.b16 %v463
      %v1775 = vunpack.c.l.b16 %v464
      %v1776 = vunpack.c.l.b16 %v465
      %v1777 = vunpack.c.l.b16 %v466
      %v1778 = vunpack.c.l.b16 %v467
      %v1779 = vunpack.c.l.b16 %v468
      %v1780 = vunpack.c.l.b16 %v469
      %v1781 = vunpack.c.l.b16 %v470
      %v1782 = vunpack.c.l.b16 %v471
      %v1783 = vunpack.c.l.b16 %v472
      %v1784 = vunpack.c.l.b16 %v473
      %v1785 = vunpack.c.l.b16 %v474
      %v1786 = vunpack.c.l.b16 %v475
      %v1787 = vunpack.c.l.b16 %v476
      %v1788 = vunpack.c.l.b16 %v477
      %v1789 = vunpack.c.l.b16 %v478
      %v1790 = vunpack.c.l.b16 %v479
      %v1791 = vunpack.c.l.b16 %v480
      %v1792 = vunpack.c.l.b16 %v481
      %v1793 = vunpack.c.l.b16 %v482
      %v1794 = vunpack.c.l.b16 %v483
      %v1795 = vunpack.c.l.b16 %v484
      %v1796 = vunpack.c.l.b16 %v485
      %v1797 = vunpack.c.l.b16 %v486
      %v1798 = vunpack.c.l.b16 %v487
      %v1799 = vunpack.c.l.b16 %v488
      %v1800 = vunpack.c.l.b16 %v489
      %v1801 = vunpack.c.l.b16 %v490
      %v1802 = vunpack.c.l.b16 %v491
      %v1803 = vunpack.c.l.b16 %v492
      %v1804 = vunpack.c.l.b16 %v493
      %v1805 = vunpack.c.l.b16 %v494
      %v1806 = vunpack.c.l.b16 %v495
      %v1807 = vunpack.c.l.b16 %v496
      %v1808 = vunpack.c.l.b16 %v497
      %v1809 = vunpack.c.l.b16 %v498
      %v1810 = vunpack.c.l.b16 %v499
      %v1811 = vunpack.c.l.b16 %v500
      %v1812 = vunpack.c.l.b16 %v501
      %v1813 = vunpack.c.l.b16 %v502
      %v1814 = vunpack.c.l.b16 %v503
      %v1815 = vunpack.c.l.b16 %v504
      %v1816 = vunpack.c.l.b16 %v505
      %v1817 = vunpack.c.l.b16 %v506
      %v1818 = vunpack.c.l.b16 %v507
      %v1819 = vunpack.c.l.b16 %v508
      %v1820 = vunpack.c.l.b16 %v509
      %v1821 = vunpack.c.l.b16 %v510
      %v1822 = vunpack.c.l.b16 %v511
      %v1823 = vunpack.c.l.b16 %v512
      %v1824 = vunpack.c.l.b16 %v513
      %v1825 = vunpack.c.l.b16 %v514
      %v1826 = vunpack.c.l.b16 %v515
      %v1827 = vunpack.c.l.b16 %v516
      %v1828 = vunpack.c.l.b16 %v517
      %v1829 = vunpack.c.l.b16 %v518
      %v1830 = vunpack.c.l.b16 %v519
      %v1831 = vunpack.c.l.b16 %v520
      %v1832 = vunpack.c.l.b16 %v521
      %v1833 = vunpack.c.l.b16 %v522
      %v1834 = vunpack.c.l.b16 %v523
      %v1835 = vunpack.c.l.b16 %v524
      %v1836 = vunpack.c.l.b16 %v525
      %v1837 = vunpack.c.l.b16 %v526
      %v1838 = vunpack.c.l.b16 %v527
      %v1839 = vunpack.c.l.b16 %v528
      %v1840 = vunpack.c.l.b16 %v529
      %v1841 = vunpack.c.l.b16 %v530
      %v1842 = vunpack.c.l.b16 %v531
      %v1843 = vunpack.c.l.b16 %v532
      %v1844 = vunpack.c.l.b16 %v533
      %v1845 = vunpack.c.l.b16 %v534
      %v1846 = vunpack.c.l.b16 %v535
      %v1847 = vunpack.c.l.b16 %v536
      %v1848 = vunpack.c.l.b16 %v537
      %v1849 = vunpack.c.l.b16 %v538
      %v1850 = vunpack.c.l.b16 %v539
      %v1851 = vunpack.c.l.b16 %v540
      %v1852 = vunpack.c.l.b16 %v541
      %v1853 = vunpack.c.l.b16 %v542
      %v1854 = vunpack.c.l.b16 %v543
      %v1855 = vunpack.c.l.b16 %v544
      %v1856 = vunpack.c.l.b16 %v545
      %v1857 = vunpack.c.l.b16 %v546
      %v1858 = vunpack.c.l.b16 %v547
      %v1859 = vunpack.c.l.b16 %v548
      %v1860 = vunpack.c.l.b16 %v549
      %v1861 = vunpack.c.l.b16 %v550
      %v1862 = vunpack.c.l.b16 %v551
      %v1863 = vunpack.c.l.b16 %v552
      %v1864 = vunpack.c.l.b16 %v553
      %v1865 = vunpack.c.l.b16 %v554
      %v1866 = vunpack.c.l.b16 %v555
      %v1867 = vunpack.c.l.b16 %v556
      %v1868 = vunpack.c.l.b16 %v557
      %v1869 = vunpack.c.l.b16 %v558
      %v1870 = vunpack.c.l.b16 %v559
      %v1871 = vunpack.c.l.b16 %v560
      %v1872 = vunpack.c.l.b16 %v561
      %v1873 = vunpack.c.l.b16 %v562
      %v1874 = vunpack.c.l.b16 %v563
      %v1875 = vunpack.c.l.b16 %v564
      %v1876 = vunpack.c.l.b16 %v565
      %v1877 = vunpack.c.l.b16 %v566
      %v1878 = vunpack.c.l.b16 %v567
      %v1879 = vunpack.c.l.b16 %v568
      %v1880 = vunpack.c.l.b16 %v569
      %v1881 = vunpack.c.l.b16 %v570
      %v1882 = vunpack.c.l.b16 %v571
      %v1883 = vunpack.c.l.b16 %v572
      %v1884 = vunpack.c.l.b16 %v573
      %v1885 = vunpack.c.l.b16 %v574
      %v1886 = vunpack.c.l.b16 %v575
      %v1887 = vunpack.c.l.b16 %v576
      %v1888 = vunpack.c.l.b16 %v577
      %v1889 = vunpack.c.l.b16 %v578
      %v1890 = vunpack.c.l.b16 %v579
      %v1891 = vunpack.c.l.b16 %v580
      %v1892 = vunpack.c.l.b16 %v581
      %v1893 = vunpack.c.l.b16 %v582
      %v1894 = vunpack.c.l.b16 %v583
      %v1895 = vunpack.c.l.b16 %v584
      %v1896 = vunpack.c.l.b16 %v585
      %v1897 = vunpack.c.l.b16 %v586
      %v1898 = vunpack.c.l.b16 %v587
      %v1899 = vunpack.c.l.b16 %v588
      %v1900 = vunpack.c.l.b16 %v589
      %v1901 = vunpack.c.l.b16 %v590
      %v1902 = vunpack.c.l.b16 %v591
      %v1903 = vunpack.c.l.b16 %v592
      %v1904 = vunpack.c.l.b16 %v593
      %v1905 = vunpack.c.l.b16 %v594
      %v1906 = vunpack.c.l.b16 %v595
      %v1907 = vunpack.c.l.b16 %v596
      %v1908 = vunpack.c.l.b16 %v597
      %v1909 = vunpack.c.l.b16 %v598
      %v1910 = vunpack.c.l.b16 %v599
      %v1911 = vunpack.c.l.b16 %v600
      %v1912 = vunpack.c.l.b16 %v601
      %v1913 = vunpack.c.l.b16 %v602
      %v1914 = vunpack.c.l.b16 %v603
      %v1915 = vunpack.c.l.b16 %v604
      %v1916 = vunpack.c.l.b16 %v605
      %v1917 = vunpack.c.l.b16 %v606
      %v1918 = vunpack.c.l.b16 %v607
      %v1919 = vunpack.c.l.b16 %v608
      %v1920 = vunpack.c.l.b16 %v609
      %v1921 = vunpack.c.l.b16 %v610
      %v1922 = vunpack.c.l.b16 %v611
      %v1923 = vunpack.c.l.b16 %v612
      %v1924 = vunpack.c.l.b16 %v613
      %v1925 = vunpack.c.l.b16 %v614
      %v1926 = vunpack.c.l.b16 %v615
      %v1927 = vunpack.c.l.b16 %v616
      %v1928 = vunpack.c.l.b16 %v617
      %v1929 = vunpack.c.l.b16 %v618
      %v1930 = vunpack.c.l.b16 %v619
      %v1931 = vunpack.c.l.b16 %v620
      %v1932 = vunpack.c.l.b16 %v621
      %v1933 = vunpack.c.l.b16 %v622
      %v1934 = vunpack.c.l.b16 %v623
      %v1935 = vunpack.c.l.b16 %v624
      %v1936 = vunpack.c.l.b16 %v625
      %v1937 = vunpack.c.l.b16 %v626
      %v1938 = vunpack.c.l.b16 %v627
      %v1939 = vunpack.c.l.b16 %v628
      %v1940 = vunpack.c.l.b16 %v629
      %v1941 = vunpack.c.l.b16 %v630
      %v1942 = vunpack.c.l.b16 %v631
      %v1943 = vunpack.c.l.b16 %v632
      %v1944 = vunpack.c.l.b16 %v633
      %v1945 = vunpack.c.l.b16 %v634
      %v1946 = vunpack.c.l.b16 %v635
      %v1947 = vunpack.c.l.b16 %v636
      %v1948 = vunpack.c.l.b16 %v637
      %v1949 = vunpack.c.l.b16 %v638
      %v1950 = vunpack.c.l.b16 %v639
      %v1951 = vunpack.c.l.b16 %v640
      %v1952 = vunpack.c.l.b16 %v641
      %v1953 = vunpack.c.l.b16 %v642
      %v1954 = vunpack.c.l.b16 %v643
      %v1955 = vunpack.c.l.b16 %v644
      %v1956 = vunpack.c.l.b16 %v645
      %v1957 = vunpack.c.l.b16 %v646
      %v1958 = vunpack.c.l.b16 %v647
      %v1959 = vunpack.c.l.b16 %v648
      %v1960 = vunpack.c.l.b16 %v649
      %v1961 = vunpack.c.l.b16 %v650
      %v1962 = vunpack.c.l.b16 %v651
      %v1963 = vunpack.c.l.b16 %v652
      %v1964 = vunpack.c.l.b16 %v653
      %v1965 = vunpack.c.l.b16 %v654
      %v1966 = vunpack.c.l.b16 %v655
      %v1967 = vunpack.c.l.b16 %v656
      %v1968 = vunpack.c.l.b16 %v657
      %v1969 = vunpack.c.l.b16 %v658
      %v1970 = vunpack.c.l.b16 %v659
      %v1971 = vunpack.c.l.b16 %v660
      %v1972 = vunpack.c.l.b16 %v661
      %v1973 = vunpack.c.l.b16 %v662
      %v1974 = vunpack.c.l.b16 %v663
      %v1975 = vunpack.c.l.b16 %v664
      %v1976 = vunpack.c.l.b16 %v665
      %v1977 = vunpack.c.l.b16 %v666
      %v1978 = vunpack.c.l.b16 %v667
      %v1979 = vunpack.c.l.b16 %v668
      %v1980 = vunpack.c.l.b16 %v669
      %v1981 = vunpack.c.l.b16 %v670
      %v1982 = vunpack.c.l.b16 %v671
      %v1983 = vunpack.c.l.b16 %v672
      %v1984 = vunpack.c.l.b16 %v673
      %v1985 = vunpack.c.l.b16 %v674
      %v1986 = vunpack.c.l.b16 %v675
      %v1987 = vunpack.c.l.b16 %v676
      %v1988 = vunpack.c.l.b16 %v677
      %v1989 = vunpack.c.l.b16 %v678
      %v1990 = vunpack.c.l.b16 %v679
      %v1991 = vunpack.c.l.b16 %v680
      %v1992 = vpack.c.b16 %v1593, %v1592
      %v1993 = vpack.c.b16 %v1595, %v1594
      %v1994 = vpack.c.b16 %v1597, %v1596
      %v1995 = vpack.c.b16 %v1599, %v1598
      %v1996 = vpack.c.b16 %v1601, %v1600
      %v1997 = vpack.c.b16 %v1603, %v1602
      %v1998 = vpack.c.b16 %v1605, %v1604
      %v1999 = vpack.c.b16 %v1607, %v1606
      %v2000 = vpack.c.b16 %v1609, %v1608
      %v2001 = vpack.c.b16 %v1611, %v1610
      %v2002 = vpack.c.b16 %v1613, %v1612
      %v2003 = vpack.c.b16 %v1615, %v1614
      %v2004 = vpack.c.b16 %v1617, %v1616
      %v2005 = vpack.c.b16 %v1619, %v1618
      %v2006 = vpack.c.b16 %v1621, %v1620
      %v2007 = vpack.c.b16 %v1623, %v1622
      %v2008 = vpack.c.b16 %v1625, %v1624
      %v2009 = vpack.c.b16 %v1627, %v1626
      %v2010 = vpack.c.b16 %v1629, %v1628
      %v2011 = vpack.c.b16 %v1631, %v1630
      %v2012 = vpack.c.b16 %v1633, %v1632
      %v2013 = vpack.c.b16 %v1635, %v1634
      %v2014 = vpack.c.b16 %v1637, %v1636
      %v2015 = vpack.c.b16 %v1639, %v1638
      %v2016 = vpack.c.b16 %v1641, %v1640
      %v2017 = vpack.c.b16 %v1643, %v1642
      %v2018 = vpack.c.b16 %v1645, %v1644
      %v2019 = vpack.c.b16 %v1647, %v1646
      %v2020 = vpack.c.b16 %v1649, %v1648
      %v2021 = vpack.c.b16 %v1651, %v1650
      %v2022 = vpack.c.b16 %v1653, %v1652
      %v2023 = vpack.c.b16 %v1655, %v1654
      %v2024 = vpack.c.b16 %v1657, %v1656
      %v2025 = vpack.c.b16 %v1659, %v1658
      %v2026 = vpack.c.b16 %v1661, %v1660
      %v2027 = vpack.c.b16 %v1663, %v1662
      %v2028 = vpack.c.b16 %v1665, %v1664
      %v2029 = vpack.c.b16 %v1667, %v1666
      %v2030 = vpack.c.b16 %v1669, %v1668
      %v2031 = vpack.c.b16 %v1671, %v1670
      %v2032 = vpack.c.b16 %v1673, %v1672
      %v2033 = vpack.c.b16 %v1675, %v1674
      %v2034 = vpack.c.b16 %v1677, %v1676
      %v2035 = vpack.c.b16 %v1679, %v1678
      %v2036 = vpack.c.b16 %v1681, %v1680
      %v2037 = vpack.c.b16 %v1683, %v1682
      %v2038 = vpack.c.b16 %v1685, %v1684
      %v2039 = vpack.c.b16 %v1687, %v1686
      %v2040 = vpack.c.b16 %v1689, %v1688
      %v2041 = vpack.c.b16 %v1691, %v1690
      %v2042 = vpack.c.b16 %v1693, %v1692
      %v2043 = vpack.c.b16 %v1695, %v1694
      %v2044 = vpack.c.b16 %v1697, %v1696
      %v2045 = vpack.c.b16 %v1699, %v1698
      %v2046 = vpack.c.b16 %v1701, %v1700
      %v2047 = vpack.c.b16 %v1703, %v1702
      %v2048 = vpack.c.b16 %v1705, %v1704
      %v2049 = vpack.c.b16 %v1707, %v1706
      %v2050 = vpack.c.b16 %v1709, %v1708
      %v2051 = vpack.c.b16 %v1711, %v1710
      %v2052 = vpack.c.b16 %v1713, %v1712
      %v2053 = vpack.c.b16 %v1715, %v1714
      %v2054 = vpack.c.b16 %v1717, %v1716
      %v2055 = vpack.c.b16 %v1719, %v1718
      %v2056 = vpack.c.b16 %v1721, %v1720
      %v2057 = vpack.c.b16 %v1723, %v1722
      %v2058 = vpack.c.b16 %v1725, %v1724
      %v2059 = vpack.c.b16 %v1727, %v1726
      %v2060 = vpack.c.b16 %v1729, %v1728
      %v2061 = vpack.c.b16 %v1731, %v1730
      %v2062 = vpack.c.b16 %v1733, %v1732
      %v2063 = vpack.c.b16 %v1735, %v1734
      %v2064 = vpack.c.b16 %v1737, %v1736
      %v2065 = vpack.c.b16 %v1739, %v1738
      %v2066 = vpack.c.b16 %v1741, %v1740
      %v2067 = vpack.c.b16 %v1743, %v1742
      %v2068 = vpack.c.b16 %v1745, %v1744
      %v2069 = vpack.c.b16 %v1747, %v1746
      %v2070 = vpack.c.b16 %v1749, %v1748
      %v2071 = vpack.c.b16 %v1751, %v1750
      %v2072 = vpack.c.b16 %v1753, %v1752
      %v2073 = vpack.c.b16 %v1755, %v1754
      %v2074 = vpack.c.b16 %v1757, %v1756
      %v2075 = vpack.c.b16 %v1759, %v1758
      %v2076 = vpack.c.b16 %v1761, %v1760
      %v2077 = vpack.c.b16 %v1763, %v1762
      %v2078 = vpack.c.b16 %v1765, %v1764
      %v2079 = vpack.c.b16 %v1767, %v1766
      %v2080 = vpack.c.b16 %v1769, %v1768
      %v2081 = vpack.c.b16 %v1771, %v1770
      %v2082 = vpack.c.b16 %v1773, %v1772
      %v2083 = vpack.c.b16 %v1775, %v1774
      %v2084 = vpack.c.b16 %v1777, %v1776
      %v2085 = vpack.c.b16 %v1779, %v1778
      %v2086 = vpack.c.b16 %v1781, %v1780
      %v2087 = vpack.c.b16 %v1783, %v1782
      %v2088 = vpack.c.b16 %v1785, %v1784
      %v2089 = vpack.c.b16 %v1787, %v1786
      %v2090 = vpack.c.b16 %v1789, %v1788
      %v2091 = vpack.c.b16 %v1791, %v1790
      %v2092 = vpack.c.b16 %v1793, %v1792
      %v2093 = vpack.c.b16 %v1795, %v1794
      %v2094 = vpack.c.b16 %v1797, %v1796
      %v2095 = vpack.c.b16 %v1799, %v1798
      %v2096 = vpack.c.b16 %v1801, %v1800
      %v2097 = vpack.c.b16 %v1803, %v1802
      %v2098 = vpack.c.b16 %v1805, %v1804
      %v2099 = vpack.c.b16 %v1807, %v1806
      %v2100 = vpack.c.b16 %v1809, %v1808
      %v2101 = vpack.c.b16 %v1811, %v1810
      %v2102 = vpack.c.b16 %v1813, %v1812
      %v2103 = vpack.c.b16 %v1815, %v1814
      %v2104 = vpack.c.b16 %v1817, %v1816
      %v2105 = vpack.c.b16 %v1819, %v1818
      %v2106 = vpack.c.b16 %v1821, %v1820
      %v2107 = vpack.c.b16 %v1823, %v1822
      %v2108 = vpack.c.b16 %v1825, %v1824
      %v2109 = vpack.c.b16 %v1827, %v1826
      %v2110 = vpack.c.b16 %v1829, %v1828
      %v2111 = vpack.c.b16 %v1831, %v1830
      %v2112 = vpack.c.b16 %v1833, %v1832
      %v2113 = vpack.c.b16 %v1835, %v1834
      %v2114 = vpack.c.b16 %v1837, %v1836
      %v2115 = vpack.c.b16 %v1839, %v1838
      %v2116 = vpack.c.b16 %v1841, %v1840
      %v2117 = vpack.c.b16 %v1843, %v1842
      %v2118 = vpack.c.b16 %v1845, %v1844
      %v2119 = vpack.c.b16 %v1847, %v1846
      %v2120 = vpack.c.b16 %v1849, %v1848
      %v2121 = vpack.c.b16 %v1851, %v1850
      %v2122 = vpack.c.b16 %v1853, %v1852
      %v2123 = vpack.c.b16 %v1855, %v1854
      %v2124 = vpack.c.b16 %v1857, %v1856
      %v2125 = vpack.c.b16 %v1859, %v1858
      %v2126 = vpack.c.b16 %v1861, %v1860
      %v2127 = vpack.c.b16 %v1863, %v1862
      %v2128 = vpack.c.b16 %v1865, %v1864
      %v2129 = vpack.c.b16 %v1867, %v1866
      %v2130 = vpack.c.b16 %v1869, %v1868
      %v2131 = vpack.c.b16 %v1871, %v1870
      %v2132 = vpack.c.b16 %v1873, %v1872
      %v2133 = vpack.c.b16 %v1875, %v1874
      %v2134 = vpack.c.b16 %v1877, %v1876
      %v2135 = vpack.c.b16 %v1879, %v1878
      %v2136 = vpack.c.b16 %v1881, %v1880
      %v2137 = vpack.c.b16 %v1883, %v1882
      %v2138 = vpack.c.b16 %v1885, %v1884
      %v2139 = vpack.c.b16 %v1887, %v1886
      %v2140 = vpack.c.b16 %v1889, %v1888
      %v2141 = vpack.c.b16 %v1891, %v1890
      %v2142 = vpack.c.b16 %v1893, %v1892
      %v2143 = vpack.c.b16 %v1895, %v1894
      %v2144 = vpack.c.b16 %v1897, %v1896
      %v2145 = vpack.c.b16 %v1899, %v1898
      %v2146 = vpack.c.b16 %v1901, %v1900
      %v2147 = vpack.c.b16 %v1903, %v1902
      %v2148 = vpack.c.b16 %v1905, %v1904
      %v2149 = vpack.c.b16 %v1907, %v1906
      %v2150 = vpack.c.b16 %v1909, %v1908
      %v2151 = vpack.c.b16 %v1911, %v1910
      %v2152 = vpack.c.b16 %v1913, %v1912
      %v2153 = vpack.c.b16 %v1915, %v1914
      %v2154 = vpack.c.b16 %v1917, %v1916
      %v2155 = vpack.c.b16 %v1919, %v1918
      %v2156 = vpack.c.b16 %v1921, %v1920
      %v2157 = vpack.c.b16 %v1923, %v1922
      %v2158 = vpack.c.b16 %v1925, %v1924
      %v2159 = vpack.c.b16 %v1927, %v1926
      %v2160 = vpack.c.b16 %v1929, %v1928
      %v2161 = vpack.c.b16 %v1931, %v1930
      %v2162 = vpack.c.b16 %v1933, %v1932
      %v2163 = vpack.c.b16 %v1935, %v1934
      %v2164 = vpack.c.b16 %v1937, %v1936
      %v2165 = vpack.c.b16 %v1939, %v1938
      %v2166 = vpack.c.b16 %v1941, %v1940
      %v2167 = vpack.c.b16 %v1943, %v1942
      %v2168 = vpack.c.b16 %v1945, %v1944
      %v2169 = vpack.c.b16 %v1947, %v1946
      %v2170 = vpack.c.b16 %v1949, %v1948
      %v2171 = vpack.c.b16 %v1951, %v1950
      %v2172 = vpack.c.b16 %v1953, %v1952
      %v2173 = vpack.c.b16 %v1955, %v1954
      %v2174 = vpack.c.b16 %v1957, %v1956
      %v2175 = vpack.c.b16 %v1959, %v1958
      %v2176 = vpack.c.b16 %v1961, %v1960
      %v2177 = vpack.c.b16 %v1963, %v1962
      %v2178 = vpack.c.b16 %v1965, %v1964
      %v2179 = vpack.c.b16 %v1967, %v1966
      %v2180 = vpack.c.b16 %v1969, %v1968
      %v2181 = vpack.c.b16 %v1971, %v1970
      %v2182 = vpack.c.b16 %v1973, %v1972
      %v2183 = vpack.c.b16 %v1975, %v1974
      %v2184 = vpack.c.b16 %v1977, %v1976
      %v2185 = vpack.c.b16 %v1979, %v1978
      %v2186 = vpack.c.b16 %v1981, %v1980
      %v2187 = vpack.c.b16 %v1983, %v1982
      %v2188 = vpack.c.b16 %v1985, %v1984
      %v2189 = vpack.c.b16 %v1987, %v1986
      %v2190 = vpack.c.b16 %v1989, %v1988
      %v2191 = vpack.c.b16 %v1991, %v1990
      %2392 = vmatprep.subr.bf16.mxu0 0
      %2393 = vmatpush1.bf16.msra.mxu0 %v1992
      %2394 = vmatprep.subr.bf16.mxu0 0
      %2395 = vmatpush1.bf16.msra.mxu0 %v1993
      %2396 = vmatprep.subr.bf16.mxu0 0
      %2397 = vmatpush1.bf16.msra.mxu0 %v1994
      %2398 = vmatprep.subr.bf16.mxu0 0
      %2399 = vmatpush1.bf16.msra.mxu0 %v1995
      %2400 = vmatprep.subr.bf16.mxu0 0
      %2401 = vmatpush1.bf16.msra.mxu0 %v1996
      %2402 = vmatprep.subr.bf16.mxu0 0
      %2403 = vmatpush1.bf16.msra.mxu0 %v1997
      %2404 = vmatprep.subr.bf16.mxu0 0
      %2405 = vmatpush1.bf16.msra.mxu0 %v1998
      %2406 = vmatprep.subr.bf16.mxu0 0
      %2407 = vmatpush1.bf16.msra.mxu0 %v1999
      %2408 = vmatprep.subr.bf16.mxu0 0
      %2409 = vmatpush1.bf16.msra.mxu0 %v2000
      %2410 = vmatprep.subr.bf16.mxu0 0
      %2411 = vmatpush1.bf16.msra.mxu0 %v2001
      %2412 = vmatprep.subr.bf16.mxu0 0
      %2413 = vmatpush1.bf16.msra.mxu0 %v2002
      %2414 = vmatprep.subr.bf16.mxu0 0
      %2415 = vmatpush1.bf16.msra.mxu0 %v2003
      %2416 = vmatprep.subr.bf16.mxu0 0
      %2417 = vmatpush1.bf16.msra.mxu0 %v2004
      %2418 = vmatprep.subr.bf16.mxu0 0
      %2419 = vmatpush1.bf16.msra.mxu0 %v2005
      %2420 = vmatprep.subr.bf16.mxu0 0
      %2421 = vmatpush1.bf16.msra.mxu0 %v2006
      %2422 = vmatprep.subr.bf16.mxu0 0
      %2423 = vmatpush1.bf16.msra.mxu0 %v2007
      %2424 = vmatprep.mubr.bf16.mxu0 %v993
      %2425 = vmatmul.mubr.bf16.gmra.mrb[0].mxu0 %v992
      %v2426 = vpop.f32.mrb[0].mxu0
      %v2427 = vadd.f32 %v686, %v2426
      %v2428 = vpop.f32.mrb[0].mxu0
      %v2429 = vpop.f32.mrb[0].mxu0
      %v2430 = vadd.f32 %v686, %v2429
      %v2431 = vpop.f32.mrb[0].mxu0
      %2432 = vmatprep.mubr.bf16.mxu0 %v1018
      %2433 = vmatmul.mubr.bf16.gmra.mrb[0].mxu0 %v1017
      %v2434 = vpop.f32.mrb[0].mxu0
      %v2435 = vadd.f32 %v686, %v2434
      %v2436 = vpop.f32.mrb[0].mxu0
      %v2437 = vpop.f32.mrb[0].mxu0
      %v2438 = vadd.f32 %v686, %v2437
      %v2439 = vpop.f32.mrb[0].mxu0
      %2440 = vmatprep.mubr.bf16.mxu0 %v1043
      %2441 = vmatmul.mubr.bf16.gmra.mrb[0].mxu0 %v1042
      %v2442 = vpop.f32.mrb[0].mxu0
      %v2443 = vadd.f32 %v686, %v2442
      %v2444 = vpop.f32.mrb[0].mxu0
      %v2445 = vpop.f32.mrb[0].mxu0
      %v2446 = vadd.f32 %v686, %v2445
      %v2447 = vpop.f32.mrb[0].mxu0
      %2448 = vmatprep.mubr.bf16.mxu0 %v1068
      %2449 = vmatmul.mubr.bf16.gmra.mrb[0].mxu0 %v1067
      %v2450 = vpop.f32.mrb[0].mxu0
      %v2451 = vadd.f32 %v686, %v2450
      %v2452 = vpop.f32.mrb[0].mxu0
      %v2453 = vpop.f32.mrb[0].mxu0
      %v2454 = vadd.f32 %v686, %v2453
      %v2455 = vpop.f32.mrb[0].mxu0
      %2456 = vdwg.mxu0
      %2457 = vmatprep.subr.bf16.mxu0 0
      %2458 = vmatpush1.bf16.msra.mxu0 %v2008
      %2459 = vmatprep.subr.bf16.mxu0 0
      %2460 = vmatpush1.bf16.msra.mxu0 %v2009
      %2461 = vmatprep.subr.bf16.mxu0 0
      %2462 = vmatpush1.bf16.msra.mxu0 %v2010
      %2463 = vmatprep.subr.bf16.mxu0 0
      %2464 = vmatpush1.bf16.msra.mxu0 %v2011
      %2465 = vmatprep.subr.bf16.mxu0 0
      %2466 = vmatpush1.bf16.msra.mxu0 %v2012
      %2467 = vmatprep.subr.bf16.mxu0 0
      %2468 = vmatpush1.bf16.msra.mxu0 %v2013
      %2469 = vmatprep.subr.bf16.mxu0 0
      %2470 = vmatpush1.bf16.msra.mxu0 %v2014
      %2471 = vmatprep.subr.bf16.mxu0 0
      %2472 = vmatpush1.bf16.msra.mxu0 %v2015
      %2473 = vmatprep.subr.bf16.mxu0 0
      %2474 = vmatpush1.bf16.msra.mxu0 %v2016
      %2475 = vmatprep.subr.bf16.mxu0 0
      %2476 = vmatpush1.bf16.msra.mxu0 %v2017
      %2477 = vmatprep.subr.bf16.mxu0 0
      %2478 = vmatpush1.bf16.msra.mxu0 %v2018
      %2479 = vmatprep.subr.bf16.mxu0 0
      %2480 = vmatpush1.bf16.msra.mxu0 %v2019
      %2481 = vmatprep.subr.bf16.mxu0 0
      %2482 = vmatpush1.bf16.msra.mxu0 %v2020
      %2483 = vmatprep.subr.bf16.mxu0 0
      %2484 = vmatpush1.bf16.msra.mxu0 %v2021
      %2485 = vmatprep.subr.bf16.mxu0 0
      %2486 = vmatpush1.bf16.msra.mxu0 %v2022
      %2487 = vmatprep.subr.bf16.mxu0 0
      %2488 = vmatpush1.bf16.msra.mxu0 %v2023
      %2489 = vmatprep.mubr.bf16.mxu0 %v995
      %2490 = vmatmul.mubr.bf16.gmra.mrb[0].mxu0 %v994
      %v2491 = vpop.f32.mrb[0].mxu0
      %v2492 = vadd.f32 %v2427, %v2491
      %v2493 = vpop.f32.mrb[0].mxu0
      %v2494 = vpop.f32.mrb[0].mxu0
      %v2495 = vadd.f32 %v2430, %v2494
      %v2496 = vpop.f32.mrb[0].mxu0
      %2497 = vmatprep.mubr.bf16.mxu0 %v1020
      %2498 = vmatmul.mubr.bf16.gmra.mrb[0].mxu0 %v1019
      %v2499 = vpop.f32.mrb[0].mxu0
      %v2500 = vadd.f32 %v2435, %v2499
      %v2501 = vpop.f32.mrb[0].mxu0
      %v2502 = vpop.f32.mrb[0].mxu0
      %v2503 = vadd.f32 %v2438, %v2502
      %v2504 = vpop.f32.mrb[0].mxu0
      %2505 = vmatprep.mubr.bf16.mxu0 %v1045
      %2506 = vmatmul.mubr.bf16.gmra.mrb[0].mxu0 %v1044
      %v2507 = vpop.f32.mrb[0].mxu0
      %v2508 = vadd.f32 %v2443, %v2507
      %v2509 = vpop.f32.mrb[0].mxu0
      %v2510 = vpop.f32.mrb[0].mxu0
      %v2511 = vadd.f32 %v2446, %v2510
      %v2512 = vpop.f32.mrb[0].mxu0
      %2513 = vmatprep.mubr.bf16.mxu0 %v1070
      %2514 = vmatmul.mubr.bf16.gmra.mrb[0].mxu0 %v1069
      %v2515 = vpop.f32.mrb[0].mxu0
      %v2516 = vadd.f32 %v2451, %v2515
      %v2517 = vpop.f32.mrb[0].mxu0
      %v2518 = vpop.f32.mrb[0].mxu0
      %v2519 = vadd.f32 %v2454, %v2518
      %v2520 = vpop.f32.mrb[0].mxu0
      %2521 = vdwg.mxu0
      %2522 = vmatprep.subr.bf16.mxu0 0
      %2523 = vmatpush1.bf16.msra.mxu0 %v2024
      %2524 = vmatprep.subr.bf16.mxu0 0
      %2525 = vmatpush1.bf16.msra.mxu0 %v2025
      %2526 = vmatprep.subr.bf16.mxu0 0
      %2527 = vmatpush1.bf16.msra.mxu0 %v2026
      %2528 = vmatprep.subr.bf16.mxu0 0
      %2529 = vmatpush1.bf16.msra.mxu0 %v2027
      %2530 = vmatprep.subr.bf16.mxu0 0
      %2531 = vmatpush1.bf16.msra.mxu0 %v2028
      %2532 = vmatprep.subr.bf16.mxu0 0
      %2533 = vmatpush1.bf16.msra.mxu0 %v2029
      %2534 = vmatprep.subr.bf16.mxu0 0
      %2535 = vmatpush1.bf16.msra.mxu0 %v2030
      %2536 = vmatprep.subr.bf16.mxu0 0
      %2537 = vmatpush1.bf16.msra.mxu0 %v2031
      %2538 = vmatprep.subr.bf16.mxu0 0
      %2539 = vmatpush1.bf16.msra.mxu0 %v2032
      %2540 = vmatprep.subr.bf16.mxu0 0
      %2541 = vmatpush1.bf16.msra.mxu0 %v2033
      %2542 = vmatprep.subr.bf16.mxu0 0
      %2543 = vmatpush1.bf16.msra.mxu0 %v2034
      %2544 = vmatprep.subr.bf16.mxu0 0
      %2545 = vmatpush1.bf16.msra.mxu0 %v2035
      %2546 = vmatprep.subr.bf16.mxu0 0
      %2547 = vmatpush1.bf16.msra.mxu0 %v2036
      %2548 = vmatprep.subr.bf16.mxu0 0
      %2549 = vmatpush1.bf16.msra.mxu0 %v2037
      %2550 = vmatprep.subr.bf16.mxu0 0
      %2551 = vmatpush1.bf16.msra.mxu0 %v2038
      %2552 = vmatprep.subr.bf16.mxu0 0
      %2553 = vmatpush1.bf16.msra.mxu0 %v2039
      %2554 = vmatprep.mubr.bf16.mxu0 %v997
      %2555 = vmatmul.mubr.bf16.gmra.mrb[0].mxu0 %v996
      %v2556 = vpop.f32.mrb[0].mxu0
      %v2557 = vadd.f32 %v2492, %v2556
      %v2558 = vpop.f32.mrb[0].mxu0
      %v2559 = vpop.f32.mrb[0].mxu0
      %v2560 = vadd.f32 %v2495, %v2559
      %v2561 = vpop.f32.mrb[0].mxu0
      %2562 = vmatprep.mubr.bf16.mxu0 %v1022
      %2563 = vmatmul.mubr.bf16.gmra.mrb[0].mxu0 %v1021
      %v2564 = vpop.f32.mrb[0].mxu0
      %v2565 = vadd.f32 %v2500, %v2564
      %v2566 = vpop.f32.mrb[0].mxu0
      %v2567 = vpop.f32.mrb[0].mxu0
      %v2568 = vadd.f32 %v2503, %v2567
      %v2569 = vpop.f32.mrb[0].mxu0
      %2570 = vmatprep.mubr.bf16.mxu0 %v1047
      %2571 = vmatmul.mubr.bf16.gmra.mrb[0].mxu0 %v1046
      %v2572 = vpop.f32.mrb[0].mxu0
      %v2573 = vadd.f32 %v2508, %v2572
      %v2574 = vpop.f32.mrb[0].mxu0
      %v2575 = vpop.f32.mrb[0].mxu0
      %v2576 = vadd.f32 %v2511, %v2575
      %v2577 = vpop.f32.mrb[0].mxu0
      %2578 = vmatprep.mubr.bf16.mxu0 %v1072
      %2579 = vmatmul.mubr.bf16.gmra.mrb[0].mxu0 %v1071
      %v2580 = vpop.f32.mrb[0].mxu0
      %v2581 = vadd.f32 %v2516, %v2580
      %v2582 = vpop.f32.mrb[0].mxu0
      %v2583 = vpop.f32.mrb[0].mxu0
      %v2584 = vadd.f32 %v2519, %v2583
      %v2585 = vpop.f32.mrb[0].mxu0
      %2586 = vdwg.mxu0
      %2587 = vmatprep.subr.bf16.mxu0 0
      %2588 = vmatpush1.bf16.msra.mxu0 %v2040
      %2589 = vmatprep.subr.bf16.mxu0 0
      %2590 = vmatpush1.bf16.msra.mxu0 %v2041
      %2591 = vmatprep.subr.bf16.mxu0 0
      %2592 = vmatpush1.bf16.msra.mxu0 %v2042
      %2593 = vmatprep.subr.bf16.mxu0 0
      %2594 = vmatpush1.bf16.msra.mxu0 %v2043
      %2595 = vmatprep.subr.bf16.mxu0 0
      %2596 = vmatpush1.bf16.msra.mxu0 %v2044
      %2597 = vmatprep.subr.bf16.mxu0 0
      %2598 = vmatpush1.bf16.msra.mxu0 %v2045
      %2599 = vmatprep.subr.bf16.mxu0 0
      %2600 = vmatpush1.bf16.msra.mxu0 %v2046
      %2601 = vmatprep.subr.bf16.mxu0 0
      %2602 = vmatpush1.bf16.msra.mxu0 %v2047
      %2603 = vmatprep.subr.bf16.mxu0 0
      %2604 = vmatpush1.bf16.msra.mxu0 %v2048
      %2605 = vmatprep.subr.bf16.mxu0 0
      %2606 = vmatpush1.bf16.msra.mxu0 %v2049
      %2607 = vmatprep.subr.bf16.mxu0 0
      %2608 = vmatpush1.bf16.msra.mxu0 %v2050
      %2609 = vmatprep.subr.bf16.mxu0 0
      %2610 = vmatpush1.bf16.msra.mxu0 %v2051
      %2611 = vmatprep.subr.bf16.mxu0 0
      %2612 = vmatpush1.bf16.msra.mxu0 %v2052
      %2613 = vmatprep.subr.bf16.mxu0 0
      %2614 = vmatpush1.bf16.msra.mxu0 %v2053
      %2615 = vmatprep.subr.bf16.mxu0 0
      %2616 = vmatpush1.bf16.msra.mxu0 %v2054
      %2617 = vmatprep.subr.bf16.mxu0 0
      %2618 = vmatpush1.bf16.msra.mxu0 %v2055
      %2619 = vmatprep.mubr.bf16.mxu0 %v999
      %2620 = vmatmul.mubr.bf16.gmra.mrb[0].mxu0 %v998
      %v2621 = vpop.f32.mrb[0].mxu0
      %v2622 = vadd.f32 %v2557, %v2621
      %v2623 = vpop.f32.mrb[0].mxu0
      %v2624 = vpop.f32.mrb[0].mxu0
      %v2625 = vadd.f32 %v2560, %v2624
      %v2626 = vpop.f32.mrb[0].mxu0
      %2627 = vmatprep.mubr.bf16.mxu0 %v1024
      %2628 = vmatmul.mubr.bf16.gmra.mrb[0].mxu0 %v1023
      %v2629 = vpop.f32.mrb[0].mxu0
      %v2630 = vadd.f32 %v2565, %v2629
      %v2631 = vpop.f32.mrb[0].mxu0
      %v2632 = vpop.f32.mrb[0].mxu0
      %v2633 = vadd.f32 %v2568, %v2632
      %v2634 = vpop.f32.mrb[0].mxu0
      %2635 = vmatprep.mubr.bf16.mxu0 %v1049
      %2636 = vmatmul.mubr.bf16.gmra.mrb[0].mxu0 %v1048
      %v2637 = vpop.f32.mrb[0].mxu0
      %v2638 = vadd.f32 %v2573, %v2637
      %v2639 = vpop.f32.mrb[0].mxu0
      %v2640 = vpop.f32.mrb[0].mxu0
      %v2641 = vadd.f32 %v2576, %v2640
      %v2642 = vpop.f32.mrb[0].mxu0
      %2643 = vmatprep.mubr.bf16.mxu0 %v1074
      %2644 = vmatmul.mubr.bf16.gmra.mrb[0].mxu0 %v1073
      %v2645 = vpop.f32.mrb[0].mxu0
      %v2646 = vadd.f32 %v2581, %v2645
      %v2647 = vpop.f32.mrb[0].mxu0
      %v2648 = vpop.f32.mrb[0].mxu0
      %v2649 = vadd.f32 %v2584, %v2648
      %v2650 = vpop.f32.mrb[0].mxu0
      %2651 = vdwg.mxu0
      %2652 = vmatprep.subr.bf16.mxu0 0
      %2653 = vmatpush1.bf16.msra.mxu0 %v2056
      %2654 = vmatprep.subr.bf16.mxu0 0
      %2655 = vmatpush1.bf16.msra.mxu0 %v2057
      %2656 = vmatprep.subr.bf16.mxu0 0
      %2657 = vmatpush1.bf16.msra.mxu0 %v2058
      %2658 = vmatprep.subr.bf16.mxu0 0
      %2659 = vmatpush1.bf16.msra.mxu0 %v2059
      %2660 = vmatprep.subr.bf16.mxu0 0
      %2661 = vmatpush1.bf16.msra.mxu0 %v2060
      %2662 = vmatprep.subr.bf16.mxu0 0
      %2663 = vmatpush1.bf16.msra.mxu0 %v2061
      %2664 = vmatprep.subr.bf16.mxu0 0
      %2665 = vmatpush1.bf16.msra.mxu0 %v2062
      %2666 = vmatprep.subr.bf16.mxu0 0
      %2667 = vmatpush1.bf16.msra.mxu0 %v2063
      %2668 = vmatprep.subr.bf16.mxu0 0
      %2669 = vmatpush1.bf16.msra.mxu0 %v2064
      %2670 = vmatprep.subr.bf16.mxu0 0
      %2671 = vmatpush1.bf16.msra.mxu0 %v2065
      %2672 = vmatprep.subr.bf16.mxu0 0
      %2673 = vmatpush1.bf16.msra.mxu0 %v2066
      %2674 = vmatprep.subr.bf16.mxu0 0
      %2675 = vmatpush1.bf16.msra.mxu0 %v2067
      %2676 = vmatprep.subr.bf16.mxu0 0
      %2677 = vmatpush1.bf16.msra.mxu0 %v2068
      %2678 = vmatprep.subr.bf16.mxu0 0
      %2679 = vmatpush1.bf16.msra.mxu0 %v2069
      %2680 = vmatprep.subr.bf16.mxu0 0
      %2681 = vmatpush1.bf16.msra.mxu0 %v2070
      %2682 = vmatprep.subr.bf16.mxu0 0
      %2683 = vmatpush1.bf16.msra.mxu0 %v2071
      %2684 = vmatprep.mubr.bf16.mxu0 %v1001
      %2685 = vmatmul.mubr.bf16.gmra.mrb[0].mxu0 %v1000
      %v2686 = vpop.f32.mrb[0].mxu0
      %v2687 = vadd.f32 %v2622, %v2686
      %v2688 = vpop.f32.mrb[0].mxu0
      %v2689 = vpop.f32.mrb[0].mxu0
      %v2690 = vadd.f32 %v2625, %v2689
      %v2691 = vpop.f32.mrb[0].mxu0
      %2692 = vmatprep.mubr.bf16.mxu0 %v1026
      %2693 = vmatmul.mubr.bf16.gmra.mrb[0].mxu0 %v1025
      %v2694 = vpop.f32.mrb[0].mxu0
      %v2695 = vadd.f32 %v2630, %v2694
      %v2696 = vpop.f32.mrb[0].mxu0
      %v2697 = vpop.f32.mrb[0].mxu0
      %v2698 = vadd.f32 %v2633, %v2697
      %v2699 = vpop.f32.mrb[0].mxu0
      %2700 = vmatprep.mubr.bf16.mxu0 %v1051
      %2701 = vmatmul.mubr.bf16.gmra.mrb[0].mxu0 %v1050
      %v2702 = vpop.f32.mrb[0].mxu0
      %v2703 = vadd.f32 %v2638, %v2702
      %v2704 = vpop.f32.mrb[0].mxu0
      %v2705 = vpop.f32.mrb[0].mxu0
      %v2706 = vadd.f32 %v2641, %v2705
      %v2707 = vpop.f32.mrb[0].mxu0
      %2708 = vmatprep.mubr.bf16.mxu0 %v1076
      %2709 = vmatmul.mubr.bf16.gmra.mrb[0].mxu0 %v1075
      %v2710 = vpop.f32.mrb[0].mxu0
      %v2711 = vadd.f32 %v2646, %v2710
      %v2712 = vpop.f32.mrb[0].mxu0
      %v2713 = vpop.f32.mrb[0].mxu0
      %v2714 = vadd.f32 %v2649, %v2713
      %v2715 = vpop.f32.mrb[0].mxu0
      %2716 = vdwg.mxu0
      %2717 = vmatprep.subr.bf16.mxu0 0
      %2718 = vmatpush1.bf16.msra.mxu0 %v2072
      %2719 = vmatprep.subr.bf16.mxu0 0
      %2720 = vmatpush1.bf16.msra.mxu0 %v2073
      %2721 = vmatprep.subr.bf16.mxu0 0
      %2722 = vmatpush1.bf16.msra.mxu0 %v2074
      %2723 = vmatprep.subr.bf16.mxu0 0
      %2724 = vmatpush1.bf16.msra.mxu0 %v2075
      %2725 = vmatprep.subr.bf16.mxu0 0
      %2726 = vmatpush1.bf16.msra.mxu0 %v2076
      %2727 = vmatprep.subr.bf16.mxu0 0
      %2728 = vmatpush1.bf16.msra.mxu0 %v2077
      %2729 = vmatprep.subr.bf16.mxu0 0
      %2730 = vmatpush1.bf16.msra.mxu0 %v2078
      %2731 = vmatprep.subr.bf16.mxu0 0
      %2732 = vmatpush1.bf16.msra.mxu0 %v2079
      %2733 = vmatprep.subr.bf16.mxu0 0
      %2734 = vmatpush1.bf16.msra.mxu0 %v2080
      %2735 = vmatprep.subr.bf16.mxu0 0
      %2736 = vmatpush1.bf16.msra.mxu0 %v2081
      %2737 = vmatprep.subr.bf16.mxu0 0
      %2738 = vmatpush1.bf16.msra.mxu0 %v2082
      %2739 = vmatprep.subr.bf16.mxu0 0
      %2740 = vmatpush1.bf16.msra.mxu0 %v2083
      %2741 = vmatprep.subr.bf16.mxu0 0
      %2742 = vmatpush1.bf16.msra.mxu0 %v2084
      %2743 = vmatprep.subr.bf16.mxu0 0
      %2744 = vmatpush1.bf16.msra.mxu0 %v2085
      %2745 = vmatprep.subr.bf16.mxu0 0
      %2746 = vmatpush1.bf16.msra.mxu0 %v2086
      %2747 = vmatprep.subr.bf16.mxu0 0
      %2748 = vmatpush1.bf16.msra.mxu0 %v2087
      %2749 = vmatprep.mubr.bf16.mxu0 %v1003
      %2750 = vmatmul.mubr.bf16.gmra.mrb[0].mxu0 %v1002
      %v2751 = vpop.f32.mrb[0].mxu0
      %v2752 = vadd.f32 %v2687, %v2751
      %v2753 = vpop.f32.mrb[0].mxu0
      %v2754 = vpop.f32.mrb[0].mxu0
      %v2755 = vadd.f32 %v2690, %v2754
      %v2756 = vpop.f32.mrb[0].mxu0
      %2757 = vmatprep.mubr.bf16.mxu0 %v1028
      %2758 = vmatmul.mubr.bf16.gmra.mrb[0].mxu0 %v1027
      %v2759 = vpop.f32.mrb[0].mxu0
      %v2760 = vadd.f32 %v2695, %v2759
      %v2761 = vpop.f32.mrb[0].mxu0
      %v2762 = vpop.f32.mrb[0].mxu0
      %v2763 = vadd.f32 %v2698, %v2762
      %v2764 = vpop.f32.mrb[0].mxu0
      %2765 = vmatprep.mubr.bf16.mxu0 %v1053
      %2766 = vmatmul.mubr.bf16.gmra.mrb[0].mxu0 %v1052
      %v2767 = vpop.f32.mrb[0].mxu0
      %v2768 = vadd.f32 %v2703, %v2767
      %v2769 = vpop.f32.mrb[0].mxu0
      %v2770 = vpop.f32.mrb[0].mxu0
      %v2771 = vadd.f32 %v2706, %v2770
      %v2772 = vpop.f32.mrb[0].mxu0
      %2773 = vmatprep.mubr.bf16.mxu0 %v1078
      %2774 = vmatmul.mubr.bf16.gmra.mrb[0].mxu0 %v1077
      %v2775 = vpop.f32.mrb[0].mxu0
      %v2776 = vadd.f32 %v2711, %v2775
      %v2777 = vpop.f32.mrb[0].mxu0
      %v2778 = vpop.f32.mrb[0].mxu0
      %v2779 = vadd.f32 %v2714, %v2778
      %v2780 = vpop.f32.mrb[0].mxu0
      %2781 = vdwg.mxu0
      %2782 = vmatprep.subr.bf16.mxu0 0
      %2783 = vmatpush1.bf16.msra.mxu0 %v2088
      %2784 = vmatprep.subr.bf16.mxu0 0
      %2785 = vmatpush1.bf16.msra.mxu0 %v2089
      %2786 = vmatprep.subr.bf16.mxu0 0
      %2787 = vmatpush1.bf16.msra.mxu0 %v2090
      %2788 = vmatprep.subr.bf16.mxu0 0
      %2789 = vmatpush1.bf16.msra.mxu0 %v2091
      %2790 = vmatprep.subr.bf16.mxu0 0
      %2791 = vmatpush1.bf16.msra.mxu0 %v2092
      %2792 = vmatprep.subr.bf16.mxu0 0
      %2793 = vmatpush1.bf16.msra.mxu0 %v2093
      %2794 = vmatprep.subr.bf16.mxu0 0
      %2795 = vmatpush1.bf16.msra.mxu0 %v2094
      %2796 = vmatprep.subr.bf16.mxu0 0
      %2797 = vmatpush1.bf16.msra.mxu0 %v2095
      %2798 = vmatprep.subr.bf16.mxu0 0
      %2799 = vmatpush1.bf16.msra.mxu0 %v2096
      %2800 = vmatprep.subr.bf16.mxu0 0
      %2801 = vmatpush1.bf16.msra.mxu0 %v2097
      %2802 = vmatprep.subr.bf16.mxu0 0
      %2803 = vmatpush1.bf16.msra.mxu0 %v2098
      %2804 = vmatprep.subr.bf16.mxu0 0
      %2805 = vmatpush1.bf16.msra.mxu0 %v2099
      %2806 = vmatprep.subr.bf16.mxu0 0
      %2807 = vmatpush1.bf16.msra.mxu0 %v2100
      %2808 = vmatprep.subr.bf16.mxu0 0
      %2809 = vmatpush1.bf16.msra.mxu0 %v2101
      %2810 = vmatprep.subr.bf16.mxu0 0
      %2811 = vmatpush1.bf16.msra.mxu0 %v2102
      %2812 = vmatprep.subr.bf16.mxu0 0
      %2813 = vmatpush1.bf16.msra.mxu0 %v2103
      %2814 = vmatprep.mubr.bf16.mxu0 %v1005
      %2815 = vmatmul.mubr.bf16.gmra.mrb[0].mxu0 %v1004
      %v2816 = vpop.f32.mrb[0].mxu0
      %v2817 = vadd.f32 %v2752, %v2816
      %v2818 = vpop.f32.mrb[0].mxu0
      %v2819 = vpop.f32.mrb[0].mxu0
      %v2820 = vadd.f32 %v2755, %v2819
      %v2821 = vpop.f32.mrb[0].mxu0
      %2822 = vmatprep.mubr.bf16.mxu0 %v1030
      %2823 = vmatmul.mubr.bf16.gmra.mrb[0].mxu0 %v1029
      %v2824 = vpop.f32.mrb[0].mxu0
      %v2825 = vadd.f32 %v2760, %v2824
      %v2826 = vpop.f32.mrb[0].mxu0
      %v2827 = vpop.f32.mrb[0].mxu0
      %v2828 = vadd.f32 %v2763, %v2827
      %v2829 = vpop.f32.mrb[0].mxu0
      %2830 = vmatprep.mubr.bf16.mxu0 %v1055
      %2831 = vmatmul.mubr.bf16.gmra.mrb[0].mxu0 %v1054
      %v2832 = vpop.f32.mrb[0].mxu0
      %v2833 = vadd.f32 %v2768, %v2832
      %v2834 = vpop.f32.mrb[0].mxu0
      %v2835 = vpop.f32.mrb[0].mxu0
      %v2836 = vadd.f32 %v2771, %v2835
      %v2837 = vpop.f32.mrb[0].mxu0
      %2838 = vmatprep.mubr.bf16.mxu0 %v1080
      %2839 = vmatmul.mubr.bf16.gmra.mrb[0].mxu0 %v1079
      %v2840 = vpop.f32.mrb[0].mxu0
      %v2841 = vadd.f32 %v2776, %v2840
      %v2842 = vpop.f32.mrb[0].mxu0
      %v2843 = vpop.f32.mrb[0].mxu0
      %v2844 = vadd.f32 %v2779, %v2843
      %v2845 = vpop.f32.mrb[0].mxu0
      %2846 = vdwg.mxu0
      %2847 = vmatprep.subr.bf16.mxu0 0
      %2848 = vmatpush1.bf16.msra.mxu0 %v2104
      %2849 = vmatprep.subr.bf16.mxu0 0
      %2850 = vmatpush1.bf16.msra.mxu0 %v2105
      %2851 = vmatprep.subr.bf16.mxu0 0
      %2852 = vmatpush1.bf16.msra.mxu0 %v2106
      %2853 = vmatprep.subr.bf16.mxu0 0
      %2854 = vmatpush1.bf16.msra.mxu0 %v2107
      %2855 = vmatprep.subr.bf16.mxu0 0
      %2856 = vmatpush1.bf16.msra.mxu0 %v2108
      %2857 = vmatprep.subr.bf16.mxu0 0
      %2858 = vmatpush1.bf16.msra.mxu0 %v2109
      %2859 = vmatprep.subr.bf16.mxu0 0
      %2860 = vmatpush1.bf16.msra.mxu0 %v2110
      %2861 = vmatprep.subr.bf16.mxu0 0
      %2862 = vmatpush1.bf16.msra.mxu0 %v2111
      %2863 = vmatprep.subr.bf16.mxu0 0
      %2864 = vmatpush1.bf16.msra.mxu0 %v2112
      %2865 = vmatprep.subr.bf16.mxu0 0
      %2866 = vmatpush1.bf16.msra.mxu0 %v2113
      %2867 = vmatprep.subr.bf16.mxu0 0
      %2868 = vmatpush1.bf16.msra.mxu0 %v2114
      %2869 = vmatprep.subr.bf16.mxu0 0
      %2870 = vmatpush1.bf16.msra.mxu0 %v2115
      %2871 = vmatprep.subr.bf16.mxu0 0
      %2872 = vmatpush1.bf16.msra.mxu0 %v2116
      %2873 = vmatprep.subr.bf16.mxu0 0
      %2874 = vmatpush1.bf16.msra.mxu0 %v2117
      %2875 = vmatprep.subr.bf16.mxu0 0
      %2876 = vmatpush1.bf16.msra.mxu0 %v2118
      %2877 = vmatprep.subr.bf16.mxu0 0
      %2878 = vmatpush1.bf16.msra.mxu0 %v2119
      %2879 = vmatprep.mubr.bf16.mxu0 %v1007
      %2880 = vmatmul.mubr.bf16.gmra.mrb[0].mxu0 %v1006
      %v2881 = vpop.f32.mrb[0].mxu0
      %v2882 = vadd.f32 %v2817, %v2881
      %v2883 = vpop.f32.mrb[0].mxu0
      %v2884 = vpop.f32.mrb[0].mxu0
      %v2885 = vadd.f32 %v2820, %v2884
      %v2886 = vpop.f32.mrb[0].mxu0
      %2887 = vmatprep.mubr.bf16.mxu0 %v1032
      %2888 = vmatmul.mubr.bf16.gmra.mrb[0].mxu0 %v1031
      %v2889 = vpop.f32.mrb[0].mxu0
      %v2890 = vadd.f32 %v2825, %v2889
      %v2891 = vpop.f32.mrb[0].mxu0
      %v2892 = vpop.f32.mrb[0].mxu0
      %v2893 = vadd.f32 %v2828, %v2892
      %v2894 = vpop.f32.mrb[0].mxu0
      %2895 = vmatprep.mubr.bf16.mxu0 %v1057
      %2896 = vmatmul.mubr.bf16.gmra.mrb[0].mxu0 %v1056
      %v2897 = vpop.f32.mrb[0].mxu0
      %v2898 = vadd.f32 %v2833, %v2897
      %v2899 = vpop.f32.mrb[0].mxu0
      %v2900 = vpop.f32.mrb[0].mxu0
      %v2901 = vadd.f32 %v2836, %v2900
      %v2902 = vpop.f32.mrb[0].mxu0
      %2903 = vmatprep.mubr.bf16.mxu0 %v1082
      %2904 = vmatmul.mubr.bf16.gmra.mrb[0].mxu0 %v1081
      %v2905 = vpop.f32.mrb[0].mxu0
      %v2906 = vadd.f32 %v2841, %v2905
      %v2907 = vpop.f32.mrb[0].mxu0
      %v2908 = vpop.f32.mrb[0].mxu0
      %v2909 = vadd.f32 %v2844, %v2908
      %v2910 = vpop.f32.mrb[0].mxu0
      %2911 = vdwg.mxu0
      %2912 = vmatprep.subr.bf16.mxu0 0
      %2913 = vmatpush1.bf16.msra.mxu0 %v2120
      %2914 = vmatprep.subr.bf16.mxu0 0
      %2915 = vmatpush1.bf16.msra.mxu0 %v2121
      %2916 = vmatprep.subr.bf16.mxu0 0
      %2917 = vmatpush1.bf16.msra.mxu0 %v2122
      %2918 = vmatprep.subr.bf16.mxu0 0
      %2919 = vmatpush1.bf16.msra.mxu0 %v2123
      %2920 = vmatprep.subr.bf16.mxu0 0
      %2921 = vmatpush1.bf16.msra.mxu0 %v2124
      %2922 = vmatprep.subr.bf16.mxu0 0
      %2923 = vmatpush1.bf16.msra.mxu0 %v2125
      %2924 = vmatprep.subr.bf16.mxu0 0
      %2925 = vmatpush1.bf16.msra.mxu0 %v2126
      %2926 = vmatprep.subr.bf16.mxu0 0
      %2927 = vmatpush1.bf16.msra.mxu0 %v2127
      %2928 = vmatprep.subr.bf16.mxu0 0
      %2929 = vmatpush1.bf16.msra.mxu0 %v2128
      %2930 = vmatprep.subr.bf16.mxu0 0
      %2931 = vmatpush1.bf16.msra.mxu0 %v2129
      %2932 = vmatprep.subr.bf16.mxu0 0
      %2933 = vmatpush1.bf16.msra.mxu0 %v2130
      %2934 = vmatprep.subr.bf16.mxu0 0
      %2935 = vmatpush1.bf16.msra.mxu0 %v2131
      %2936 = vmatprep.subr.bf16.mxu0 0
      %2937 = vmatpush1.bf16.msra.mxu0 %v2132
      %2938 = vmatprep.subr.bf16.mxu0 0
      %2939 = vmatpush1.bf16.msra.mxu0 %v2133
      %2940 = vmatprep.subr.bf16.mxu0 0
      %2941 = vmatpush1.bf16.msra.mxu0 %v2134
      %2942 = vmatprep.subr.bf16.mxu0 0
      %2943 = vmatpush1.bf16.msra.mxu0 %v2135
      %2944 = vmatprep.mubr.bf16.mxu0 %v1009
      %2945 = vmatmul.mubr.bf16.gmra.mrb[0].mxu0 %v1008
      %v2946 = vpop.f32.mrb[0].mxu0
      %v2947 = vadd.f32 %v2882, %v2946
      %v2948 = vpop.f32.mrb[0].mxu0
      %v2949 = vpop.f32.mrb[0].mxu0
      %v2950 = vadd.f32 %v2885, %v2949
      %v2951 = vpop.f32.mrb[0].mxu0
      %2952 = vmatprep.mubr.bf16.mxu0 %v1034
      %2953 = vmatmul.mubr.bf16.gmra.mrb[0].mxu0 %v1033
      %v2954 = vpop.f32.mrb[0].mxu0
      %v2955 = vadd.f32 %v2890, %v2954
      %v2956 = vpop.f32.mrb[0].mxu0
      %v2957 = vpop.f32.mrb[0].mxu0
      %v2958 = vadd.f32 %v2893, %v2957
      %v2959 = vpop.f32.mrb[0].mxu0
      %2960 = vmatprep.mubr.bf16.mxu0 %v1059
      %2961 = vmatmul.mubr.bf16.gmra.mrb[0].mxu0 %v1058
      %v2962 = vpop.f32.mrb[0].mxu0
      %v2963 = vadd.f32 %v2898, %v2962
      %v2964 = vpop.f32.mrb[0].mxu0
      %v2965 = vpop.f32.mrb[0].mxu0
      %v2966 = vadd.f32 %v2901, %v2965
      %v2967 = vpop.f32.mrb[0].mxu0
      %2968 = vmatprep.mubr.bf16.mxu0 %v1084
      %2969 = vmatmul.mubr.bf16.gmra.mrb[0].mxu0 %v1083
      %v2970 = vpop.f32.mrb[0].mxu0
      %v2971 = vadd.f32 %v2906, %v2970
      %v2972 = vpop.f32.mrb[0].mxu0
      %v2973 = vpop.f32.mrb[0].mxu0
      %v2974 = vadd.f32 %v2909, %v2973
      %v2975 = vpop.f32.mrb[0].mxu0
      %2976 = vdwg.mxu0
      %2977 = vmatprep.subr.bf16.mxu0 0
      %2978 = vmatpush1.bf16.msra.mxu0 %v2136
      %2979 = vmatprep.subr.bf16.mxu0 0
      %2980 = vmatpush1.bf16.msra.mxu0 %v2137
      %2981 = vmatprep.subr.bf16.mxu0 0
      %2982 = vmatpush1.bf16.msra.mxu0 %v2138
      %2983 = vmatprep.subr.bf16.mxu0 0
      %2984 = vmatpush1.bf16.msra.mxu0 %v2139
      %2985 = vmatprep.subr.bf16.mxu0 0
      %2986 = vmatpush1.bf16.msra.mxu0 %v2140
      %2987 = vmatprep.subr.bf16.mxu0 0
      %2988 = vmatpush1.bf16.msra.mxu0 %v2141
      %2989 = vmatprep.subr.bf16.mxu0 0
      %2990 = vmatpush1.bf16.msra.mxu0 %v2142
      %2991 = vmatprep.subr.bf16.mxu0 0
      %2992 = vmatpush1.bf16.msra.mxu0 %v2143
      %2993 = vmatprep.subr.bf16.mxu0 0
      %2994 = vmatpush1.bf16.msra.mxu0 %v2144
      %2995 = vmatprep.subr.bf16.mxu0 0
      %2996 = vmatpush1.bf16.msra.mxu0 %v2145
      %2997 = vmatprep.subr.bf16.mxu0 0
      %2998 = vmatpush1.bf16.msra.mxu0 %v2146
      %2999 = vmatprep.subr.bf16.mxu0 0
      %3000 = vmatpush1.bf16.msra.mxu0 %v2147
      %3001 = vmatprep.subr.bf16.mxu0 0
      %3002 = vmatpush1.bf16.msra.mxu0 %v2148
      %3003 = vmatprep.subr.bf16.mxu0 0
      %3004 = vmatpush1.bf16.msra.mxu0 %v2149
      %3005 = vmatprep.subr.bf16.mxu0 0
      %3006 = vmatpush1.bf16.msra.mxu0 %v2150
      %3007 = vmatprep.subr.bf16.mxu0 0
      %3008 = vmatpush1.bf16.msra.mxu0 %v2151
      %3009 = vmatprep.mubr.bf16.mxu0 %v1011
      %3010 = vmatmul.mubr.bf16.gmra.mrb[0].mxu0 %v1010
      %v3011 = vpop.f32.mrb[0].mxu0
      %v3012 = vadd.f32 %v2947, %v3011
      %v3013 = vpop.f32.mrb[0].mxu0
      %v3014 = vpop.f32.mrb[0].mxu0
      %v3015 = vadd.f32 %v2950, %v3014
      %v3016 = vpop.f32.mrb[0].mxu0
      %3017 = vmatprep.mubr.bf16.mxu0 %v1036
      %3018 = vmatmul.mubr.bf16.gmra.mrb[0].mxu0 %v1035
      %v3019 = vpop.f32.mrb[0].mxu0
      %v3020 = vadd.f32 %v2955, %v3019
      %v3021 = vpop.f32.mrb[0].mxu0
      %v3022 = vpop.f32.mrb[0].mxu0
      %v3023 = vadd.f32 %v2958, %v3022
      %v3024 = vpop.f32.mrb[0].mxu0
      %3025 = vmatprep.mubr.bf16.mxu0 %v1061
      %3026 = vmatmul.mubr.bf16.gmra.mrb[0].mxu0 %v1060
      %v3027 = vpop.f32.mrb[0].mxu0
      %v3028 = vadd.f32 %v2963, %v3027
      %v3029 = vpop.f32.mrb[0].mxu0
      %v3030 = vpop.f32.mrb[0].mxu0
      %v3031 = vadd.f32 %v2966, %v3030
      %v3032 = vpop.f32.mrb[0].mxu0
      %3033 = vmatprep.mubr.bf16.mxu0 %v1086
      %3034 = vmatmul.mubr.bf16.gmra.mrb[0].mxu0 %v1085
      %v3035 = vpop.f32.mrb[0].mxu0
      %v3036 = vadd.f32 %v2971, %v3035
      %v3037 = vpop.f32.mrb[0].mxu0
      %v3038 = vpop.f32.mrb[0].mxu0
      %v3039 = vadd.f32 %v2974, %v3038
      %v3040 = vpop.f32.mrb[0].mxu0
      %3041 = vdwg.mxu0
      %3042 = vmatprep.subr.bf16.mxu0 0
      %3043 = vmatpush1.bf16.msra.mxu0 %v2152
      %3044 = vmatprep.subr.bf16.mxu0 0
      %3045 = vmatpush1.bf16.msra.mxu0 %v2153
      %3046 = vmatprep.subr.bf16.mxu0 0
      %3047 = vmatpush1.bf16.msra.mxu0 %v2154
      %3048 = vmatprep.subr.bf16.mxu0 0
      %3049 = vmatpush1.bf16.msra.mxu0 %v2155
      %3050 = vmatprep.subr.bf16.mxu0 0
      %3051 = vmatpush1.bf16.msra.mxu0 %v2156
      %3052 = vmatprep.subr.bf16.mxu0 0
      %3053 = vmatpush1.bf16.msra.mxu0 %v2157
      %3054 = vmatprep.subr.bf16.mxu0 0
      %3055 = vmatpush1.bf16.msra.mxu0 %v2158
      %3056 = vmatprep.subr.bf16.mxu0 0
      %3057 = vmatpush1.bf16.msra.mxu0 %v2159
      %3058 = vmatprep.subr.bf16.mxu0 0
      %3059 = vmatpush1.bf16.msra.mxu0 %v2160
      %3060 = vmatprep.subr.bf16.mxu0 0
      %3061 = vmatpush1.bf16.msra.mxu0 %v2161
      %3062 = vmatprep.subr.bf16.mxu0 0
      %3063 = vmatpush1.bf16.msra.mxu0 %v2162
      %3064 = vmatprep.subr.bf16.mxu0 0
      %3065 = vmatpush1.bf16.msra.mxu0 %v2163
      %3066 = vmatprep.subr.bf16.mxu0 0
      %3067 = vmatpush1.bf16.msra.mxu0 %v2164
      %3068 = vmatprep.subr.bf16.mxu0 0
      %3069 = vmatpush1.bf16.msra.mxu0 %v2165
      %3070 = vmatprep.subr.bf16.mxu0 0
      %3071 = vmatpush1.bf16.msra.mxu0 %v2166
      %3072 = vmatprep.subr.bf16.mxu0 0
      %3073 = vmatpush1.bf16.msra.mxu0 %v2167
      %3074 = vmatprep.mubr.bf16.mxu0 %v1013
      %3075 = vmatmul.mubr.bf16.gmra.mrb[0].mxu0 %v1012
      %v3076 = vpop.f32.mrb[0].mxu0
      %v3077 = vadd.f32 %v3012, %v3076
      %v3078 = vpop.f32.mrb[0].mxu0
      %v3079 = vpop.f32.mrb[0].mxu0
      %v3080 = vadd.f32 %v3015, %v3079
      %v3081 = vpop.f32.mrb[0].mxu0
      %3082 = vmatprep.mubr.bf16.mxu0 %v1038
      %3083 = vmatmul.mubr.bf16.gmra.mrb[0].mxu0 %v1037
      %v3084 = vpop.f32.mrb[0].mxu0
      %v3085 = vadd.f32 %v3020, %v3084
      %v3086 = vpop.f32.mrb[0].mxu0
      %v3087 = vpop.f32.mrb[0].mxu0
      %v3088 = vadd.f32 %v3023, %v3087
      %v3089 = vpop.f32.mrb[0].mxu0
      %3090 = vmatprep.mubr.bf16.mxu0 %v1063
      %3091 = vmatmul.mubr.bf16.gmra.mrb[0].mxu0 %v1062
      %v3092 = vpop.f32.mrb[0].mxu0
      %v3093 = vadd.f32 %v3028, %v3092
      %v3094 = vpop.f32.mrb[0].mxu0
      %v3095 = vpop.f32.mrb[0].mxu0
      %v3096 = vadd.f32 %v3031, %v3095
      %v3097 = vpop.f32.mrb[0].mxu0
      %3098 = vmatprep.mubr.bf16.mxu0 %v1088
      %3099 = vmatmul.mubr.bf16.gmra.mrb[0].mxu0 %v1087
      %v3100 = vpop.f32.mrb[0].mxu0
      %v3101 = vadd.f32 %v3036, %v3100
      %v3102 = vpop.f32.mrb[0].mxu0
      %v3103 = vpop.f32.mrb[0].mxu0
      %v3104 = vadd.f32 %v3039, %v3103
      %v3105 = vpop.f32.mrb[0].mxu0
      %3106 = vdwg.mxu0
      %3107 = vmatprep.subr.bf16.mxu0 0
      %3108 = vmatpush1.bf16.msra.mxu0 %v2168
      %3109 = vmatprep.subr.bf16.mxu0 0
      %3110 = vmatpush1.bf16.msra.mxu0 %v2169
      %3111 = vmatprep.subr.bf16.mxu0 0
      %3112 = vmatpush1.bf16.msra.mxu0 %v2170
      %3113 = vmatprep.subr.bf16.mxu0 0
      %3114 = vmatpush1.bf16.msra.mxu0 %v2171
      %3115 = vmatprep.subr.bf16.mxu0 0
      %3116 = vmatpush1.bf16.msra.mxu0 %v2172
      %3117 = vmatprep.subr.bf16.mxu0 0
      %3118 = vmatpush1.bf16.msra.mxu0 %v2173
      %3119 = vmatprep.subr.bf16.mxu0 0
      %3120 = vmatpush1.bf16.msra.mxu0 %v2174
      %3121 = vmatprep.subr.bf16.mxu0 0
      %3122 = vmatpush1.bf16.msra.mxu0 %v2175
      %3123 = vmatprep.subr.bf16.mxu0 0
      %3124 = vmatpush1.bf16.msra.mxu0 %v2176
      %3125 = vmatprep.subr.bf16.mxu0 0
      %3126 = vmatpush1.bf16.msra.mxu0 %v2177
      %3127 = vmatprep.subr.bf16.mxu0 0
      %3128 = vmatpush1.bf16.msra.mxu0 %v2178
      %3129 = vmatprep.subr.bf16.mxu0 0
      %3130 = vmatpush1.bf16.msra.mxu0 %v2179
      %3131 = vmatprep.subr.bf16.mxu0 0
      %3132 = vmatpush1.bf16.msra.mxu0 %v2180
      %3133 = vmatprep.subr.bf16.mxu0 0
      %3134 = vmatpush1.bf16.msra.mxu0 %v2181
      %3135 = vmatprep.subr.bf16.mxu0 0
      %3136 = vmatpush1.bf16.msra.mxu0 %v2182
      %3137 = vmatprep.subr.bf16.mxu0 0
      %3138 = vmatpush1.bf16.msra.mxu0 %v2183
      %3139 = vmatprep.mubr.bf16.mxu0 %v1015
      %3140 = vmatmul.mubr.bf16.gmra.mrb[0].mxu0 %v1014
      %v3141 = vpop.f32.mrb[0].mxu0
      %v3142 = vadd.f32 %v3077, %v3141
      %v3143 = vpop.f32.mrb[0].mxu0
      %v3144 = vpop.f32.mrb[0].mxu0
      %v3145 = vadd.f32 %v3080, %v3144
      %v3146 = vpop.f32.mrb[0].mxu0
      %3147 = vmatprep.mubr.bf16.mxu0 %v1040
      %3148 = vmatmul.mubr.bf16.gmra.mrb[0].mxu0 %v1039
      %v3149 = vpop.f32.mrb[0].mxu0
      %v3150 = vadd.f32 %v3085, %v3149
      %v3151 = vpop.f32.mrb[0].mxu0
      %v3152 = vpop.f32.mrb[0].mxu0
      %v3153 = vadd.f32 %v3088, %v3152
      %v3154 = vpop.f32.mrb[0].mxu0
      %3155 = vmatprep.mubr.bf16.mxu0 %v1065
      %3156 = vmatmul.mubr.bf16.gmra.mrb[0].mxu0 %v1064
      %v3157 = vpop.f32.mrb[0].mxu0
      %v3158 = vadd.f32 %v3093, %v3157
      %v3159 = vpop.f32.mrb[0].mxu0
      %v3160 = vpop.f32.mrb[0].mxu0
      %v3161 = vadd.f32 %v3096, %v3160
      %v3162 = vpop.f32.mrb[0].mxu0
      %3163 = vmatprep.mubr.bf16.mxu0 %v1090
      %3164 = vmatmul.mubr.bf16.gmra.mrb[0].mxu0 %v1089
      %v3165 = vpop.f32.mrb[0].mxu0
      %v3166 = vadd.f32 %v3101, %v3165
      %v3167 = vpop.f32.mrb[0].mxu0
      %v3168 = vpop.f32.mrb[0].mxu0
      %v3169 = vadd.f32 %v3104, %v3168
      %v3170 = vpop.f32.mrb[0].mxu0
      %3171 = vdwg.mxu0
      %3172 = vmatprep.subr.bf16.mxu0 0
      %3173 = vmatpush1.bf16.msra.mxu0 %v2184
      %3174 = vmatprep.subr.bf16.mxu0 0
      %3175 = vmatpush1.bf16.msra.mxu0 %v2185
      %3176 = vmatprep.subr.bf16.mxu0 0
      %3177 = vmatpush1.bf16.msra.mxu0 %v2186
      %3178 = vmatprep.subr.bf16.mxu0 0
      %3179 = vmatpush1.bf16.msra.mxu0 %v2187
      %3180 = vmatprep.subr.bf16.mxu0 0
      %3181 = vmatpush1.bf16.msra.mxu0 %v2188
      %3182 = vmatprep.subr.bf16.mxu0 0
      %3183 = vmatpush1.bf16.msra.mxu0 %v2189
      %3184 = vmatprep.subr.bf16.mxu0 0
      %3185 = vmatpush1.bf16.msra.mxu0 %v2190
      %3186 = vmatprep.subr.bf16.mxu0 0
      %3187 = vmatpush1.bf16.msra.mxu0 %v2191
      %3188 = vmatprep.subr.bf16.mxu0 0
      %3189 = vmatpush1.bf16.msra.mxu0 0
      %3190 = vmatprep.subr.bf16.mxu0 0
      %3191 = vmatpush1.bf16.msra.mxu0 0
      %3192 = vmatprep.subr.bf16.mxu0 0
      %3193 = vmatpush1.bf16.msra.mxu0 0
      %3194 = vmatprep.subr.bf16.mxu0 0
      %3195 = vmatpush1.bf16.msra.mxu0 0
      %3196 = vmatprep.subr.bf16.mxu0 0
      %3197 = vmatpush1.bf16.msra.mxu0 0
      %3198 = vmatprep.subr.bf16.mxu0 0
      %3199 = vmatpush1.bf16.msra.mxu0 0
      %3200 = vmatprep.subr.bf16.mxu0 0
      %3201 = vmatpush1.bf16.msra.mxu0 0
      %3202 = vmatprep.subr.bf16.mxu0 0
      %3203 = vmatpush1.bf16.msra.mxu0 0
      %3204 = vmatprep.mubr.bf16.mxu0 0
      %3205 = vmatmul.mubr.bf16.gmra.mrb[0].mxu0 %v1016
      %v3206 = vpop.f32.mrb[0].mxu0
      %v3207 = vadd.f32 %v3142, %v3206
      %v3208 = vpop.f32.mrb[0].mxu0
      %v3209 = vpop.f32.mrb[0].mxu0
      %v3210 = vadd.f32 %v3145, %v3209
      %v3211 = vpop.f32.mrb[0].mxu0
      %3212 = vmatprep.mubr.bf16.mxu0 0
      %3213 = vmatmul.mubr.bf16.gmra.mrb[0].mxu0 %v1041
      %v3214 = vpop.f32.mrb[0].mxu0
      %v3215 = vadd.f32 %v3150, %v3214
      %v3216 = vpop.f32.mrb[0].mxu0
      %v3217 = vpop.f32.mrb[0].mxu0
      %v3218 = vadd.f32 %v3153, %v3217
      %v3219 = vpop.f32.mrb[0].mxu0
      %3220 = vmatprep.mubr.bf16.mxu0 0
      %3221 = vmatmul.mubr.bf16.gmra.mrb[0].mxu0 %v1066
      %v3222 = vpop.f32.mrb[0].mxu0
      %v3223 = vadd.f32 %v3158, %v3222
      %v3224 = vpop.f32.mrb[0].mxu0
      %v3225 = vpop.f32.mrb[0].mxu0
      %v3226 = vadd.f32 %v3161, %v3225
      %v3227 = vpop.f32.mrb[0].mxu0
      %3228 = vmatprep.mubr.bf16.mxu0 0
      %3229 = vmatmul.mubr.bf16.gmra.mrb[0].mxu0 %v1091
      %v3230 = vpop.f32.mrb[0].mxu0
      %v3231 = vadd.f32 %v3166, %v3230
      %v3232 = vpop.f32.mrb[0].mxu0
      %v3233 = vpop.f32.mrb[0].mxu0
      %v3234 = vadd.f32 %v3169, %v3233
      %v3235 = vpop.f32.mrb[0].mxu0
      %3236 = vdwg.mxu0
      %v3237 = vmax.f32 %v3207, 0.0
      %v3238 = vmax.f32 %v3210, 0.0
      %v3239 = vmax.f32 %v3215, 0.0
      %v3240 = vmax.f32 %v3218, 0.0
      %v3241 = vmax.f32 %v3223, 0.0
      %v3242 = vmax.f32 %v3226, 0.0
      %v3243 = vmax.f32 %v3231, 0.0
      %v3244 = vmax.f32 %v3234, 0.0
      %v3247 = vcombine.high %v3237, %v3237
      %v3248 = vcombine.high %v3238, %v3238
      %v3253 = vcombine.high %v3239, %v3239
      %v3254 = vcombine.high %v3240, %v3240
      %v3259 = vcombine.high %v3241, %v3241
      %v3260 = vcombine.high %v3242, %v3242
      %v3265 = vcombine.high %v3243, %v3243
      %v3266 = vcombine.high %v3244, %v3244
      %v3269 = vmax.f32 %v3237, 0.0
      %v3270 = vmax.f32 %v3241, %v3247
      %v3271 = vmax.f32 %v3259, %v3238
      %v3272 = vmax.f32 %v3242, %v3248
      %v3273 = vmax.f32 %v3269, %v3241
      %v3274 = vmax.f32 %v3270, %v3259
      %v3275 = vmax.f32 %v3271, %v3242
      %v3276 = vmax.f32 %v3272, %v3260
      %v3277 = vmax.f32 %v3239, 0.0
      %v3278 = vmax.f32 %v3243, %v3253
      %v3279 = vmax.f32 %v3265, %v3240
      %v3280 = vmax.f32 %v3244, %v3254
      %v3281 = vmax.f32 %v3277, %v3243
      %v3282 = vmax.f32 %v3278, %v3265
      %v3283 = vmax.f32 %v3279, %v3244
      %v3284 = vmax.f32 %v3280, %v3266
      %v3289 = vrot.slane %v3281, 7
      %v3290 = vrot.slane %v3282, 7
      %v3291 = vrot.slane %v3283, 7
      %v3292 = vrot.slane %v3284, 7
      %vm3297 = vcmask 1040384
      %v3298 = vsel %vm3297, 0.0, %v3289
      %v3299 = vsel %vm3297, 0.0, %v3290
      %v3300 = vsel %vm3297, 0.0, %v3291
      %v3301 = vsel %vm3297, 0.0, %v3292
      %v3302 = vmax.f32 %v3298, %v3273
      %v3303 = vmax.f32 %v3299, %v3274
      %v3304 = vmax.f32 %v3300, %v3275
      %v3305 = vmax.f32 %v3301, %v3276
      %v3306 = vmax.f32 %v3302, %v3281
      %v3307 = vmax.f32 %v3303, %v3282
      %v3308 = vmax.f32 %v3304, %v3283
      %v3309 = vmax.f32 %v3305, %v3284
      %v3310 = vpack.c.bf16 %v3306, %v3306
      %v3311 = vpack.c.bf16 %v3307, %v3307
      %v3312 = vpack.c.bf16 %v3308, %v3308
      %v3313 = vpack.c.bf16 %v3309, %v3309
      %3314 = vst [vmem:[%s175] sm:$0x3] %v3310
      %3315 = vst [vmem:[%s175 + $0x2] sm:$0x3] %v3311
      %3316 = vst [vmem:[%s175 + $0x4] sm:$0x3] %v3312
      %3317 = vst [vmem:[%s175 + $0x6] sm:$0x3] %v3313
      %p3318 = scmp.lt.s32.totalorder %s14, 1
      %s3319 = scalar_select %p3318, %s14, 1
      %s3320 = smul.addr %s3319, 4
      %s3321 = smul.addr %s3320, 2
      %s3322 = scalar_lea.vmem %s3, %s3321
      // Predicated region
      $region33: #{_lambda_.5} parent=31 // pred_check
        %p3323 = pneg %p100
      $region34: #{_lambda_.5} parent=31 // pred_check_branch
        %3325 = sbr.rel (%p3323) target = $region36
      $region35: #{_lambda_.5} parent=31 // pred_region
        _
      $region36: #{_lambda_.5} parent=31 // pred_fallthru
        _
    $region32: #{_lambda_.5} parent=5 // pred_fallthru
      _
    %p3326 = scmp.le.s32.totalorder 2, %s9
    // Predicated region
    $region37: #{_lambda_.5} parent=5 // pred_check
      %p3327 = pneg %p3326
    $region38: #{_lambda_.5} parent=5 // pred_check_branch
      %3329 = sbr.rel (%p3327) target = $region40
    $region39: #{_lambda_.5} parent=5 // pred_region
      %s3330 = ssub.s32 %s9, 2
      // Predicated region
      $region41: #{_lambda_.5} parent=39 // pred_check
        %p3331 = pneg %p106
      $region42: #{_lambda_.5} parent=39 // pred_check_branch
        %3333 = sbr.rel (%p3331) target = $region44
      $region43: #{_lambda_.5} parent=39 // pred_region
        %p3334 = scmp.lt.s32.totalorder %s15, 1
        %s3335 = scalar_select %p3334, %s15, 1
        %s3336 = smul.addr %s3335, 4
        %s3337 = smul.addr %s3336, 2
        %s3338 = scalar_lea.vmem %s3, %s3337
      $region44: #{_lambda_.5} parent=39 // pred_fallthru
        _
    $region40: #{_lambda_.5} parent=5 // pred_fallthru
      _
  $region6: #{_lambda_.5} parent=0 // loop_footer
    %s13 = sadd.s32 1, %s9
  $region7: #{_lambda_.5} parent=0 // loop_footer_branch
    %8 = sbr.rel target = $region3
  $region8: #{_lambda_.5} parent=0 // loop_exit
    _

// kernel: _lambda_.6
$region0: #{_lambda_.6}
  #allocation0 [shape = 'u32[]', space=smem, size = 0x4, offset = 0x4, fixed_abs, tag = 'smem constant byte address 0x4 - core index']
  #allocation1 [shape = 'u32[144,128]{1,0:T(1,128)}', space=vmem, size = 0x12000, scoped, tag = 'internal scratch']
  %s0 = inlined_call_operand.vmem [shape: bf16[32,1152], index: 0, kind: input, shape index: {}]
  %s1 = inlined_call_operand.vmem [shape: bf16[1152,128], index: 1, kind: input, shape index: {}]
  %s2 = inlined_call_operand.vmem [shape: f32[1,128], index: 2, kind: input, shape index: {}]
  %s3 = inlined_call_operand.vmem [shape: bf16[2,2,2,128], index: 3, kind: output, shape index: {}]
  %s4 = sld [smem:[#allocation0]]
  $region45: #{_lambda_.6} parent=0
    _
  %s6 = ssub.s32 1, %s4
  %s7 = scalar_select 0, %s6, %s4
  loop: start=0, step=1, limit=4
  $region2: #{_lambda_.6} parent=0 // loop_pre_header
    _
  $region3: #{_lambda_.6} parent=0 // loop_header
    %s9 = sphi 0, %s13
    %p10 = scmp.ge.s32.totalorder %s9, 4
    %s19 = sphi 0, %s21
    %s22 = sphi 0, %s19
    %s23 = sphi 0, %s22
    %s39 = sphi 0, %s23
    %s43 = sphi 0, %s43
    %s45 = sphi 0, %s43
    %s46 = sphi 0, %s45
    %s60 = sphi 0, %s46
    %s64 = sphi 0, %s64
    %s66 = sphi 0, %s64
    %s67 = sphi 0, %s66
    %s81 = sphi 0, %s67
    %s87 = sphi 0, %s89
    %s90 = sphi 0, %s87
    %s91 = sphi 0, %s90
    %s107 = sphi 0, %s91
  $region4: #{_lambda_.6} parent=0 // loop_header_branch
    %12 = sbr.rel (%p10) target = $region8
  $region5: #{_lambda_.6} parent=0 // loop_body
    %s14 = ssub.s32 %s9, 1
    %s15 = ssub.s32 %s9, 2
    %s16 = sadd.s32 %s9, 1
    %s17 = ssub.s32 %s9, %s16
    %p18 = scmp.eq.s32.totalorder %s17, 0
    %s20 = sadd.s32 %s19, 1
    %s21 = scalar_select %p18, %s19, %s20
    %p24 = pneg %p18
    %p25 = scmp.eq.s32.totalorder %s9, 1
    %p26 = por %p24, %p25
    %p27 = scmp.ne.s32.totalorder %s19, %s22
    %p28 = scmp.eq.s32.totalorder %s9, 0
    %p29 = por %p27, %p28
    %p30 = scmp.ne.s32.totalorder %s19, %s22
    %p31 = scmp.eq.s32.totalorder %s14, 1
    %p32 = por %p30, %p31
    %p33 = scmp.ne.s32.totalorder %s22, %s23
    %p34 = scmp.eq.s32.totalorder %s14, 0
    %p35 = por %p33, %p34
    %p36 = scmp.ne.s32.totalorder %s22, %s23
    %p37 = scmp.eq.s32.totalorder %s15, 1
    %p38 = por %p36, %p37
    %p40 = scmp.ne.s32.totalorder %s23, %s39
    %p41 = scmp.eq.s32.totalorder %s15, 0
    %p42 = por %p40, %p41
    %s44 = sadd.s32 %s43, 1
    %p47 = scmp.eq.s32.totalorder %s9, 1
    %p48 = scmp.ne.s32.totalorder %s43, %s45
    %p49 = scmp.eq.s32.totalorder %s9, 0
    %p50 = por %p48, %p49
    %p51 = scmp.ne.s32.totalorder %s43, %s45
    %p52 = scmp.eq.s32.totalorder %s14, 1
    %p53 = por %p51, %p52
    %p54 = scmp.ne.s32.totalorder %s45, %s46
    %p55 = scmp.eq.s32.totalorder %s14, 0
    %p56 = por %p54, %p55
    %p57 = scmp.ne.s32.totalorder %s45, %s46
    %p58 = scmp.eq.s32.totalorder %s15, 1
    %p59 = por %p57, %p58
    %p61 = scmp.ne.s32.totalorder %s46, %s60
    %p62 = scmp.eq.s32.totalorder %s15, 0
    %p63 = por %p61, %p62
    %s65 = sadd.s32 %s64, 1
    %p68 = scmp.eq.s32.totalorder %s9, 1
    %p69 = scmp.ne.s32.totalorder %s64, %s66
    %p70 = scmp.eq.s32.totalorder %s9, 0
    %p71 = por %p69, %p70
    %p72 = scmp.ne.s32.totalorder %s64, %s66
    %p73 = scmp.eq.s32.totalorder %s14, 1
    %p74 = por %p72, %p73
    %p75 = scmp.ne.s32.totalorder %s66, %s67
    %p76 = scmp.eq.s32.totalorder %s14, 0
    %p77 = por %p75, %p76
    %p78 = scmp.ne.s32.totalorder %s66, %s67
    %p79 = scmp.eq.s32.totalorder %s15, 1
    %p80 = por %p78, %p79
    %p82 = scmp.ne.s32.totalorder %s67, %s81
    %p83 = scmp.eq.s32.totalorder %s15, 0
    %p84 = por %p82, %p83
    %s85 = ssub.s32 %s9, %s16
    %p86 = scmp.eq.s32.totalorder %s85, 0
    %s88 = sadd.s32 %s87, 1
    %s89 = scalar_select %p86, %s87, %s88
    %p92 = pneg %p86
    %p93 = scmp.eq.s32.totalorder %s9, 1
    %p94 = por %p92, %p93
    %p95 = scmp.ne.s32.totalorder %s87, %s90
    %p96 = scmp.eq.s32.totalorder %s9, 0
    %p97 = por %p95, %p96
    %p98 = scmp.ne.s32.totalorder %s87, %s90
    %p99 = scmp.eq.s32.totalorder %s14, 1
    %p100 = por %p98, %p99
    %p101 = scmp.ne.s32.totalorder %s90, %s91
    %p102 = scmp.eq.s32.totalorder %s14, 0
    %p103 = por %p101, %p102
    %p104 = scmp.ne.s32.totalorder %s90, %s91
    %p105 = scmp.eq.s32.totalorder %s15, 1
    %p106 = por %p104, %p105
    %p108 = scmp.ne.s32.totalorder %s91, %s107
    %p109 = scmp.eq.s32.totalorder %s15, 0
    %p110 = por %p108, %p109
    %p111 = scmp.le.s32.totalorder 1, %s9
    %p112 = scmp.lt.s32.totalorder %s9, 3
    %p113 = pnand %p111, %p112
    %p114 = pneg %p113
    // Predicated region
    $region9: #{_lambda_.6} parent=5 // pred_check
      _
    $region10: #{_lambda_.6} parent=5 // pred_check_branch
      %116 = sbr.rel (%p113) target = $region12
    $region11: #{_lambda_.6} parent=5 // pred_region
      %s117 = ssub.s32 %s9, 1
      // Predicated region
      $region13: #{_lambda_.6} parent=11 // pred_check
        %p118 = pneg %p56
      $region14: #{_lambda_.6} parent=11 // pred_check_branch
        %120 = sbr.rel (%p118) target = $region16
      $region15: #{_lambda_.6} parent=11 // pred_region
        _
      $region16: #{_lambda_.6} parent=11 // pred_fallthru
        _
      // Predicated region
      $region17: #{_lambda_.6} parent=11 // pred_check
        %p121 = pneg %p77
      $region18: #{_lambda_.6} parent=11 // pred_check_branch
        %123 = sbr.rel (%p121) target = $region20
      $region19: #{_lambda_.6} parent=11 // pred_region
        _
      $region20: #{_lambda_.6} parent=11 // pred_fallthru
        _
    $region12: #{_lambda_.6} parent=5 // pred_fallthru
      _
    %p124 = scmp.lt.s32.totalorder %s9, 2
    // Predicated region
    $region21: #{_lambda_.6} parent=5 // pred_check
      %p125 = pneg %p124
    $region22: #{_lambda_.6} parent=5 // pred_check_branch
      %127 = sbr.rel (%p125) target = $region24
    $region23: #{_lambda_.6} parent=5 // pred_region
      // Predicated region
      $region25: #{_lambda_.6} parent=23 // pred_check
        %p128 = pneg %p29
      $region26: #{_lambda_.6} parent=23 // pred_check_branch
        %130 = sbr.rel (%p128) target = $region28
      $region27: #{_lambda_.6} parent=23 // pred_region
        %s131 = smul.u32 2, %s9
        %p132 = scmp.lt.s32.totalorder %s131, 3
        %s133 = scalar_select %p132, %s131, 3
        %s134 = smul.addr %s133, 9
        %s135 = smul.addr %s134, 4
        %s136 = scalar_lea.vmem %s0, %s135
        %s137 = smul.u32 2, %s9
      $region28: #{_lambda_.6} parent=23 // pred_fallthru
        _
    $region24: #{_lambda_.6} parent=5 // pred_fallthru
      _
    %p138 = scmp.le.s32.totalorder 1, %s9
    %p139 = scmp.lt.s32.totalorder %s9, 3
    %p140 = pnand %p138, %p139
    %p141 = pneg %p140
    // Predicated region
    $region29: #{_lambda_.6} parent=5 // pred_check
      _
    $region30: #{_lambda_.6} parent=5 // pred_check_branch
      %143 = sbr.rel (%p140) target = $region32
    $region31: #{_lambda_.6} parent=5 // pred_region
      %s144 = ssub.s32 %s9, 1
      %s145 = smul.u32 2, %s14
      %p146 = scmp.lt.s32.totalorder %s145, 3
      %s147 = scalar_select %p146, %s145, 3
      %s148 = smul.addr %s147, 9
      %s149 = smul.addr %s148, 4
      %s150 = scalar_lea.vmem %s0, %s149
      %p151 = pneg %p35
      %p152 = pneg %p32
      %p153 = pneg %p56
      %p154 = pneg %p53
      %p155 = pneg %p77
      %p156 = pneg %p74
      %p157 = pneg %p103
      %p158 = pneg %p100
      %p159 = scmp.lt.s32.totalorder %s14, 1
      %s160 = scalar_select %p159, %s14, 1
      %s161 = smul.addr %s160, 2
      %s162 = scalar_lea.vmem %s3, %s161
      %s163 = smul.u32 2, %s14
      %p164 = scmp.lt.s32.totalorder %s163, 3
      %s165 = scalar_select %p164, %s163, 3
      %s166 = smul.addr %s165, 9
      %s167 = smul.addr %s166, 4
      %s168 = scalar_lea.vmem %s0, %s167
      %s169 = smul.u32 2, %s14
      %p170 = scmp.lt.s32.totalorder %s14, 1
      %s171 = scalar_select %p170, %s14, 1
      %s172 = smul.addr %s171, 2
      %s173 = scalar_lea.vmem %s3, %s172
      %v175 = vld [vmem:[%s168] sm:$0xff]
      %v176 = vld [vmem:[%s168 + $0x8] sm:$0xff]
      %v177 = vld [vmem:[%s168 + $0x10] sm:$0xff]
      %v178 = vld [vmem:[%s168 + $0x18] sm:$0xff]
      %v179 = vld [vmem:[%s168 + $0x20] sm:$0xf]
      %v180 = vld [vmem:[%s168 + $0x24] sm:$0xff]
      %v181 = vld [vmem:[%s168 + $0x2c] sm:$0xff]
      %v182 = vld [vmem:[%s168 + $0x34] sm:$0xff]
      %v183 = vld [vmem:[%s168 + $0x3c] sm:$0xff]
      %v184 = vld [vmem:[%s168 + $0x44] sm:$0xf]
      %v185 = vld [vmem:[%s1] sm:$0xf]
      %v186 = vld [vmem:[%s1 + $0x4] sm:$0xf]
      %v187 = vld [vmem:[%s1 + $0x8] sm:$0xf]
      %v188 = vld [vmem:[%s1 + $0xc] sm:$0xf]
      %v189 = vld [vmem:[%s1 + $0x10] sm:$0xf]
      %v190 = vld [vmem:[%s1 + $0x14] sm:$0xf]
      %v191 = vld [vmem:[%s1 + $0x18] sm:$0xf]
      %v192 = vld [vmem:[%s1 + $0x1c] sm:$0xf]
      %v193 = vld [vmem:[%s1 + $0x20] sm:$0xf]
      %v194 = vld [vmem:[%s1 + $0x24] sm:$0xf]
      %v195 = vld [vmem:[%s1 + $0x28] sm:$0xf]
      %v196 = vld [vmem:[%s1 + $0x2c] sm:$0xf]
      %v197 = vld [vmem:[%s1 + $0x30] sm:$0xf]
      %v198 = vld [vmem:[%s1 + $0x34] sm:$0xf]
      %v199 = vld [vmem:[%s1 + $0x38] sm:$0xf]
      %v200 = vld [vmem:[%s1 + $0x3c] sm:$0xf]
      %v201 = vld [vmem:[%s1 + $0x40] sm:$0xf]
      %v202 = vld [vmem:[%s1 + $0x44] sm:$0xf]
      %v203 = vld [vmem:[%s1 + $0x48] sm:$0xf]
      %v204 = vld [vmem:[%s1 + $0x4c] sm:$0xf]
      %v205 = vld [vmem:[%s1 + $0x50] sm:$0xf]
      %v206 = vld [vmem:[%s1 + $0x54] sm:$0xf]
      %v207 = vld [vmem:[%s1 + $0x58] sm:$0xf]
      %v208 = vld [vmem:[%s1 + $0x5c] sm:$0xf]
      %v209 = vld [vmem:[%s1 + $0x60] sm:$0xf]
      %v210 = vld [vmem:[%s1 + $0x64] sm:$0xf]
      %v211 = vld [vmem:[%s1 + $0x68] sm:$0xf]
      %v212 = vld [vmem:[%s1 + $0x6c] sm:$0xf]
      %v213 = vld [vmem:[%s1 + $0x70] sm:$0xf]
      %v214 = vld [vmem:[%s1 + $0x74] sm:$0xf]
      %v215 = vld [vmem:[%s1 + $0x78] sm:$0xf]
      %v216 = vld [vmem:[%s1 + $0x7c] sm:$0xf]
      %v217 = vld [vmem:[%s1 + $0x80] sm:$0xf]
      %v218 = vld [vmem:[%s1 + $0x84] sm:$0xf]
      %v219 = vld [vmem:[%s1 + $0x88] sm:$0xf]
      %v220 = vld [vmem:[%s1 + $0x8c] sm:$0xf]
      %v221 = vld [vmem:[%s1 + $0x90] sm:$0xf]
      %v222 = vld [vmem:[%s1 + $0x94] sm:$0xf]
      %v223 = vld [vmem:[%s1 + $0x98] sm:$0xf]
      %v224 = vld [vmem:[%s1 + $0x9c] sm:$0xf]
      %v225 = vld [vmem:[%s1 + $0xa0] sm:$0xf]
      %v226 = vld [vmem:[%s1 + $0xa4] sm:$0xf]
      %v227 = vld [vmem:[%s1 + $0xa8] sm:$0xf]
      %v228 = vld [vmem:[%s1 + $0xac] sm:$0xf]
      %v229 = vld [vmem:[%s1 + $0xb0] sm:$0xf]
      %v230 = vld [vmem:[%s1 + $0xb4] sm:$0xf]
      %v231 = vld [vmem:[%s1 + $0xb8] sm:$0xf]
      %v232 = vld [vmem:[%s1 + $0xbc] sm:$0xf]
      %v233 = vld [vmem:[%s1 + $0xc0] sm:$0xf]
      %v234 = vld [vmem:[%s1 + $0xc4] sm:$0xf]
      %v235 = vld [vmem:[%s1 + $0xc8] sm:$0xf]
      %v236 = vld [vmem:[%s1 + $0xcc] sm:$0xf]
      %v237 = vld [vmem:[%s1 + $0xd0] sm:$0xf]
      %v238 = vld [vmem:[%s1 + $0xd4] sm:$0xf]
      %v239 = vld [vmem:[%s1 + $0xd8] sm:$0xf]
      %v240 = vld [vmem:[%s1 + $0xdc] sm:$0xf]
      %v241 = vld [vmem:[%s1 + $0xe0] sm:$0xf]
      %v242 = vld [vmem:[%s1 + $0xe4] sm:$0xf]
      %v243 = vld [vmem:[%s1 + $0xe8] sm:$0xf]
      %v244 = vld [vmem:[%s1 + $0xec] sm:$0xf]
      %v245 = vld [vmem:[%s1 + $0xf0] sm:$0xf]
      %v246 = vld [vmem:[%s1 + $0xf4] sm:$0xf]
      %v247 = vld [vmem:[%s1 + $0xf8] sm:$0xf]
      %v248 = vld [vmem:[%s1 + $0xfc] sm:$0xf]
      %v249 = vld [vmem:[%s1 + $0x100] sm:$0xf]
      %v250 = vld [vmem:[%s1 + $0x104] sm:$0xf]
      %v251 = vld [vmem:[%s1 + $0x108] sm:$0xf]
      %v252 = vld [vmem:[%s1 + $0x10c] sm:$0xf]
      %v253 = vld [vmem:[%s1 + $0x110] sm:$0xf]
      %v254 = vld [vmem:[%s1 + $0x114] sm:$0xf]
      %v255 = vld [vmem:[%s1 + $0x118] sm:$0xf]
      %v256 = vld [vmem:[%s1 + $0x11c] sm:$0xf]
      %v257 = vld [vmem:[%s1 + $0x120] sm:$0xf]
      %v258 = vld [vmem:[%s1 + $0x124] sm:$0xf]
      %v259 = vld [vmem:[%s1 + $0x128] sm:$0xf]
      %v260 = vld [vmem:[%s1 + $0x12c] sm:$0xf]
      %v261 = vld [vmem:[%s1 + $0x130] sm:$0xf]
      %v262 = vld [vmem:[%s1 + $0x134] sm:$0xf]
      %v263 = vld [vmem:[%s1 + $0x138] sm:$0xf]
      %v264 = vld [vmem:[%s1 + $0x13c] sm:$0xf]
      %v265 = vld [vmem:[%s1 + $0x140] sm:$0xf]
      %v266 = vld [vmem:[%s1 + $0x144] sm:$0xf]
      %v267 = vld [vmem:[%s1 + $0x148] sm:$0xf]
      %v268 = vld [vmem:[%s1 + $0x14c] sm:$0xf]
      %v269 = vld [vmem:[%s1 + $0x150] sm:$0xf]
      %v270 = vld [vmem:[%s1 + $0x154] sm:$0xf]
      %v271 = vld [vmem:[%s1 + $0x158] sm:$0xf]
      %v272 = vld [vmem:[%s1 + $0x15c] sm:$0xf]
      %v273 = vld [vmem:[%s1 + $0x160] sm:$0xf]
      %v274 = vld [vmem:[%s1 + $0x164] sm:$0xf]
      %v275 = vld [vmem:[%s1 + $0x168] sm:$0xf]
      %v276 = vld [vmem:[%s1 + $0x16c] sm:$0xf]
      %v277 = vld [vmem:[%s1 + $0x170] sm:$0xf]
      %v278 = vld [vmem:[%s1 + $0x174] sm:$0xf]
      %v279 = vld [vmem:[%s1 + $0x178] sm:$0xf]
      %v280 = vld [vmem:[%s1 + $0x17c] sm:$0xf]
      %v281 = vld [vmem:[%s1 + $0x180] sm:$0xf]
      %v282 = vld [vmem:[%s1 + $0x184] sm:$0xf]
      %v283 = vld [vmem:[%s1 + $0x188] sm:$0xf]
      %v284 = vld [vmem:[%s1 + $0x18c] sm:$0xf]
      %v285 = vld [vmem:[%s1 + $0x190] sm:$0xf]
      %v286 = vld [vmem:[%s1 + $0x194] sm:$0xf]
      %v287 = vld [vmem:[%s1 + $0x198] sm:$0xf]
      %v288 = vld [vmem:[%s1 + $0x19c] sm:$0xf]
      %v289 = vld [vmem:[%s1 + $0x1a0] sm:$0xf]
      %v290 = vld [vmem:[%s1 + $0x1a4] sm:$0xf]
      %v291 = vld [vmem:[%s1 + $0x1a8] sm:$0xf]
      %v292 = vld [vmem:[%s1 + $0x1ac] sm:$0xf]
      %v293 = vld [vmem:[%s1 + $0x1b0] sm:$0xf]
      %v294 = vld [vmem:[%s1 + $0x1b4] sm:$0xf]
      %v295 = vld [vmem:[%s1 + $0x1b8] sm:$0xf]
      %v296 = vld [vmem:[%s1 + $0x1bc] sm:$0xf]
      %v297 = vld [vmem:[%s1 + $0x1c0] sm:$0xf]
      %v298 = vld [vmem:[%s1 + $0x1c4] sm:$0xf]
      %v299 = vld [vmem:[%s1 + $0x1c8] sm:$0xf]
      %v300 = vld [vmem:[%s1 + $0x1cc] sm:$0xf]
      %v301 = vld [vmem:[%s1 + $0x1d0] sm:$0xf]
      %v302 = vld [vmem:[%s1 + $0x1d4] sm:$0xf]
      %v303 = vld [vmem:[%s1 + $0x1d8] sm:$0xf]
      %v304 = vld [vmem:[%s1 + $0x1dc] sm:$0xf]
      %v305 = vld [vmem:[%s1 + $0x1e0] sm:$0xf]
      %v306 = vld [vmem:[%s1 + $0x1e4] sm:$0xf]
      %v307 = vld [vmem:[%s1 + $0x1e8] sm:$0xf]
      %v308 = vld [vmem:[%s1 + $0x1ec] sm:$0xf]
      %v309 = vld [vmem:[%s1 + $0x1f0] sm:$0xf]
      %v310 = vld [vmem:[%s1 + $0x1f4] sm:$0xf]
      %v311 = vld [vmem:[%s1 + $0x1f8] sm:$0xf]
      %v312 = vld [vmem:[%s1 + $0x1fc] sm:$0xf]
      %v313 = vld [vmem:[%s1 + $0x200] sm:$0xf]
      %v314 = vld [vmem:[%s1 + $0x204] sm:$0xf]
      %v315 = vld [vmem:[%s1 + $0x208] sm:$0xf]
      %v316 = vld [vmem:[%s1 + $0x20c] sm:$0xf]
      %v317 = vld [vmem:[%s1 + $0x210] sm:$0xf]
      %v318 = vld [vmem:[%s1 + $0x214] sm:$0xf]
      %v319 = vld [vmem:[%s1 + $0x218] sm:$0xf]
      %v320 = vld [vmem:[%s1 + $0x21c] sm:$0xf]
      %v321 = vld [vmem:[%s1 + $0x220] sm:$0xf]
      %v322 = vld [vmem:[%s1 + $0x224] sm:$0xf]
      %v323 = vld [vmem:[%s1 + $0x228] sm:$0xf]
      %v324 = vld [vmem:[%s1 + $0x22c] sm:$0xf]
      %v325 = vld [vmem:[%s1 + $0x230] sm:$0xf]
      %v326 = vld [vmem:[%s1 + $0x234] sm:$0xf]
      %v327 = vld [vmem:[%s1 + $0x238] sm:$0xf]
      %v328 = vld [vmem:[%s1 + $0x23c] sm:$0xf]
      %v329 = vld [vmem:[%s2] sm:$0x1]
      %v331 = vlaneseq
      %v332 = vshrl.u32 %v331, 7
      %v333 = vsub.s32 0, %v332
      %v334 = vrot.slane %v329, %v333
      %v346 = vunpack.c.l.b16 %v175
      %v347 = vunpack.c.h.b16 %v175
      %v348 = vunpack.c.l.b16 %v176
      %v349 = vunpack.c.h.b16 %v176
      %v350 = vunpack.c.l.b16 %v177
      %v351 = vunpack.c.h.b16 %v177
      %v352 = vunpack.c.l.b16 %v178
      %v353 = vunpack.c.h.b16 %v178
      %v354 = vunpack.c.l.b16 %v179
      %v355 = vunpack.c.l.b16 %v180
      %v356 = vunpack.c.h.b16 %v180
      %v357 = vunpack.c.l.b16 %v181
      %v358 = vunpack.c.h.b16 %v181
      %v359 = vunpack.c.l.b16 %v182
      %v360 = vunpack.c.h.b16 %v182
      %v361 = vunpack.c.l.b16 %v183
      %v362 = vunpack.c.h.b16 %v183
      %v363 = vunpack.c.l.b16 %v184
      %v364 = vpack.c.b16 %v355, %v346
      %v365 = vpack.c.b16 %v356, %v347
      %v366 = vpack.c.b16 %v357, %v348
      %v367 = vpack.c.b16 %v358, %v349
      %v368 = vpack.c.b16 %v359, %v350
      %v369 = vpack.c.b16 %v360, %v351
      %v370 = vpack.c.b16 %v361, %v352
      %v371 = vpack.c.b16 %v362, %v353
      %v372 = vpack.c.b16 %v363, %v354
      %v526 = vunpack.c.l.b16 %v185
      %v527 = vunpack.c.l.b16 %v186
      %v528 = vunpack.c.l.b16 %v187
      %v529 = vunpack.c.l.b16 %v188
      %v530 = vunpack.c.l.b16 %v189
      %v531 = vunpack.c.l.b16 %v190
      %v532 = vunpack.c.l.b16 %v191
      %v533 = vunpack.c.l.b16 %v192
      %v534 = vunpack.c.l.b16 %v193
      %v535 = vunpack.c.l.b16 %v194
      %v536 = vunpack.c.l.b16 %v195
      %v537 = vunpack.c.l.b16 %v196
      %v538 = vunpack.c.l.b16 %v197
      %v539 = vunpack.c.l.b16 %v198
      %v540 = vunpack.c.l.b16 %v199
      %v541 = vunpack.c.l.b16 %v200
      %v542 = vunpack.c.l.b16 %v201
      %v543 = vunpack.c.l.b16 %v202
      %v544 = vunpack.c.l.b16 %v203
      %v545 = vunpack.c.l.b16 %v204
      %v546 = vunpack.c.l.b16 %v205
      %v547 = vunpack.c.l.b16 %v206
      %v548 = vunpack.c.l.b16 %v207
      %v549 = vunpack.c.l.b16 %v208
      %v550 = vunpack.c.l.b16 %v209
      %v551 = vunpack.c.l.b16 %v210
      %v552 = vunpack.c.l.b16 %v211
      %v553 = vunpack.c.l.b16 %v212
      %v554 = vunpack.c.l.b16 %v213
      %v555 = vunpack.c.l.b16 %v214
      %v556 = vunpack.c.l.b16 %v215
      %v557 = vunpack.c.l.b16 %v216
      %v558 = vunpack.c.l.b16 %v217
      %v559 = vunpack.c.l.b16 %v218
      %v560 = vunpack.c.l.b16 %v219
      %v561 = vunpack.c.l.b16 %v220
      %v562 = vunpack.c.l.b16 %v221
      %v563 = vunpack.c.l.b16 %v222
      %v564 = vunpack.c.l.b16 %v223
      %v565 = vunpack.c.l.b16 %v224
      %v566 = vunpack.c.l.b16 %v225
      %v567 = vunpack.c.l.b16 %v226
      %v568 = vunpack.c.l.b16 %v227
      %v569 = vunpack.c.l.b16 %v228
      %v570 = vunpack.c.l.b16 %v229
      %v571 = vunpack.c.l.b16 %v230
      %v572 = vunpack.c.l.b16 %v231
      %v573 = vunpack.c.l.b16 %v232
      %v574 = vunpack.c.l.b16 %v233
      %v575 = vunpack.c.l.b16 %v234
      %v576 = vunpack.c.l.b16 %v235
      %v577 = vunpack.c.l.b16 %v236
      %v578 = vunpack.c.l.b16 %v237
      %v579 = vunpack.c.l.b16 %v238
      %v580 = vunpack.c.l.b16 %v239
      %v581 = vunpack.c.l.b16 %v240
      %v582 = vunpack.c.l.b16 %v241
      %v583 = vunpack.c.l.b16 %v242
      %v584 = vunpack.c.l.b16 %v243
      %v585 = vunpack.c.l.b16 %v244
      %v586 = vunpack.c.l.b16 %v245
      %v587 = vunpack.c.l.b16 %v246
      %v588 = vunpack.c.l.b16 %v247
      %v589 = vunpack.c.l.b16 %v248
      %v590 = vunpack.c.l.b16 %v249
      %v591 = vunpack.c.l.b16 %v250
      %v592 = vunpack.c.l.b16 %v251
      %v593 = vunpack.c.l.b16 %v252
      %v594 = vunpack.c.l.b16 %v253
      %v595 = vunpack.c.l.b16 %v254
      %v596 = vunpack.c.l.b16 %v255
      %v597 = vunpack.c.l.b16 %v256
      %v598 = vunpack.c.l.b16 %v257
      %v599 = vunpack.c.l.b16 %v258
      %v600 = vunpack.c.l.b16 %v259
      %v601 = vunpack.c.l.b16 %v260
      %v602 = vunpack.c.l.b16 %v261
      %v603 = vunpack.c.l.b16 %v262
      %v604 = vunpack.c.l.b16 %v263
      %v605 = vunpack.c.l.b16 %v264
      %v606 = vunpack.c.l.b16 %v265
      %v607 = vunpack.c.l.b16 %v266
      %v608 = vunpack.c.l.b16 %v267
      %v609 = vunpack.c.l.b16 %v268
      %v610 = vunpack.c.l.b16 %v269
      %v611 = vunpack.c.l.b16 %v270
      %v612 = vunpack.c.l.b16 %v271
      %v613 = vunpack.c.l.b16 %v272
      %v614 = vunpack.c.l.b16 %v273
      %v615 = vunpack.c.l.b16 %v274
      %v616 = vunpack.c.l.b16 %v275
      %v617 = vunpack.c.l.b16 %v276
      %v618 = vunpack.c.l.b16 %v277
      %v619 = vunpack.c.l.b16 %v278
      %v620 = vunpack.c.l.b16 %v279
      %v621 = vunpack.c.l.b16 %v280
      %v622 = vunpack.c.l.b16 %v281
      %v623 = vunpack.c.l.b16 %v282
      %v624 = vunpack.c.l.b16 %v283
      %v625 = vunpack.c.l.b16 %v284
      %v626 = vunpack.c.l.b16 %v285
      %v627 = vunpack.c.l.b16 %v286
      %v628 = vunpack.c.l.b16 %v287
      %v629 = vunpack.c.l.b16 %v288
      %v630 = vunpack.c.l.b16 %v289
      %v631 = vunpack.c.l.b16 %v290
      %v632 = vunpack.c.l.b16 %v291
      %v633 = vunpack.c.l.b16 %v292
      %v634 = vunpack.c.l.b16 %v293
      %v635 = vunpack.c.l.b16 %v294
      %v636 = vunpack.c.l.b16 %v295
      %v637 = vunpack.c.l.b16 %v296
      %v638 = vunpack.c.l.b16 %v297
      %v639 = vunpack.c.l.b16 %v298
      %v640 = vunpack.c.l.b16 %v299
      %v641 = vunpack.c.l.b16 %v300
      %v642 = vunpack.c.l.b16 %v301
      %v643 = vunpack.c.l.b16 %v302
      %v644 = vunpack.c.l.b16 %v303
      %v645 = vunpack.c.l.b16 %v304
      %v646 = vunpack.c.l.b16 %v305
      %v647 = vunpack.c.l.b16 %v306
      %v648 = vunpack.c.l.b16 %v307
      %v649 = vunpack.c.l.b16 %v308
      %v650 = vunpack.c.l.b16 %v309
      %v651 = vunpack.c.l.b16 %v310
      %v652 = vunpack.c.l.b16 %v311
      %v653 = vunpack.c.l.b16 %v312
      %v654 = vunpack.c.l.b16 %v313
      %v655 = vunpack.c.l.b16 %v314
      %v656 = vunpack.c.l.b16 %v315
      %v657 = vunpack.c.l.b16 %v316
      %v658 = vunpack.c.l.b16 %v317
      %v659 = vunpack.c.l.b16 %v318
      %v660 = vunpack.c.l.b16 %v319
      %v661 = vunpack.c.l.b16 %v320
      %v662 = vunpack.c.l.b16 %v321
      %v663 = vunpack.c.l.b16 %v322
      %v664 = vunpack.c.l.b16 %v323
      %v665 = vunpack.c.l.b16 %v324
      %v666 = vunpack.c.l.b16 %v325
      %v667 = vunpack.c.l.b16 %v326
      %v668 = vunpack.c.l.b16 %v327
      %v669 = vunpack.c.l.b16 %v328
      %v670 = vpack.c.b16 %v527, %v526
      %v671 = vpack.c.b16 %v529, %v528
      %v672 = vpack.c.b16 %v531, %v530
      %v673 = vpack.c.b16 %v533, %v532
      %v674 = vpack.c.b16 %v535, %v534
      %v675 = vpack.c.b16 %v537, %v536
      %v676 = vpack.c.b16 %v539, %v538
      %v677 = vpack.c.b16 %v541, %v540
      %v678 = vpack.c.b16 %v543, %v542
      %v679 = vpack.c.b16 %v545, %v544
      %v680 = vpack.c.b16 %v547, %v546
      %v681 = vpack.c.b16 %v549, %v548
      %v682 = vpack.c.b16 %v551, %v550
      %v683 = vpack.c.b16 %v553, %v552
      %v684 = vpack.c.b16 %v555, %v554
      %v685 = vpack.c.b16 %v557, %v556
      %v686 = vpack.c.b16 %v559, %v558
      %v687 = vpack.c.b16 %v561, %v560
      %v688 = vpack.c.b16 %v563, %v562
      %v689 = vpack.c.b16 %v565, %v564
      %v690 = vpack.c.b16 %v567, %v566
      %v691 = vpack.c.b16 %v569, %v568
      %v692 = vpack.c.b16 %v571, %v570
      %v693 = vpack.c.b16 %v573, %v572
      %v694 = vpack.c.b16 %v575, %v574
      %v695 = vpack.c.b16 %v577, %v576
      %v696 = vpack.c.b16 %v579, %v578
      %v697 = vpack.c.b16 %v581, %v580
      %v698 = vpack.c.b16 %v583, %v582
      %v699 = vpack.c.b16 %v585, %v584
      %v700 = vpack.c.b16 %v587, %v586
      %v701 = vpack.c.b16 %v589, %v588
      %v702 = vpack.c.b16 %v591, %v590
      %v703 = vpack.c.b16 %v593, %v592
      %v704 = vpack.c.b16 %v595, %v594
      %v705 = vpack.c.b16 %v597, %v596
      %v706 = vpack.c.b16 %v599, %v598
      %v707 = vpack.c.b16 %v601, %v600
      %v708 = vpack.c.b16 %v603, %v602
      %v709 = vpack.c.b16 %v605, %v604
      %v710 = vpack.c.b16 %v607, %v606
      %v711 = vpack.c.b16 %v609, %v608
      %v712 = vpack.c.b16 %v611, %v610
      %v713 = vpack.c.b16 %v613, %v612
      %v714 = vpack.c.b16 %v615, %v614
      %v715 = vpack.c.b16 %v617, %v616
      %v716 = vpack.c.b16 %v619, %v618
      %v717 = vpack.c.b16 %v621, %v620
      %v718 = vpack.c.b16 %v623, %v622
      %v719 = vpack.c.b16 %v625, %v624
      %v720 = vpack.c.b16 %v627, %v626
      %v721 = vpack.c.b16 %v629, %v628
      %v722 = vpack.c.b16 %v631, %v630
      %v723 = vpack.c.b16 %v633, %v632
      %v724 = vpack.c.b16 %v635, %v634
      %v725 = vpack.c.b16 %v637, %v636
      %v726 = vpack.c.b16 %v639, %v638
      %v727 = vpack.c.b16 %v641, %v640
      %v728 = vpack.c.b16 %v643, %v642
      %v729 = vpack.c.b16 %v645, %v644
      %v730 = vpack.c.b16 %v647, %v646
      %v731 = vpack.c.b16 %v649, %v648
      %v732 = vpack.c.b16 %v651, %v650
      %v733 = vpack.c.b16 %v653, %v652
      %v734 = vpack.c.b16 %v655, %v654
      %v735 = vpack.c.b16 %v657, %v656
      %v736 = vpack.c.b16 %v659, %v658
      %v737 = vpack.c.b16 %v661, %v660
      %v738 = vpack.c.b16 %v663, %v662
      %v739 = vpack.c.b16 %v665, %v664
      %v740 = vpack.c.b16 %v667, %v666
      %v741 = vpack.c.b16 %v669, %v668
      %814 = vmatprep.subr.bf16.mxu0 0
      %815 = vmatpush1.bf16.msra.mxu0 %v670
      %816 = vmatprep.subr.bf16.mxu0 0
      %817 = vmatpush1.bf16.msra.mxu0 %v671
      %818 = vmatprep.subr.bf16.mxu0 0
      %819 = vmatpush1.bf16.msra.mxu0 %v672
      %820 = vmatprep.subr.bf16.mxu0 0
      %821 = vmatpush1.bf16.msra.mxu0 %v673
      %822 = vmatprep.subr.bf16.mxu0 0
      %823 = vmatpush1.bf16.msra.mxu0 %v674
      %824 = vmatprep.subr.bf16.mxu0 0
      %825 = vmatpush1.bf16.msra.mxu0 %v675
      %826 = vmatprep.subr.bf16.mxu0 0
      %827 = vmatpush1.bf16.msra.mxu0 %v676
      %828 = vmatprep.subr.bf16.mxu0 0
      %829 = vmatpush1.bf16.msra.mxu0 %v677
      %830 = vmatprep.subr.bf16.mxu0 0
      %831 = vmatpush1.bf16.msra.mxu0 %v678
      %832 = vmatprep.subr.bf16.mxu0 0
      %833 = vmatpush1.bf16.msra.mxu0 %v679
      %834 = vmatprep.subr.bf16.mxu0 0
      %835 = vmatpush1.bf16.msra.mxu0 %v680
      %836 = vmatprep.subr.bf16.mxu0 0
      %837 = vmatpush1.bf16.msra.mxu0 %v681
      %838 = vmatprep.subr.bf16.mxu0 0
      %839 = vmatpush1.bf16.msra.mxu0 %v682
      %840 = vmatprep.subr.bf16.mxu0 0
      %841 = vmatpush1.bf16.msra.mxu0 %v683
      %842 = vmatprep.subr.bf16.mxu0 0
      %843 = vmatpush1.bf16.msra.mxu0 %v684
      %844 = vmatprep.subr.bf16.mxu0 0
      %845 = vmatpush1.bf16.msra.mxu0 %v685
      %846 = vmatprep.mubr.bf16.mxu0 %v365
      %847 = vmatmul.mubr.bf16.gmra.mrb[0].mxu0 %v364
      %v848 = vpop.f32.mrb[0].mxu0
      %v849 = vadd.f32 %v334, %v848
      %v850 = vpop.f32.mrb[0].mxu0
      %v851 = vpop.f32.mrb[0].mxu0
      %v852 = vadd.f32 %v334, %v851
      %v853 = vpop.f32.mrb[0].mxu0
      %854 = vdwg.mxu0
      %855 = vmatprep.subr.bf16.mxu0 0
      %856 = vmatpush1.bf16.msra.mxu0 %v686
      %857 = vmatprep.subr.bf16.mxu0 0
      %858 = vmatpush1.bf16.msra.mxu0 %v687
      %859 = vmatprep.subr.bf16.mxu0 0
      %860 = vmatpush1.bf16.msra.mxu0 %v688
      %861 = vmatprep.subr.bf16.mxu0 0
      %862 = vmatpush1.bf16.msra.mxu0 %v689
      %863 = vmatprep.subr.bf16.mxu0 0
      %864 = vmatpush1.bf16.msra.mxu0 %v690
      %865 = vmatprep.subr.bf16.mxu0 0
      %866 = vmatpush1.bf16.msra.mxu0 %v691
      %867 = vmatprep.subr.bf16.mxu0 0
      %868 = vmatpush1.bf16.msra.mxu0 %v692
      %869 = vmatprep.subr.bf16.mxu0 0
      %870 = vmatpush1.bf16.msra.mxu0 %v693
      %871 = vmatprep.subr.bf16.mxu0 0
      %872 = vmatpush1.bf16.msra.mxu0 %v694
      %873 = vmatprep.subr.bf16.mxu0 0
      %874 = vmatpush1.bf16.msra.mxu0 %v695
      %875 = vmatprep.subr.bf16.mxu0 0
      %876 = vmatpush1.bf16.msra.mxu0 %v696
      %877 = vmatprep.subr.bf16.mxu0 0
      %878 = vmatpush1.bf16.msra.mxu0 %v697
      %879 = vmatprep.subr.bf16.mxu0 0
      %880 = vmatpush1.bf16.msra.mxu0 %v698
      %881 = vmatprep.subr.bf16.mxu0 0
      %882 = vmatpush1.bf16.msra.mxu0 %v699
      %883 = vmatprep.subr.bf16.mxu0 0
      %884 = vmatpush1.bf16.msra.mxu0 %v700
      %885 = vmatprep.subr.bf16.mxu0 0
      %886 = vmatpush1.bf16.msra.mxu0 %v701
      %887 = vmatprep.mubr.bf16.mxu0 %v367
      %888 = vmatmul.mubr.bf16.gmra.mrb[0].mxu0 %v366
      %v889 = vpop.f32.mrb[0].mxu0
      %v890 = vadd.f32 %v849, %v889
      %v891 = vpop.f32.mrb[0].mxu0
      %v892 = vpop.f32.mrb[0].mxu0
      %v893 = vadd.f32 %v852, %v892
      %v894 = vpop.f32.mrb[0].mxu0
      %895 = vdwg.mxu0
      %896 = vmatprep.subr.bf16.mxu0 0
      %897 = vmatpush1.bf16.msra.mxu0 %v702
      %898 = vmatprep.subr.bf16.mxu0 0
      %899 = vmatpush1.bf16.msra.mxu0 %v703
      %900 = vmatprep.subr.bf16.mxu0 0
      %901 = vmatpush1.bf16.msra.mxu0 %v704
      %902 = vmatprep.subr.bf16.mxu0 0
      %903 = vmatpush1.bf16.msra.mxu0 %v705
      %904 = vmatprep.subr.bf16.mxu0 0
      %905 = vmatpush1.bf16.msra.mxu0 %v706
      %906 = vmatprep.subr.bf16.mxu0 0
      %907 = vmatpush1.bf16.msra.mxu0 %v707
      %908 = vmatprep.subr.bf16.mxu0 0
      %909 = vmatpush1.bf16.msra.mxu0 %v708
      %910 = vmatprep.subr.bf16.mxu0 0
      %911 = vmatpush1.bf16.msra.mxu0 %v709
      %912 = vmatprep.subr.bf16.mxu0 0
      %913 = vmatpush1.bf16.msra.mxu0 %v710
      %914 = vmatprep.subr.bf16.mxu0 0
      %915 = vmatpush1.bf16.msra.mxu0 %v711
      %916 = vmatprep.subr.bf16.mxu0 0
      %917 = vmatpush1.bf16.msra.mxu0 %v712
      %918 = vmatprep.subr.bf16.mxu0 0
      %919 = vmatpush1.bf16.msra.mxu0 %v713
      %920 = vmatprep.subr.bf16.mxu0 0
      %921 = vmatpush1.bf16.msra.mxu0 %v714
      %922 = vmatprep.subr.bf16.mxu0 0
      %923 = vmatpush1.bf16.msra.mxu0 %v715
      %924 = vmatprep.subr.bf16.mxu0 0
      %925 = vmatpush1.bf16.msra.mxu0 %v716
      %926 = vmatprep.subr.bf16.mxu0 0
      %927 = vmatpush1.bf16.msra.mxu0 %v717
      %928 = vmatprep.mubr.bf16.mxu0 %v369
      %929 = vmatmul.mubr.bf16.gmra.mrb[0].mxu0 %v368
      %v930 = vpop.f32.mrb[0].mxu0
      %v931 = vadd.f32 %v890, %v930
      %v932 = vpop.f32.mrb[0].mxu0
      %v933 = vpop.f32.mrb[0].mxu0
      %v934 = vadd.f32 %v893, %v933
      %v935 = vpop.f32.mrb[0].mxu0
      %936 = vdwg.mxu0
      %937 = vmatprep.subr.bf16.mxu0 0
      %938 = vmatpush1.bf16.msra.mxu0 %v718
      %939 = vmatprep.subr.bf16.mxu0 0
      %940 = vmatpush1.bf16.msra.mxu0 %v719
      %941 = vmatprep.subr.bf16.mxu0 0
      %942 = vmatpush1.bf16.msra.mxu0 %v720
      %943 = vmatprep.subr.bf16.mxu0 0
      %944 = vmatpush1.bf16.msra.mxu0 %v721
      %945 = vmatprep.subr.bf16.mxu0 0
      %946 = vmatpush1.bf16.msra.mxu0 %v722
      %947 = vmatprep.subr.bf16.mxu0 0
      %948 = vmatpush1.bf16.msra.mxu0 %v723
      %949 = vmatprep.subr.bf16.mxu0 0
      %950 = vmatpush1.bf16.msra.mxu0 %v724
      %951 = vmatprep.subr.bf16.mxu0 0
      %952 = vmatpush1.bf16.msra.mxu0 %v725
      %953 = vmatprep.subr.bf16.mxu0 0
      %954 = vmatpush1.bf16.msra.mxu0 %v726
      %955 = vmatprep.subr.bf16.mxu0 0
      %956 = vmatpush1.bf16.msra.mxu0 %v727
      %957 = vmatprep.subr.bf16.mxu0 0
      %958 = vmatpush1.bf16.msra.mxu0 %v728
      %959 = vmatprep.subr.bf16.mxu0 0
      %960 = vmatpush1.bf16.msra.mxu0 %v729
      %961 = vmatprep.subr.bf16.mxu0 0
      %962 = vmatpush1.bf16.msra.mxu0 %v730
      %963 = vmatprep.subr.bf16.mxu0 0
      %964 = vmatpush1.bf16.msra.mxu0 %v731
      %965 = vmatprep.subr.bf16.mxu0 0
      %966 = vmatpush1.bf16.msra.mxu0 %v732
      %967 = vmatprep.subr.bf16.mxu0 0
      %968 = vmatpush1.bf16.msra.mxu0 %v733
      %969 = vmatprep.mubr.bf16.mxu0 %v371
      %970 = vmatmul.mubr.bf16.gmra.mrb[0].mxu0 %v370
      %v971 = vpop.f32.mrb[0].mxu0
      %v972 = vadd.f32 %v931, %v971
      %v973 = vpop.f32.mrb[0].mxu0
      %v974 = vpop.f32.mrb[0].mxu0
      %v975 = vadd.f32 %v934, %v974
      %v976 = vpop.f32.mrb[0].mxu0
      %977 = vdwg.mxu0
      %978 = vmatprep.subr.bf16.mxu0 0
      %979 = vmatpush1.bf16.msra.mxu0 %v734
      %980 = vmatprep.subr.bf16.mxu0 0
      %981 = vmatpush1.bf16.msra.mxu0 %v735
      %982 = vmatprep.subr.bf16.mxu0 0
      %983 = vmatpush1.bf16.msra.mxu0 %v736
      %984 = vmatprep.subr.bf16.mxu0 0
      %985 = vmatpush1.bf16.msra.mxu0 %v737
      %986 = vmatprep.subr.bf16.mxu0 0
      %987 = vmatpush1.bf16.msra.mxu0 %v738
      %988 = vmatprep.subr.bf16.mxu0 0
      %989 = vmatpush1.bf16.msra.mxu0 %v739
      %990 = vmatprep.subr.bf16.mxu0 0
      %991 = vmatpush1.bf16.msra.mxu0 %v740
      %992 = vmatprep.subr.bf16.mxu0 0
      %993 = vmatpush1.bf16.msra.mxu0 %v741
      %994 = vmatprep.subr.bf16.mxu0 0
      %995 = vmatpush1.bf16.msra.mxu0 0
      %996 = vmatprep.subr.bf16.mxu0 0
      %997 = vmatpush1.bf16.msra.mxu0 0
      %998 = vmatprep.subr.bf16.mxu0 0
      %999 = vmatpush1.bf16.msra.mxu0 0
      %1000 = vmatprep.subr.bf16.mxu0 0
      %1001 = vmatpush1.bf16.msra.mxu0 0
      %1002 = vmatprep.subr.bf16.mxu0 0
      %1003 = vmatpush1.bf16.msra.mxu0 0
      %1004 = vmatprep.subr.bf16.mxu0 0
      %1005 = vmatpush1.bf16.msra.mxu0 0
      %1006 = vmatprep.subr.bf16.mxu0 0
      %1007 = vmatpush1.bf16.msra.mxu0 0
      %1008 = vmatprep.subr.bf16.mxu0 0
      %1009 = vmatpush1.bf16.msra.mxu0 0
      %1010 = vmatprep.mubr.bf16.mxu0 0
      %1011 = vmatmul.mubr.bf16.gmra.mrb[0].mxu0 %v372
      %v1012 = vpop.f32.mrb[0].mxu0
      %v1013 = vadd.f32 %v972, %v1012
      %v1014 = vpop.f32.mrb[0].mxu0
      %v1015 = vpop.f32.mrb[0].mxu0
      %v1016 = vadd.f32 %v975, %v1015
      %v1017 = vpop.f32.mrb[0].mxu0
      %1018 = vdwg.mxu0
      %v1019 = vmax.f32 %v1013, 0.0
      %v1020 = vmax.f32 %v1016, 0.0
      %v1023 = vunpack.c.l.s4 1983009808
      %v1024 = vunpack.c.0.s8 %v1023
      %v1025 = vlaneseq
      %v1026 = vshrl.u32 %v1025, 7
      %v1027 = vsub.s32 %v1024, %v1026
      %v1028 = vrot.slane %v1019, %v1027
      %v1029 = vcombine.high %v1028, %v1028
      %v1032 = vcombine.high %v1019, %v1019
      %v1034 = vunpack.c.l.s4 1983009808
      %v1035 = vunpack.c.0.s8 %v1034
      %v1036 = vlaneseq
      %v1037 = vshrl.u32 %v1036, 7
      %v1038 = vsub.s32 %v1035, %v1037
      %v1039 = vrot.slane %v1032, %v1038
      %v1040 = vcombine.high %v1039, %v1039
      %v1045 = vunpack.c.l.s4 1983009808
      %v1046 = vunpack.c.0.s8 %v1045
      %v1047 = vlaneseq
      %v1048 = vshrl.u32 %v1047, 7
      %v1049 = vsub.s32 %v1046, %v1048
      %v1050 = vrot.slane %v1020, %v1049
      %v1051 = vcombine.high %v1050, %v1050
      %v1054 = vcombine.high %v1020, %v1020
      %v1056 = vunpack.c.l.s4 1983009808
      %v1057 = vunpack.c.0.s8 %v1056
      %v1058 = vlaneseq
      %v1059 = vshrl.u32 %v1058, 7
      %v1060 = vsub.s32 %v1057, %v1059
      %v1061 = vrot.slane %v1054, %v1060
      %v1062 = vcombine.high %v1061, %v1061
      %v1065 = vmax.f32 %v1028, 0.0
      %v1066 = vmax.f32 %v1050, %v1029
      %v1067 = vmax.f32 %v1065, %v1050
      %v1068 = vmax.f32 %v1066, %v1051
      %v1069 = vmax.f32 %v1039, 0.0
      %v1070 = vmax.f32 %v1061, %v1040
      %v1071 = vmax.f32 %v1069, %v1061
      %v1072 = vmax.f32 %v1070, %v1062
      %v1075 = vrot.slane %v1071, 7
      %v1076 = vrot.slane %v1072, 7
      %vm1079 = vcmask 1040384
      %v1080 = vsel %vm1079, 0.0, %v1075
      %v1081 = vsel %vm1079, 0.0, %v1076
      %v1082 = vmax.f32 %v1080, %v1067
      %v1083 = vmax.f32 %v1081, %v1068
      %v1084 = vmax.f32 %v1082, %v1071
      %v1085 = vmax.f32 %v1083, %v1072
      %v1086 = vpack.c.bf16 %v1084, %v1084
      %v1087 = vpack.c.bf16 %v1085, %v1085
      %1088 = vst [vmem:[%s173] sm:$0x1] %v1086
      %1089 = vst [vmem:[%s173 + $0x1] sm:$0x1] %v1087
      %p1090 = scmp.lt.s32.totalorder %s14, 1
      %s1091 = scalar_select %p1090, %s14, 1
      %s1092 = smul.addr %s1091, 2
      %s1093 = scalar_lea.vmem %s3, %s1092
      // Predicated region
      $region33: #{_lambda_.6} parent=31 // pred_check
        %p1094 = pneg %p100
      $region34: #{_lambda_.6} parent=31 // pred_check_branch
        %1096 = sbr.rel (%p1094) target = $region36
      $region35: #{_lambda_.6} parent=31 // pred_region
        _
      $region36: #{_lambda_.6} parent=31 // pred_fallthru
        _
    $region32: #{_lambda_.6} parent=5 // pred_fallthru
      _
    %p1097 = scmp.le.s32.totalorder 2, %s9
    // Predicated region
    $region37: #{_lambda_.6} parent=5 // pred_check
      %p1098 = pneg %p1097
    $region38: #{_lambda_.6} parent=5 // pred_check_branch
      %1100 = sbr.rel (%p1098) target = $region40
    $region39: #{_lambda_.6} parent=5 // pred_region
      %s1101 = ssub.s32 %s9, 2
      // Predicated region
      $region41: #{_lambda_.6} parent=39 // pred_check
        %p1102 = pneg %p106
      $region42: #{_lambda_.6} parent=39 // pred_check_branch
        %1104 = sbr.rel (%p1102) target = $region44
      $region43: #{_lambda_.6} parent=39 // pred_region
        %p1105 = scmp.lt.s32.totalorder %s15, 1
        %s1106 = scalar_select %p1105, %s15, 1
        %s1107 = smul.addr %s1106, 2
        %s1108 = scalar_lea.vmem %s3, %s1107
      $region44: #{_lambda_.6} parent=39 // pred_fallthru
        _
    $region40: #{_lambda_.6} parent=5 // pred_fallthru
      _
  $region6: #{_lambda_.6} parent=0 // loop_footer
    %s13 = sadd.s32 1, %s9
  $region7: #{_lambda_.6} parent=0 // loop_footer_branch
    %8 = sbr.rel target = $region3
  $region8: #{_lambda_.6} parent=0 // loop_exit
    _

// kernel: _lambda_.7
$region0: #{_lambda_.7}
  #allocation0 [shape = 'u32[]', space=smem, size = 0x4, offset = 0x4, fixed_abs, tag = 'smem constant byte address 0x4 - core index']
  #allocation1 [shape = 'u32[144,128]{1,0:T(1,128)}', space=vmem, size = 0x12000, scoped, tag = 'internal scratch']
  %s0 = inlined_call_operand.vmem [shape: bf16[8,1152], index: 0, kind: input, shape index: {}]
  %s1 = inlined_call_operand.vmem [shape: bf16[1152,128], index: 1, kind: input, shape index: {}]
  %s2 = inlined_call_operand.vmem [shape: f32[1,128], index: 2, kind: input, shape index: {}]
  %s3 = inlined_call_operand.vmem [shape: bf16[128,128], index: 3, kind: input, shape index: {}]
  %s4 = inlined_call_operand.vmem [shape: f32[1,128], index: 4, kind: input, shape index: {}]
  %s5 = inlined_call_operand.vmem [shape: bf16[128,128], index: 5, kind: input, shape index: {}]
  %s6 = inlined_call_operand.vmem [shape: f32[1,128], index: 6, kind: input, shape index: {}]
  %s7 = inlined_call_operand.vmem [shape: bf16[128,128], index: 7, kind: input, shape index: {}]
  %s8 = inlined_call_operand.vmem [shape: f32[1,128], index: 8, kind: input, shape index: {}]
  %s9 = inlined_call_operand.hbm [shape: f32[2,128], index: 9, kind: output, shape index: {}]
  %s10 = sld [smem:[#allocation0]]
  $region46: #{_lambda_.7} parent=0
    _
  %s12 = ssub.s32 1, %s10
  %s13 = scalar_select 0, %s12, %s10
  $region1: #{_lambda_.7} parent=0
    #allocation2 [shape = 'u8[1024]{0}', space=vmem, size = 0x400, scoped, tag = 'output window, operand 0, single buffered']
    #allocation3 [shape = 's32[1]{0}', space=sflag, size = 0x4, scoped, tag = 'scoped memory for _lambda_.7']
    %14 = vsyncpa [#allocation3], 0
    // Predicated region
    $region2: #{_lambda_.7} parent=1 // pred_check
      _
    $region3: #{_lambda_.7} parent=1 // pred_check_branch
      %16 = sbr.rel (0) target = $region5
    $region4: #{_lambda_.7} parent=1 // pred_region
      _
    $region5: #{_lambda_.7} parent=1 // pred_fallthru
      _
    // Predicated region
    $region6: #{_lambda_.7} parent=1 // pred_check
      _
    $region7: #{_lambda_.7} parent=1 // pred_check_branch
      %18 = sbr.rel (0) target = $region9
    $region8: #{_lambda_.7} parent=1 // pred_region
      _
    $region9: #{_lambda_.7} parent=1 // pred_fallthru
      _
    // Predicated region
    $region10: #{_lambda_.7} parent=1 // pred_check
      _
    $region11: #{_lambda_.7} parent=1 // pred_check_branch
      %20 = sbr.rel (0) target = $region13
    $region12: #{_lambda_.7} parent=1 // pred_region
      _
    $region13: #{_lambda_.7} parent=1 // pred_fallthru
      _
    // Predicated region
    $region14: #{_lambda_.7} parent=1 // pred_check
      _
    $region15: #{_lambda_.7} parent=1 // pred_check_branch
      %22 = sbr.rel (0) target = $region17
    $region16: #{_lambda_.7} parent=1 // pred_region
      _
    $region17: #{_lambda_.7} parent=1 // pred_fallthru
      _
    // Predicated region
    $region18: #{_lambda_.7} parent=1 // pred_check
      _
    $region19: #{_lambda_.7} parent=1 // pred_check_branch
      %24 = sbr.rel (0) target = $region21
    $region20: #{_lambda_.7} parent=1 // pred_region
      _
    $region21: #{_lambda_.7} parent=1 // pred_fallthru
      _
    // Predicated region
    $region22: #{_lambda_.7} parent=1 // pred_check
      _
    $region23: #{_lambda_.7} parent=1 // pred_check_branch
      %26 = sbr.rel (0) target = $region25
    $region24: #{_lambda_.7} parent=1 // pred_region
      _
    $region25: #{_lambda_.7} parent=1 // pred_fallthru
      _
    // Predicated region
    $region26: #{_lambda_.7} parent=1 // pred_check
      _
    $region27: #{_lambda_.7} parent=1 // pred_check_branch
      %28 = sbr.rel (0) target = $region29
    $region28: #{_lambda_.7} parent=1 // pred_region
      _
    $region29: #{_lambda_.7} parent=1 // pred_fallthru
      _
    // Predicated region
    $region30: #{_lambda_.7} parent=1 // pred_check
      _
    $region31: #{_lambda_.7} parent=1 // pred_check_branch
      %30 = sbr.rel (0) target = $region33
    $region32: #{_lambda_.7} parent=1 // pred_region
      _
    $region33: #{_lambda_.7} parent=1 // pred_fallthru
      _
    // Predicated region
    $region34: #{_lambda_.7} parent=1 // pred_check
      _
    $region35: #{_lambda_.7} parent=1 // pred_check_branch
      %32 = sbr.rel (0) target = $region37
    $region36: #{_lambda_.7} parent=1 // pred_region
      _
    $region37: #{_lambda_.7} parent=1 // pred_fallthru
      _
    %v34 = vld [vmem:[%s0] sm:$0xff]
    %v35 = vld [vmem:[%s0 + $0x8] sm:$0xff]
    %v36 = vld [vmem:[%s0 + $0x10] sm:$0xff]
    %v37 = vld [vmem:[%s0 + $0x18] sm:$0xff]
    %v38 = vld [vmem:[%s0 + $0x20] sm:$0xf]
    %v39 = vld [vmem:[%s1] sm:$0xf]
    %v40 = vld [vmem:[%s1 + $0x4] sm:$0xf]
    %v41 = vld [vmem:[%s1 + $0x8] sm:$0xf]
    %v42 = vld [vmem:[%s1 + $0xc] sm:$0xf]
    %v43 = vld [vmem:[%s1 + $0x10] sm:$0xf]
    %v44 = vld [vmem:[%s1 + $0x14] sm:$0xf]
    %v45 = vld [vmem:[%s1 + $0x18] sm:$0xf]
    %v46 = vld [vmem:[%s1 + $0x1c] sm:$0xf]
    %v47 = vld [vmem:[%s1 + $0x20] sm:$0xf]
    %v48 = vld [vmem:[%s1 + $0x24] sm:$0xf]
    %v49 = vld [vmem:[%s1 + $0x28] sm:$0xf]
    %v50 = vld [vmem:[%s1 + $0x2c] sm:$0xf]
    %v51 = vld [vmem:[%s1 + $0x30] sm:$0xf]
    %v52 = vld [vmem:[%s1 + $0x34] sm:$0xf]
    %v53 = vld [vmem:[%s1 + $0x38] sm:$0xf]
    %v54 = vld [vmem:[%s1 + $0x3c] sm:$0xf]
    %v55 = vld [vmem:[%s1 + $0x40] sm:$0xf]
    %v56 = vld [vmem:[%s1 + $0x44] sm:$0xf]
    %v57 = vld [vmem:[%s1 + $0x48] sm:$0xf]
    %v58 = vld [vmem:[%s1 + $0x4c] sm:$0xf]
    %v59 = vld [vmem:[%s1 + $0x50] sm:$0xf]
    %v60 = vld [vmem:[%s1 + $0x54] sm:$0xf]
    %v61 = vld [vmem:[%s1 + $0x58] sm:$0xf]
    %v62 = vld [vmem:[%s1 + $0x5c] sm:$0xf]
    %v63 = vld [vmem:[%s1 + $0x60] sm:$0xf]
    %v64 = vld [vmem:[%s1 + $0x64] sm:$0xf]
    %v65 = vld [vmem:[%s1 + $0x68] sm:$0xf]
    %v66 = vld [vmem:[%s1 + $0x6c] sm:$0xf]
    %v67 = vld [vmem:[%s1 + $0x70] sm:$0xf]
    %v68 = vld [vmem:[%s1 + $0x74] sm:$0xf]
    %v69 = vld [vmem:[%s1 + $0x78] sm:$0xf]
    %v70 = vld [vmem:[%s1 + $0x7c] sm:$0xf]
    %v71 = vld [vmem:[%s1 + $0x80] sm:$0xf]
    %v72 = vld [vmem:[%s1 + $0x84] sm:$0xf]
    %v73 = vld [vmem:[%s1 + $0x88] sm:$0xf]
    %v74 = vld [vmem:[%s1 + $0x8c] sm:$0xf]
    %v75 = vld [vmem:[%s1 + $0x90] sm:$0xf]
    %v76 = vld [vmem:[%s1 + $0x94] sm:$0xf]
    %v77 = vld [vmem:[%s1 + $0x98] sm:$0xf]
    %v78 = vld [vmem:[%s1 + $0x9c] sm:$0xf]
    %v79 = vld [vmem:[%s1 + $0xa0] sm:$0xf]
    %v80 = vld [vmem:[%s1 + $0xa4] sm:$0xf]
    %v81 = vld [vmem:[%s1 + $0xa8] sm:$0xf]
    %v82 = vld [vmem:[%s1 + $0xac] sm:$0xf]
    %v83 = vld [vmem:[%s1 + $0xb0] sm:$0xf]
    %v84 = vld [vmem:[%s1 + $0xb4] sm:$0xf]
    %v85 = vld [vmem:[%s1 + $0xb8] sm:$0xf]
    %v86 = vld [vmem:[%s1 + $0xbc] sm:$0xf]
    %v87 = vld [vmem:[%s1 + $0xc0] sm:$0xf]
    %v88 = vld [vmem:[%s1 + $0xc4] sm:$0xf]
    %v89 = vld [vmem:[%s1 + $0xc8] sm:$0xf]
    %v90 = vld [vmem:[%s1 + $0xcc] sm:$0xf]
    %v91 = vld [vmem:[%s1 + $0xd0] sm:$0xf]
    %v92 = vld [vmem:[%s1 + $0xd4] sm:$0xf]
    %v93 = vld [vmem:[%s1 + $0xd8] sm:$0xf]
    %v94 = vld [vmem:[%s1 + $0xdc] sm:$0xf]
    %v95 = vld [vmem:[%s1 + $0xe0] sm:$0xf]
    %v96 = vld [vmem:[%s1 + $0xe4] sm:$0xf]
    %v97 = vld [vmem:[%s1 + $0xe8] sm:$0xf]
    %v98 = vld [vmem:[%s1 + $0xec] sm:$0xf]
    %v99 = vld [vmem:[%s1 + $0xf0] sm:$0xf]
    %v100 = vld [vmem:[%s1 + $0xf4] sm:$0xf]
    %v101 = vld [vmem:[%s1 + $0xf8] sm:$0xf]
    %v102 = vld [vmem:[%s1 + $0xfc] sm:$0xf]
    %v103 = vld [vmem:[%s1 + $0x100] sm:$0xf]
    %v104 = vld [vmem:[%s1 + $0x104] sm:$0xf]
    %v105 = vld [vmem:[%s1 + $0x108] sm:$0xf]
    %v106 = vld [vmem:[%s1 + $0x10c] sm:$0xf]
    %v107 = vld [vmem:[%s1 + $0x110] sm:$0xf]
    %v108 = vld [vmem:[%s1 + $0x114] sm:$0xf]
    %v109 = vld [vmem:[%s1 + $0x118] sm:$0xf]
    %v110 = vld [vmem:[%s1 + $0x11c] sm:$0xf]
    %v111 = vld [vmem:[%s1 + $0x120] sm:$0xf]
    %v112 = vld [vmem:[%s1 + $0x124] sm:$0xf]
    %v113 = vld [vmem:[%s1 + $0x128] sm:$0xf]
    %v114 = vld [vmem:[%s1 + $0x12c] sm:$0xf]
    %v115 = vld [vmem:[%s1 + $0x130] sm:$0xf]
    %v116 = vld [vmem:[%s1 + $0x134] sm:$0xf]
    %v117 = vld [vmem:[%s1 + $0x138] sm:$0xf]
    %v118 = vld [vmem:[%s1 + $0x13c] sm:$0xf]
    %v119 = vld [vmem:[%s1 + $0x140] sm:$0xf]
    %v120 = vld [vmem:[%s1 + $0x144] sm:$0xf]
    %v121 = vld [vmem:[%s1 + $0x148] sm:$0xf]
    %v122 = vld [vmem:[%s1 + $0x14c] sm:$0xf]
    %v123 = vld [vmem:[%s1 + $0x150] sm:$0xf]
    %v124 = vld [vmem:[%s1 + $0x154] sm:$0xf]
    %v125 = vld [vmem:[%s1 + $0x158] sm:$0xf]
    %v126 = vld [vmem:[%s1 + $0x15c] sm:$0xf]
    %v127 = vld [vmem:[%s1 + $0x160] sm:$0xf]
    %v128 = vld [vmem:[%s1 + $0x164] sm:$0xf]
    %v129 = vld [vmem:[%s1 + $0x168] sm:$0xf]
    %v130 = vld [vmem:[%s1 + $0x16c] sm:$0xf]
    %v131 = vld [vmem:[%s1 + $0x170] sm:$0xf]
    %v132 = vld [vmem:[%s1 + $0x174] sm:$0xf]
    %v133 = vld [vmem:[%s1 + $0x178] sm:$0xf]
    %v134 = vld [vmem:[%s1 + $0x17c] sm:$0xf]
    %v135 = vld [vmem:[%s1 + $0x180] sm:$0xf]
    %v136 = vld [vmem:[%s1 + $0x184] sm:$0xf]
    %v137 = vld [vmem:[%s1 + $0x188] sm:$0xf]
    %v138 = vld [vmem:[%s1 + $0x18c] sm:$0xf]
    %v139 = vld [vmem:[%s1 + $0x190] sm:$0xf]
    %v140 = vld [vmem:[%s1 + $0x194] sm:$0xf]
    %v141 = vld [vmem:[%s1 + $0x198] sm:$0xf]
    %v142 = vld [vmem:[%s1 + $0x19c] sm:$0xf]
    %v143 = vld [vmem:[%s1 + $0x1a0] sm:$0xf]
    %v144 = vld [vmem:[%s1 + $0x1a4] sm:$0xf]
    %v145 = vld [vmem:[%s1 + $0x1a8] sm:$0xf]
    %v146 = vld [vmem:[%s1 + $0x1ac] sm:$0xf]
    %v147 = vld [vmem:[%s1 + $0x1b0] sm:$0xf]
    %v148 = vld [vmem:[%s1 + $0x1b4] sm:$0xf]
    %v149 = vld [vmem:[%s1 + $0x1b8] sm:$0xf]
    %v150 = vld [vmem:[%s1 + $0x1bc] sm:$0xf]
    %v151 = vld [vmem:[%s1 + $0x1c0] sm:$0xf]
    %v152 = vld [vmem:[%s1 + $0x1c4] sm:$0xf]
    %v153 = vld [vmem:[%s1 + $0x1c8] sm:$0xf]
    %v154 = vld [vmem:[%s1 + $0x1cc] sm:$0xf]
    %v155 = vld [vmem:[%s1 + $0x1d0] sm:$0xf]
    %v156 = vld [vmem:[%s1 + $0x1d4] sm:$0xf]
    %v157 = vld [vmem:[%s1 + $0x1d8] sm:$0xf]
    %v158 = vld [vmem:[%s1 + $0x1dc] sm:$0xf]
    %v159 = vld [vmem:[%s1 + $0x1e0] sm:$0xf]
    %v160 = vld [vmem:[%s1 + $0x1e4] sm:$0xf]
    %v161 = vld [vmem:[%s1 + $0x1e8] sm:$0xf]
    %v162 = vld [vmem:[%s1 + $0x1ec] sm:$0xf]
    %v163 = vld [vmem:[%s1 + $0x1f0] sm:$0xf]
    %v164 = vld [vmem:[%s1 + $0x1f4] sm:$0xf]
    %v165 = vld [vmem:[%s1 + $0x1f8] sm:$0xf]
    %v166 = vld [vmem:[%s1 + $0x1fc] sm:$0xf]
    %v167 = vld [vmem:[%s1 + $0x200] sm:$0xf]
    %v168 = vld [vmem:[%s1 + $0x204] sm:$0xf]
    %v169 = vld [vmem:[%s1 + $0x208] sm:$0xf]
    %v170 = vld [vmem:[%s1 + $0x20c] sm:$0xf]
    %v171 = vld [vmem:[%s1 + $0x210] sm:$0xf]
    %v172 = vld [vmem:[%s1 + $0x214] sm:$0xf]
    %v173 = vld [vmem:[%s1 + $0x218] sm:$0xf]
    %v174 = vld [vmem:[%s1 + $0x21c] sm:$0xf]
    %v175 = vld [vmem:[%s1 + $0x220] sm:$0xf]
    %v176 = vld [vmem:[%s1 + $0x224] sm:$0xf]
    %v177 = vld [vmem:[%s1 + $0x228] sm:$0xf]
    %v178 = vld [vmem:[%s1 + $0x22c] sm:$0xf]
    %v179 = vld [vmem:[%s1 + $0x230] sm:$0xf]
    %v180 = vld [vmem:[%s1 + $0x234] sm:$0xf]
    %v181 = vld [vmem:[%s1 + $0x238] sm:$0xf]
    %v182 = vld [vmem:[%s1 + $0x23c] sm:$0xf]
    %v183 = vld [vmem:[%s2] sm:$0x1]
    %v185 = vlaneseq
    %v186 = vshrl.u32 %v185, 7
    %v187 = vsub.s32 0, %v186
    %v188 = vrot.slane %v183, %v187
    %v195 = vunpack.c.l.b16 %v34
    %v196 = vunpack.c.h.b16 %v34
    %v197 = vunpack.c.l.b16 %v35
    %v198 = vunpack.c.h.b16 %v35
    %v199 = vunpack.c.l.b16 %v36
    %v200 = vunpack.c.h.b16 %v36
    %v201 = vunpack.c.l.b16 %v37
    %v202 = vunpack.c.h.b16 %v37
    %v203 = vunpack.c.l.b16 %v38
    %v204 = vpack.c.b16 %v195, %v195
    %v205 = vpack.c.b16 %v196, %v196
    %v206 = vpack.c.b16 %v197, %v197
    %v207 = vpack.c.b16 %v198, %v198
    %v208 = vpack.c.b16 %v199, %v199
    %v209 = vpack.c.b16 %v200, %v200
    %v210 = vpack.c.b16 %v201, %v201
    %v211 = vpack.c.b16 %v202, %v202
    %v212 = vpack.c.b16 %v203, %v203
    %v366 = vunpack.c.l.b16 %v39
    %v367 = vunpack.c.l.b16 %v40
    %v368 = vunpack.c.l.b16 %v41
    %v369 = vunpack.c.l.b16 %v42
    %v370 = vunpack.c.l.b16 %v43
    %v371 = vunpack.c.l.b16 %v44
    %v372 = vunpack.c.l.b16 %v45
    %v373 = vunpack.c.l.b16 %v46
    %v374 = vunpack.c.l.b16 %v47
    %v375 = vunpack.c.l.b16 %v48
    %v376 = vunpack.c.l.b16 %v49
    %v377 = vunpack.c.l.b16 %v50
    %v378 = vunpack.c.l.b16 %v51
    %v379 = vunpack.c.l.b16 %v52
    %v380 = vunpack.c.l.b16 %v53
    %v381 = vunpack.c.l.b16 %v54
    %v382 = vunpack.c.l.b16 %v55
    %v383 = vunpack.c.l.b16 %v56
    %v384 = vunpack.c.l.b16 %v57
    %v385 = vunpack.c.l.b16 %v58
    %v386 = vunpack.c.l.b16 %v59
    %v387 = vunpack.c.l.b16 %v60
    %v388 = vunpack.c.l.b16 %v61
    %v389 = vunpack.c.l.b16 %v62
    %v390 = vunpack.c.l.b16 %v63
    %v391 = vunpack.c.l.b16 %v64
    %v392 = vunpack.c.l.b16 %v65
    %v393 = vunpack.c.l.b16 %v66
    %v394 = vunpack.c.l.b16 %v67
    %v395 = vunpack.c.l.b16 %v68
    %v396 = vunpack.c.l.b16 %v69
    %v397 = vunpack.c.l.b16 %v70
    %v398 = vunpack.c.l.b16 %v71
    %v399 = vunpack.c.l.b16 %v72
    %v400 = vunpack.c.l.b16 %v73
    %v401 = vunpack.c.l.b16 %v74
    %v402 = vunpack.c.l.b16 %v75
    %v403 = vunpack.c.l.b16 %v76
    %v404 = vunpack.c.l.b16 %v77
    %v405 = vunpack.c.l.b16 %v78
    %v406 = vunpack.c.l.b16 %v79
    %v407 = vunpack.c.l.b16 %v80
    %v408 = vunpack.c.l.b16 %v81
    %v409 = vunpack.c.l.b16 %v82
    %v410 = vunpack.c.l.b16 %v83
    %v411 = vunpack.c.l.b16 %v84
    %v412 = vunpack.c.l.b16 %v85
    %v413 = vunpack.c.l.b16 %v86
    %v414 = vunpack.c.l.b16 %v87
    %v415 = vunpack.c.l.b16 %v88
    %v416 = vunpack.c.l.b16 %v89
    %v417 = vunpack.c.l.b16 %v90
    %v418 = vunpack.c.l.b16 %v91
    %v419 = vunpack.c.l.b16 %v92
    %v420 = vunpack.c.l.b16 %v93
    %v421 = vunpack.c.l.b16 %v94
    %v422 = vunpack.c.l.b16 %v95
    %v423 = vunpack.c.l.b16 %v96
    %v424 = vunpack.c.l.b16 %v97
    %v425 = vunpack.c.l.b16 %v98
    %v426 = vunpack.c.l.b16 %v99
    %v427 = vunpack.c.l.b16 %v100
    %v428 = vunpack.c.l.b16 %v101
    %v429 = vunpack.c.l.b16 %v102
    %v430 = vunpack.c.l.b16 %v103
    %v431 = vunpack.c.l.b16 %v104
    %v432 = vunpack.c.l.b16 %v105
    %v433 = vunpack.c.l.b16 %v106
    %v434 = vunpack.c.l.b16 %v107
    %v435 = vunpack.c.l.b16 %v108
    %v436 = vunpack.c.l.b16 %v109
    %v437 = vunpack.c.l.b16 %v110
    %v438 = vunpack.c.l.b16 %v111
    %v439 = vunpack.c.l.b16 %v112
    %v440 = vunpack.c.l.b16 %v113
    %v441 = vunpack.c.l.b16 %v114
    %v442 = vunpack.c.l.b16 %v115
    %v443 = vunpack.c.l.b16 %v116
    %v444 = vunpack.c.l.b16 %v117
    %v445 = vunpack.c.l.b16 %v118
    %v446 = vunpack.c.l.b16 %v119
    %v447 = vunpack.c.l.b16 %v120
    %v448 = vunpack.c.l.b16 %v121
    %v449 = vunpack.c.l.b16 %v122
    %v450 = vunpack.c.l.b16 %v123
    %v451 = vunpack.c.l.b16 %v124
    %v452 = vunpack.c.l.b16 %v125
    %v453 = vunpack.c.l.b16 %v126
    %v454 = vunpack.c.l.b16 %v127
    %v455 = vunpack.c.l.b16 %v128
    %v456 = vunpack.c.l.b16 %v129
    %v457 = vunpack.c.l.b16 %v130
    %v458 = vunpack.c.l.b16 %v131
    %v459 = vunpack.c.l.b16 %v132
    %v460 = vunpack.c.l.b16 %v133
    %v461 = vunpack.c.l.b16 %v134
    %v462 = vunpack.c.l.b16 %v135
    %v463 = vunpack.c.l.b16 %v136
    %v464 = vunpack.c.l.b16 %v137
    %v465 = vunpack.c.l.b16 %v138
    %v466 = vunpack.c.l.b16 %v139
    %v467 = vunpack.c.l.b16 %v140
    %v468 = vunpack.c.l.b16 %v141
    %v469 = vunpack.c.l.b16 %v142
    %v470 = vunpack.c.l.b16 %v143
    %v471 = vunpack.c.l.b16 %v144
    %v472 = vunpack.c.l.b16 %v145
    %v473 = vunpack.c.l.b16 %v146
    %v474 = vunpack.c.l.b16 %v147
    %v475 = vunpack.c.l.b16 %v148
    %v476 = vunpack.c.l.b16 %v149
    %v477 = vunpack.c.l.b16 %v150
    %v478 = vunpack.c.l.b16 %v151
    %v479 = vunpack.c.l.b16 %v152
    %v480 = vunpack.c.l.b16 %v153
    %v481 = vunpack.c.l.b16 %v154
    %v482 = vunpack.c.l.b16 %v155
    %v483 = vunpack.c.l.b16 %v156
    %v484 = vunpack.c.l.b16 %v157
    %v485 = vunpack.c.l.b16 %v158
    %v486 = vunpack.c.l.b16 %v159
    %v487 = vunpack.c.l.b16 %v160
    %v488 = vunpack.c.l.b16 %v161
    %v489 = vunpack.c.l.b16 %v162
    %v490 = vunpack.c.l.b16 %v163
    %v491 = vunpack.c.l.b16 %v164
    %v492 = vunpack.c.l.b16 %v165
    %v493 = vunpack.c.l.b16 %v166
    %v494 = vunpack.c.l.b16 %v167
    %v495 = vunpack.c.l.b16 %v168
    %v496 = vunpack.c.l.b16 %v169
    %v497 = vunpack.c.l.b16 %v170
    %v498 = vunpack.c.l.b16 %v171
    %v499 = vunpack.c.l.b16 %v172
    %v500 = vunpack.c.l.b16 %v173
    %v501 = vunpack.c.l.b16 %v174
    %v502 = vunpack.c.l.b16 %v175
    %v503 = vunpack.c.l.b16 %v176
    %v504 = vunpack.c.l.b16 %v177
    %v505 = vunpack.c.l.b16 %v178
    %v506 = vunpack.c.l.b16 %v179
    %v507 = vunpack.c.l.b16 %v180
    %v508 = vunpack.c.l.b16 %v181
    %v509 = vunpack.c.l.b16 %v182
    %v510 = vpack.c.b16 %v367, %v366
    %v511 = vpack.c.b16 %v369, %v368
    %v512 = vpack.c.b16 %v371, %v370
    %v513 = vpack.c.b16 %v373, %v372
    %v514 = vpack.c.b16 %v375, %v374
    %v515 = vpack.c.b16 %v377, %v376
    %v516 = vpack.c.b16 %v379, %v378
    %v517 = vpack.c.b16 %v381, %v380
    %v518 = vpack.c.b16 %v383, %v382
    %v519 = vpack.c.b16 %v385, %v384
    %v520 = vpack.c.b16 %v387, %v386
    %v521 = vpack.c.b16 %v389, %v388
    %v522 = vpack.c.b16 %v391, %v390
    %v523 = vpack.c.b16 %v393, %v392
    %v524 = vpack.c.b16 %v395, %v394
    %v525 = vpack.c.b16 %v397, %v396
    %v526 = vpack.c.b16 %v399, %v398
    %v527 = vpack.c.b16 %v401, %v400
    %v528 = vpack.c.b16 %v403, %v402
    %v529 = vpack.c.b16 %v405, %v404
    %v530 = vpack.c.b16 %v407, %v406
    %v531 = vpack.c.b16 %v409, %v408
    %v532 = vpack.c.b16 %v411, %v410
    %v533 = vpack.c.b16 %v413, %v412
    %v534 = vpack.c.b16 %v415, %v414
    %v535 = vpack.c.b16 %v417, %v416
    %v536 = vpack.c.b16 %v419, %v418
    %v537 = vpack.c.b16 %v421, %v420
    %v538 = vpack.c.b16 %v423, %v422
    %v539 = vpack.c.b16 %v425, %v424
    %v540 = vpack.c.b16 %v427, %v426
    %v541 = vpack.c.b16 %v429, %v428
    %v542 = vpack.c.b16 %v431, %v430
    %v543 = vpack.c.b16 %v433, %v432
    %v544 = vpack.c.b16 %v435, %v434
    %v545 = vpack.c.b16 %v437, %v436
    %v546 = vpack.c.b16 %v439, %v438
    %v547 = vpack.c.b16 %v441, %v440
    %v548 = vpack.c.b16 %v443, %v442
    %v549 = vpack.c.b16 %v445, %v444
    %v550 = vpack.c.b16 %v447, %v446
    %v551 = vpack.c.b16 %v449, %v448
    %v552 = vpack.c.b16 %v451, %v450
    %v553 = vpack.c.b16 %v453, %v452
    %v554 = vpack.c.b16 %v455, %v454
    %v555 = vpack.c.b16 %v457, %v456
    %v556 = vpack.c.b16 %v459, %v458
    %v557 = vpack.c.b16 %v461, %v460
    %v558 = vpack.c.b16 %v463, %v462
    %v559 = vpack.c.b16 %v465, %v464
    %v560 = vpack.c.b16 %v467, %v466
    %v561 = vpack.c.b16 %v469, %v468
    %v562 = vpack.c.b16 %v471, %v470
    %v563 = vpack.c.b16 %v473, %v472
    %v564 = vpack.c.b16 %v475, %v474
    %v565 = vpack.c.b16 %v477, %v476
    %v566 = vpack.c.b16 %v479, %v478
    %v567 = vpack.c.b16 %v481, %v480
    %v568 = vpack.c.b16 %v483, %v482
    %v569 = vpack.c.b16 %v485, %v484
    %v570 = vpack.c.b16 %v487, %v486
    %v571 = vpack.c.b16 %v489, %v488
    %v572 = vpack.c.b16 %v491, %v490
    %v573 = vpack.c.b16 %v493, %v492
    %v574 = vpack.c.b16 %v495, %v494
    %v575 = vpack.c.b16 %v497, %v496
    %v576 = vpack.c.b16 %v499, %v498
    %v577 = vpack.c.b16 %v501, %v500
    %v578 = vpack.c.b16 %v503, %v502
    %v579 = vpack.c.b16 %v505, %v504
    %v580 = vpack.c.b16 %v507, %v506
    %v581 = vpack.c.b16 %v509, %v508
    %654 = vmatprep.subr.bf16.mxu0 0
    %655 = vmatpush1.bf16.msra.mxu0 %v510
    %656 = vmatprep.subr.bf16.mxu0 0
    %657 = vmatpush1.bf16.msra.mxu0 %v511
    %658 = vmatprep.subr.bf16.mxu0 0
    %659 = vmatpush1.bf16.msra.mxu0 %v512
    %660 = vmatprep.subr.bf16.mxu0 0
    %661 = vmatpush1.bf16.msra.mxu0 %v513
    %662 = vmatprep.subr.bf16.mxu0 0
    %663 = vmatpush1.bf16.msra.mxu0 %v514
    %664 = vmatprep.subr.bf16.mxu0 0
    %665 = vmatpush1.bf16.msra.mxu0 %v515
    %666 = vmatprep.subr.bf16.mxu0 0
    %667 = vmatpush1.bf16.msra.mxu0 %v516
    %668 = vmatprep.subr.bf16.mxu0 0
    %669 = vmatpush1.bf16.msra.mxu0 %v517
    %670 = vmatprep.subr.bf16.mxu0 0
    %671 = vmatpush1.bf16.msra.mxu0 %v518
    %672 = vmatprep.subr.bf16.mxu0 0
    %673 = vmatpush1.bf16.msra.mxu0 %v519
    %674 = vmatprep.subr.bf16.mxu0 0
    %675 = vmatpush1.bf16.msra.mxu0 %v520
    %676 = vmatprep.subr.bf16.mxu0 0
    %677 = vmatpush1.bf16.msra.mxu0 %v521
    %678 = vmatprep.subr.bf16.mxu0 0
    %679 = vmatpush1.bf16.msra.mxu0 %v522
    %680 = vmatprep.subr.bf16.mxu0 0
    %681 = vmatpush1.bf16.msra.mxu0 %v523
    %682 = vmatprep.subr.bf16.mxu0 0
    %683 = vmatpush1.bf16.msra.mxu0 %v524
    %684 = vmatprep.subr.bf16.mxu0 0
    %685 = vmatpush1.bf16.msra.mxu0 %v525
    %686 = vmatprep.mubr.bf16.mxu0 %v205
    %687 = vmatmul.mubr.bf16.gmra.mrb[0].mxu0 %v204
    %v688 = vpop.f32.mrb[0].mxu0
    %v689 = vadd.f32 %v188, %v688
    %v690 = vpop.f32.mrb[0].mxu0
    %v691 = vpop.f32.mrb[0].mxu0
    %v692 = vpop.f32.mrb[0].mxu0
    %693 = vdwg.mxu0
    %694 = vmatprep.subr.bf16.mxu0 0
    %695 = vmatpush1.bf16.msra.mxu0 %v526
    %696 = vmatprep.subr.bf16.mxu0 0
    %697 = vmatpush1.bf16.msra.mxu0 %v527
    %698 = vmatprep.subr.bf16.mxu0 0
    %699 = vmatpush1.bf16.msra.mxu0 %v528
    %700 = vmatprep.subr.bf16.mxu0 0
    %701 = vmatpush1.bf16.msra.mxu0 %v529
    %702 = vmatprep.subr.bf16.mxu0 0
    %703 = vmatpush1.bf16.msra.mxu0 %v530
    %704 = vmatprep.subr.bf16.mxu0 0
    %705 = vmatpush1.bf16.msra.mxu0 %v531
    %706 = vmatprep.subr.bf16.mxu0 0
    %707 = vmatpush1.bf16.msra.mxu0 %v532
    %708 = vmatprep.subr.bf16.mxu0 0
    %709 = vmatpush1.bf16.msra.mxu0 %v533
    %710 = vmatprep.subr.bf16.mxu0 0
    %711 = vmatpush1.bf16.msra.mxu0 %v534
    %712 = vmatprep.subr.bf16.mxu0 0
    %713 = vmatpush1.bf16.msra.mxu0 %v535
    %714 = vmatprep.subr.bf16.mxu0 0
    %715 = vmatpush1.bf16.msra.mxu0 %v536
    %716 = vmatprep.subr.bf16.mxu0 0
    %717 = vmatpush1.bf16.msra.mxu0 %v537
    %718 = vmatprep.subr.bf16.mxu0 0
    %719 = vmatpush1.bf16.msra.mxu0 %v538
    %720 = vmatprep.subr.bf16.mxu0 0
    %721 = vmatpush1.bf16.msra.mxu0 %v539
    %722 = vmatprep.subr.bf16.mxu0 0
    %723 = vmatpush1.bf16.msra.mxu0 %v540
    %724 = vmatprep.subr.bf16.mxu0 0
    %725 = vmatpush1.bf16.msra.mxu0 %v541
    %726 = vmatprep.mubr.bf16.mxu0 %v207
    %727 = vmatmul.mubr.bf16.gmra.mrb[0].mxu0 %v206
    %v728 = vpop.f32.mrb[0].mxu0
    %v729 = vadd.f32 %v689, %v728
    %v730 = vpop.f32.mrb[0].mxu0
    %v731 = vpop.f32.mrb[0].mxu0
    %v732 = vpop.f32.mrb[0].mxu0
    %733 = vdwg.mxu0
    %734 = vmatprep.subr.bf16.mxu0 0
    %735 = vmatpush1.bf16.msra.mxu0 %v542
    %736 = vmatprep.subr.bf16.mxu0 0
    %737 = vmatpush1.bf16.msra.mxu0 %v543
    %738 = vmatprep.subr.bf16.mxu0 0
    %739 = vmatpush1.bf16.msra.mxu0 %v544
    %740 = vmatprep.subr.bf16.mxu0 0
    %741 = vmatpush1.bf16.msra.mxu0 %v545
    %742 = vmatprep.subr.bf16.mxu0 0
    %743 = vmatpush1.bf16.msra.mxu0 %v546
    %744 = vmatprep.subr.bf16.mxu0 0
    %745 = vmatpush1.bf16.msra.mxu0 %v547
    %746 = vmatprep.subr.bf16.mxu0 0
    %747 = vmatpush1.bf16.msra.mxu0 %v548
    %748 = vmatprep.subr.bf16.mxu0 0
    %749 = vmatpush1.bf16.msra.mxu0 %v549
    %750 = vmatprep.subr.bf16.mxu0 0
    %751 = vmatpush1.bf16.msra.mxu0 %v550
    %752 = vmatprep.subr.bf16.mxu0 0
    %753 = vmatpush1.bf16.msra.mxu0 %v551
    %754 = vmatprep.subr.bf16.mxu0 0
    %755 = vmatpush1.bf16.msra.mxu0 %v552
    %756 = vmatprep.subr.bf16.mxu0 0
    %757 = vmatpush1.bf16.msra.mxu0 %v553
    %758 = vmatprep.subr.bf16.mxu0 0
    %759 = vmatpush1.bf16.msra.mxu0 %v554
    %760 = vmatprep.subr.bf16.mxu0 0
    %761 = vmatpush1.bf16.msra.mxu0 %v555
    %762 = vmatprep.subr.bf16.mxu0 0
    %763 = vmatpush1.bf16.msra.mxu0 %v556
    %764 = vmatprep.subr.bf16.mxu0 0
    %765 = vmatpush1.bf16.msra.mxu0 %v557
    %766 = vmatprep.mubr.bf16.mxu0 %v209
    %767 = vmatmul.mubr.bf16.gmra.mrb[0].mxu0 %v208
    %v768 = vpop.f32.mrb[0].mxu0
    %v769 = vadd.f32 %v729, %v768
    %v770 = vpop.f32.mrb[0].mxu0
    %v771 = vpop.f32.mrb[0].mxu0
    %v772 = vpop.f32.mrb[0].mxu0
    %773 = vdwg.mxu0
    %774 = vmatprep.subr.bf16.mxu0 0
    %775 = vmatpush1.bf16.msra.mxu0 %v558
    %776 = vmatprep.subr.bf16.mxu0 0
    %777 = vmatpush1.bf16.msra.mxu0 %v559
    %778 = vmatprep.subr.bf16.mxu0 0
    %779 = vmatpush1.bf16.msra.mxu0 %v560
    %780 = vmatprep.subr.bf16.mxu0 0
    %781 = vmatpush1.bf16.msra.mxu0 %v561
    %782 = vmatprep.subr.bf16.mxu0 0
    %783 = vmatpush1.bf16.msra.mxu0 %v562
    %784 = vmatprep.subr.bf16.mxu0 0
    %785 = vmatpush1.bf16.msra.mxu0 %v563
    %786 = vmatprep.subr.bf16.mxu0 0
    %787 = vmatpush1.bf16.msra.mxu0 %v564
    %788 = vmatprep.subr.bf16.mxu0 0
    %789 = vmatpush1.bf16.msra.mxu0 %v565
    %790 = vmatprep.subr.bf16.mxu0 0
    %791 = vmatpush1.bf16.msra.mxu0 %v566
    %792 = vmatprep.subr.bf16.mxu0 0
    %793 = vmatpush1.bf16.msra.mxu0 %v567
    %794 = vmatprep.subr.bf16.mxu0 0
    %795 = vmatpush1.bf16.msra.mxu0 %v568
    %796 = vmatprep.subr.bf16.mxu0 0
    %797 = vmatpush1.bf16.msra.mxu0 %v569
    %798 = vmatprep.subr.bf16.mxu0 0
    %799 = vmatpush1.bf16.msra.mxu0 %v570
    %800 = vmatprep.subr.bf16.mxu0 0
    %801 = vmatpush1.bf16.msra.mxu0 %v571
    %802 = vmatprep.subr.bf16.mxu0 0
    %803 = vmatpush1.bf16.msra.mxu0 %v572
    %804 = vmatprep.subr.bf16.mxu0 0
    %805 = vmatpush1.bf16.msra.mxu0 %v573
    %806 = vmatprep.mubr.bf16.mxu0 %v211
    %807 = vmatmul.mubr.bf16.gmra.mrb[0].mxu0 %v210
    %v808 = vpop.f32.mrb[0].mxu0
    %v809 = vadd.f32 %v769, %v808
    %v810 = vpop.f32.mrb[0].mxu0
    %v811 = vpop.f32.mrb[0].mxu0
    %v812 = vpop.f32.mrb[0].mxu0
    %813 = vdwg.mxu0
    %814 = vmatprep.subr.bf16.mxu0 0
    %815 = vmatpush1.bf16.msra.mxu0 %v574
    %816 = vmatprep.subr.bf16.mxu0 0
    %817 = vmatpush1.bf16.msra.mxu0 %v575
    %818 = vmatprep.subr.bf16.mxu0 0
    %819 = vmatpush1.bf16.msra.mxu0 %v576
    %820 = vmatprep.subr.bf16.mxu0 0
    %821 = vmatpush1.bf16.msra.mxu0 %v577
    %822 = vmatprep.subr.bf16.mxu0 0
    %823 = vmatpush1.bf16.msra.mxu0 %v578
    %824 = vmatprep.subr.bf16.mxu0 0
    %825 = vmatpush1.bf16.msra.mxu0 %v579
    %826 = vmatprep.subr.bf16.mxu0 0
    %827 = vmatpush1.bf16.msra.mxu0 %v580
    %828 = vmatprep.subr.bf16.mxu0 0
    %829 = vmatpush1.bf16.msra.mxu0 %v581
    %830 = vmatprep.subr.bf16.mxu0 0
    %831 = vmatpush1.bf16.msra.mxu0 0
    %832 = vmatprep.subr.bf16.mxu0 0
    %833 = vmatpush1.bf16.msra.mxu0 0
    %834 = vmatprep.subr.bf16.mxu0 0
    %835 = vmatpush1.bf16.msra.mxu0 0
    %836 = vmatprep.subr.bf16.mxu0 0
    %837 = vmatpush1.bf16.msra.mxu0 0
    %838 = vmatprep.subr.bf16.mxu0 0
    %839 = vmatpush1.bf16.msra.mxu0 0
    %840 = vmatprep.subr.bf16.mxu0 0
    %841 = vmatpush1.bf16.msra.mxu0 0
    %842 = vmatprep.subr.bf16.mxu0 0
    %843 = vmatpush1.bf16.msra.mxu0 0
    %844 = vmatprep.subr.bf16.mxu0 0
    %845 = vmatpush1.bf16.msra.mxu0 0
    %846 = vmatprep.mubr.bf16.mxu0 0
    %847 = vmatmul.mubr.bf16.gmra.mrb[0].mxu0 %v212
    %v848 = vpop.f32.mrb[0].mxu0
    %v849 = vadd.f32 %v809, %v848
    %v850 = vpop.f32.mrb[0].mxu0
    %v851 = vpop.f32.mrb[0].mxu0
    %v852 = vpop.f32.mrb[0].mxu0
    %853 = vdwg.mxu0
    %v854 = vmax.f32 %v849, 0.0
    %v856 = vrot.slane %v854, 2
    %v858 = vmax.f32 %v854, %v856
    %v860 = vrot.slane %v858, 4
    %v862 = vmax.f32 %v858, %v860
    %v863 = vld [vmem:[%s3] sm:$0xf]
    %v864 = vld [vmem:[%s3 + $0x4] sm:$0xf]
    %v865 = vld [vmem:[%s3 + $0x8] sm:$0xf]
    %v866 = vld [vmem:[%s3 + $0xc] sm:$0xf]
    %v867 = vld [vmem:[%s3 + $0x10] sm:$0xf]
    %v868 = vld [vmem:[%s3 + $0x14] sm:$0xf]
    %v869 = vld [vmem:[%s3 + $0x18] sm:$0xf]
    %v870 = vld [vmem:[%s3 + $0x1c] sm:$0xf]
    %v871 = vld [vmem:[%s3 + $0x20] sm:$0xf]
    %v872 = vld [vmem:[%s3 + $0x24] sm:$0xf]
    %v873 = vld [vmem:[%s3 + $0x28] sm:$0xf]
    %v874 = vld [vmem:[%s3 + $0x2c] sm:$0xf]
    %v875 = vld [vmem:[%s3 + $0x30] sm:$0xf]
    %v876 = vld [vmem:[%s3 + $0x34] sm:$0xf]
    %v877 = vld [vmem:[%s3 + $0x38] sm:$0xf]
    %v878 = vld [vmem:[%s3 + $0x3c] sm:$0xf]
    %v879 = vld [vmem:[%s4] sm:$0x1]
    %v880 = vpack.c.bf16 %v862, %v862
    %v882 = vlaneseq
    %v883 = vshrl.u32 %v882, 7
    %v884 = vsub.s32 0, %v883
    %v885 = vrot.slane %v879, %v884
    %v903 = vunpack.c.l.b16 %v863
    %v904 = vunpack.c.l.b16 %v864
    %v905 = vunpack.c.l.b16 %v865
    %v906 = vunpack.c.l.b16 %v866
    %v907 = vunpack.c.l.b16 %v867
    %v908 = vunpack.c.l.b16 %v868
    %v909 = vunpack.c.l.b16 %v869
    %v910 = vunpack.c.l.b16 %v870
    %v911 = vunpack.c.l.b16 %v871
    %v912 = vunpack.c.l.b16 %v872
    %v913 = vunpack.c.l.b16 %v873
    %v914 = vunpack.c.l.b16 %v874
    %v915 = vunpack.c.l.b16 %v875
    %v916 = vunpack.c.l.b16 %v876
    %v917 = vunpack.c.l.b16 %v877
    %v918 = vunpack.c.l.b16 %v878
    %v919 = vpack.c.b16 %v904, %v903
    %v920 = vpack.c.b16 %v906, %v905
    %v921 = vpack.c.b16 %v908, %v907
    %v922 = vpack.c.b16 %v910, %v909
    %v923 = vpack.c.b16 %v912, %v911
    %v924 = vpack.c.b16 %v914, %v913
    %v925 = vpack.c.b16 %v916, %v915
    %v926 = vpack.c.b16 %v918, %v917
    %935 = vmatprep.subr.bf16.mxu0 0
    %936 = vmatpush1.bf16.msra.mxu0 %v919
    %937 = vmatprep.subr.bf16.mxu0 0
    %938 = vmatpush1.bf16.msra.mxu0 %v920
    %939 = vmatprep.subr.bf16.mxu0 0
    %940 = vmatpush1.bf16.msra.mxu0 %v921
    %941 = vmatprep.subr.bf16.mxu0 0
    %942 = vmatpush1.bf16.msra.mxu0 %v922
    %943 = vmatprep.subr.bf16.mxu0 0
    %944 = vmatpush1.bf16.msra.mxu0 %v923
    %945 = vmatprep.subr.bf16.mxu0 0
    %946 = vmatpush1.bf16.msra.mxu0 %v924
    %947 = vmatprep.subr.bf16.mxu0 0
    %948 = vmatpush1.bf16.msra.mxu0 %v925
    %949 = vmatprep.subr.bf16.mxu0 0
    %950 = vmatpush1.bf16.msra.mxu0 %v926
    %951 = vmatprep.subr.bf16.mxu0 0
    %952 = vmatpush1.bf16.msra.mxu0 0
    %953 = vmatprep.subr.bf16.mxu0 0
    %954 = vmatpush1.bf16.msra.mxu0 0
    %955 = vmatprep.subr.bf16.mxu0 0
    %956 = vmatpush1.bf16.msra.mxu0 0
    %957 = vmatprep.subr.bf16.mxu0 0
    %958 = vmatpush1.bf16.msra.mxu0 0
    %959 = vmatprep.subr.bf16.mxu0 0
    %960 = vmatpush1.bf16.msra.mxu0 0
    %961 = vmatprep.subr.bf16.mxu0 0
    %962 = vmatpush1.bf16.msra.mxu0 0
    %963 = vmatprep.subr.bf16.mxu0 0
    %964 = vmatpush1.bf16.msra.mxu0 0
    %965 = vmatprep.subr.bf16.mxu0 0
    %966 = vmatpush1.bf16.msra.mxu0 0
    %967 = vmatprep.mubr.bf16.mxu0 0
    %968 = vmatmul.mubr.bf16.gmra.mrb[0].mxu0 %v880
    %v969 = vpop.f32.mrb[0].mxu0
    %v970 = vadd.f32 %v885, %v969
    %v971 = vpop.f32.mrb[0].mxu0
    %v972 = vpop.f32.mrb[0].mxu0
    %v973 = vpop.f32.mrb[0].mxu0
    %974 = vdwg.mxu0
    %v975 = vmax.f32 %v970, 0.0
    %v976 = vld [vmem:[%s5] sm:$0xf]
    %v977 = vld [vmem:[%s5 + $0x4] sm:$0xf]
    %v978 = vld [vmem:[%s5 + $0x8] sm:$0xf]
    %v979 = vld [vmem:[%s5 + $0xc] sm:$0xf]
    %v980 = vld [vmem:[%s5 + $0x10] sm:$0xf]
    %v981 = vld [vmem:[%s5 + $0x14] sm:$0xf]
    %v982 = vld [vmem:[%s5 + $0x18] sm:$0xf]
    %v983 = vld [vmem:[%s5 + $0x1c] sm:$0xf]
    %v984 = vld [vmem:[%s5 + $0x20] sm:$0xf]
    %v985 = vld [vmem:[%s5 + $0x24] sm:$0xf]
    %v986 = vld [vmem:[%s5 + $0x28] sm:$0xf]
    %v987 = vld [vmem:[%s5 + $0x2c] sm:$0xf]
    %v988 = vld [vmem:[%s5 + $0x30] sm:$0xf]
    %v989 = vld [vmem:[%s5 + $0x34] sm:$0xf]
    %v990 = vld [vmem:[%s5 + $0x38] sm:$0xf]
    %v991 = vld [vmem:[%s5 + $0x3c] sm:$0xf]
    %v992 = vld [vmem:[%s6] sm:$0x1]
    %v993 = vpack.c.bf16 %v975, %v975
    %v995 = vlaneseq
    %v996 = vshrl.u32 %v995, 7
    %v997 = vsub.s32 0, %v996
    %v998 = vrot.slane %v992, %v997
    %v1016 = vunpack.c.l.b16 %v976
    %v1017 = vunpack.c.l.b16 %v977
    %v1018 = vunpack.c.l.b16 %v978
    %v1019 = vunpack.c.l.b16 %v979
    %v1020 = vunpack.c.l.b16 %v980
    %v1021 = vunpack.c.l.b16 %v981
    %v1022 = vunpack.c.l.b16 %v982
    %v1023 = vunpack.c.l.b16 %v983
    %v1024 = vunpack.c.l.b16 %v984
    %v1025 = vunpack.c.l.b16 %v985
    %v1026 = vunpack.c.l.b16 %v986
    %v1027 = vunpack.c.l.b16 %v987
    %v1028 = vunpack.c.l.b16 %v988
    %v1029 = vunpack.c.l.b16 %v989
    %v1030 = vunpack.c.l.b16 %v990
    %v1031 = vunpack.c.l.b16 %v991
    %v1032 = vpack.c.b16 %v1017, %v1016
    %v1033 = vpack.c.b16 %v1019, %v1018
    %v1034 = vpack.c.b16 %v1021, %v1020
    %v1035 = vpack.c.b16 %v1023, %v1022
    %v1036 = vpack.c.b16 %v1025, %v1024
    %v1037 = vpack.c.b16 %v1027, %v1026
    %v1038 = vpack.c.b16 %v1029, %v1028
    %v1039 = vpack.c.b16 %v1031, %v1030
    %1048 = vmatprep.subr.bf16.mxu0 0
    %1049 = vmatpush1.bf16.msra.mxu0 %v1032
    %1050 = vmatprep.subr.bf16.mxu0 0
    %1051 = vmatpush1.bf16.msra.mxu0 %v1033
    %1052 = vmatprep.subr.bf16.mxu0 0
    %1053 = vmatpush1.bf16.msra.mxu0 %v1034
    %1054 = vmatprep.subr.bf16.mxu0 0
    %1055 = vmatpush1.bf16.msra.mxu0 %v1035
    %1056 = vmatprep.subr.bf16.mxu0 0
    %1057 = vmatpush1.bf16.msra.mxu0 %v1036
    %1058 = vmatprep.subr.bf16.mxu0 0
    %1059 = vmatpush1.bf16.msra.mxu0 %v1037
    %1060 = vmatprep.subr.bf16.mxu0 0
    %1061 = vmatpush1.bf16.msra.mxu0 %v1038
    %1062 = vmatprep.subr.bf16.mxu0 0
    %1063 = vmatpush1.bf16.msra.mxu0 %v1039
    %1064 = vmatprep.subr.bf16.mxu0 0
    %1065 = vmatpush1.bf16.msra.mxu0 0
    %1066 = vmatprep.subr.bf16.mxu0 0
    %1067 = vmatpush1.bf16.msra.mxu0 0
    %1068 = vmatprep.subr.bf16.mxu0 0
    %1069 = vmatpush1.bf16.msra.mxu0 0
    %1070 = vmatprep.subr.bf16.mxu0 0
    %1071 = vmatpush1.bf16.msra.mxu0 0
    %1072 = vmatprep.subr.bf16.mxu0 0
    %1073 = vmatpush1.bf16.msra.mxu0 0
    %1074 = vmatprep.subr.bf16.mxu0 0
    %1075 = vmatpush1.bf16.msra.mxu0 0
    %1076 = vmatprep.subr.bf16.mxu0 0
    %1077 = vmatpush1.bf16.msra.mxu0 0
    %1078 = vmatprep.subr.bf16.mxu0 0
    %1079 = vmatpush1.bf16.msra.mxu0 0
    %1080 = vmatprep.mubr.bf16.mxu0 0
    %1081 = vmatmul.mubr.bf16.gmra.mrb[0].mxu0 %v993
    %v1082 = vpop.f32.mrb[0].mxu0
    %v1083 = vadd.f32 %v998, %v1082
    %v1084 = vpop.f32.mrb[0].mxu0
    %v1085 = vpop.f32.mrb[0].mxu0
    %v1086 = vpop.f32.mrb[0].mxu0
    %1087 = vdwg.mxu0
    %v1088 = vmax.f32 %v1083, 0.0
    %v1089 = vld [vmem:[%s7] sm:$0xf]
    %v1090 = vld [vmem:[%s7 + $0x4] sm:$0xf]
    %v1091 = vld [vmem:[%s7 + $0x8] sm:$0xf]
    %v1092 = vld [vmem:[%s7 + $0xc] sm:$0xf]
    %v1093 = vld [vmem:[%s7 + $0x10] sm:$0xf]
    %v1094 = vld [vmem:[%s7 + $0x14] sm:$0xf]
    %v1095 = vld [vmem:[%s7 + $0x18] sm:$0xf]
    %v1096 = vld [vmem:[%s7 + $0x1c] sm:$0xf]
    %v1097 = vld [vmem:[%s7 + $0x20] sm:$0xf]
    %v1098 = vld [vmem:[%s7 + $0x24] sm:$0xf]
    %v1099 = vld [vmem:[%s7 + $0x28] sm:$0xf]
    %v1100 = vld [vmem:[%s7 + $0x2c] sm:$0xf]
    %v1101 = vld [vmem:[%s7 + $0x30] sm:$0xf]
    %v1102 = vld [vmem:[%s7 + $0x34] sm:$0xf]
    %v1103 = vld [vmem:[%s7 + $0x38] sm:$0xf]
    %v1104 = vld [vmem:[%s7 + $0x3c] sm:$0xf]
    %v1105 = vld [vmem:[%s8] sm:$0x1]
    %v1106 = vpack.c.bf16 %v1088, %v1088
    %v1108 = vlaneseq
    %v1109 = vshrl.u32 %v1108, 7
    %v1110 = vsub.s32 0, %v1109
    %v1111 = vrot.slane %v1105, %v1110
    %v1129 = vunpack.c.l.b16 %v1089
    %v1130 = vunpack.c.l.b16 %v1090
    %v1131 = vunpack.c.l.b16 %v1091
    %v1132 = vunpack.c.l.b16 %v1092
    %v1133 = vunpack.c.l.b16 %v1093
    %v1134 = vunpack.c.l.b16 %v1094
    %v1135 = vunpack.c.l.b16 %v1095
    %v1136 = vunpack.c.l.b16 %v1096
    %v1137 = vunpack.c.l.b16 %v1097
    %v1138 = vunpack.c.l.b16 %v1098
    %v1139 = vunpack.c.l.b16 %v1099
    %v1140 = vunpack.c.l.b16 %v1100
    %v1141 = vunpack.c.l.b16 %v1101
    %v1142 = vunpack.c.l.b16 %v1102
    %v1143 = vunpack.c.l.b16 %v1103
    %v1144 = vunpack.c.l.b16 %v1104
    %v1145 = vpack.c.b16 %v1130, %v1129
    %v1146 = vpack.c.b16 %v1132, %v1131
    %v1147 = vpack.c.b16 %v1134, %v1133
    %v1148 = vpack.c.b16 %v1136, %v1135
    %v1149 = vpack.c.b16 %v1138, %v1137
    %v1150 = vpack.c.b16 %v1140, %v1139
    %v1151 = vpack.c.b16 %v1142, %v1141
    %v1152 = vpack.c.b16 %v1144, %v1143
    %1161 = vmatprep.subr.bf16.mxu0 0
    %1162 = vmatpush1.bf16.msra.mxu0 %v1145
    %1163 = vmatprep.subr.bf16.mxu0 0
    %1164 = vmatpush1.bf16.msra.mxu0 %v1146
    %1165 = vmatprep.subr.bf16.mxu0 0
    %1166 = vmatpush1.bf16.msra.mxu0 %v1147
    %1167 = vmatprep.subr.bf16.mxu0 0
    %1168 = vmatpush1.bf16.msra.mxu0 %v1148
    %1169 = vmatprep.subr.bf16.mxu0 0
    %1170 = vmatpush1.bf16.msra.mxu0 %v1149
    %1171 = vmatprep.subr.bf16.mxu0 0
    %1172 = vmatpush1.bf16.msra.mxu0 %v1150
    %1173 = vmatprep.subr.bf16.mxu0 0
    %1174 = vmatpush1.bf16.msra.mxu0 %v1151
    %1175 = vmatprep.subr.bf16.mxu0 0
    %1176 = vmatpush1.bf16.msra.mxu0 %v1152
    %1177 = vmatprep.subr.bf16.mxu0 0
    %1178 = vmatpush1.bf16.msra.mxu0 0
    %1179 = vmatprep.subr.bf16.mxu0 0
    %1180 = vmatpush1.bf16.msra.mxu0 0
    %1181 = vmatprep.subr.bf16.mxu0 0
    %1182 = vmatpush1.bf16.msra.mxu0 0
    %1183 = vmatprep.subr.bf16.mxu0 0
    %1184 = vmatpush1.bf16.msra.mxu0 0
    %1185 = vmatprep.subr.bf16.mxu0 0
    %1186 = vmatpush1.bf16.msra.mxu0 0
    %1187 = vmatprep.subr.bf16.mxu0 0
    %1188 = vmatpush1.bf16.msra.mxu0 0
    %1189 = vmatprep.subr.bf16.mxu0 0
    %1190 = vmatpush1.bf16.msra.mxu0 0
    %1191 = vmatprep.subr.bf16.mxu0 0
    %1192 = vmatpush1.bf16.msra.mxu0 0
    %1193 = vmatprep.mubr.bf16.mxu0 0
    %1194 = vmatmul.mubr.bf16.gmra.mrb[0].mxu0 %v1106
    %v1195 = vpop.f32.mrb[0].mxu0
    %v1196 = vadd.f32 %v1111, %v1195
    %v1197 = vpop.f32.mrb[0].mxu0
    %v1198 = vpop.f32.mrb[0].mxu0
    %v1199 = vpop.f32.mrb[0].mxu0
    %1200 = vdwg.mxu0
    %v1201 = vxor.u32 %v1196, 2147483648
    %v1202 = vmul.f32 %v1201, 1.442695
    %v1203 = vpow.pop %v1202
    %v1204 = vadd.f32 %v1203, 1.0
    %v1205 = vrcp.pop %v1204
    %v1206 = vmul.f32 1.0, %v1205
    %1207 = vst [vmem:[#allocation2] sm:$0x3] %v1206
    // Predicated region
    $region38: #{_lambda_.7} parent=1 // pred_check
      _
    $region39: #{_lambda_.7} parent=1 // pred_check_branch
      %1209 = sbr.rel (0) target = $region41
    $region40: #{_lambda_.7} parent=1 // pred_region
      %s1211 = ssub.s32 32, 32
      %1212 = vsyncadd [#allocation3], %s1211
      %s1214 = sshll.u32 [#allocation2], 4
      %s1215 = int_to_ptr.vmem [resolvable:$true] %s1214
      %1217 = dma.vmem_to_hbm [thread:$0]  %s1215, 32, %s9, [#allocation3]
    $region41: #{_lambda_.7} parent=1 // pred_fallthru
      _
    // Predicated region
    $region42: #{_lambda_.7} parent=1 // pred_check
      _
    $region43: #{_lambda_.7} parent=1 // pred_check_branch
      %1219 = sbr.rel (0) target = $region45
    $region44: #{_lambda_.7} parent=1 // pred_region
      %1220 = dma.done [#allocation3], 32
    $region45: #{_lambda_.7} parent=1 // pred_fallthru
      _
    %1221 = vsyncpa [#allocation3], 1

</llo_original>
